<compile_context>
chip_gen: v6e
topology: v6e:2x2x1
jax: 0.10.0
libtpu: 0.0.40
codegen_flags: <defaults>
</compile_context>

<pallas_src>
import functools

import jax
import jax.numpy as jnp
from jax import lax
from jax.experimental import pallas as pl
from jax.experimental.pallas import tpu as pltpu


def _round_up(x, m):
    return ((x + m - 1) // m) * m


def _pad_gate_dim(a, hidden, hidden_pad):
    """Pad the trailing 4*hidden axis per-gate to 4*hidden_pad (zeros)."""
    lead = a.shape[:-1]
    a = a.reshape(lead + (4, hidden))
    pad = [(0, 0)] * len(lead) + [(0, 0), (0, hidden_pad - hidden)]
    a = jnp.pad(a, pad)
    return a.reshape(lead + (4 * hidden_pad,))


def _lstm_kernel(x_ref, w_ref, b_ref, h0_ref, c0_ref,
                 hseq_ref, hout_ref, cout_ref,
                 h_sc, c_sc,
                 *, seq_len, hidden_pad, t_blk):
    tt = pl.program_id(1)                       # time-block index (sequential)

    # Load the initial state at the start of each batch block's time loop.
    @pl.when(tt == 0)
    def _():
        h_sc[...] = h0_ref[...].astype(jnp.float32)
        c_sc[...] = c0_ref[...].astype(jnp.float32)

    w = w_ref[...]                              # (i_pad + h_pad, 4*h_pad), MXU dtype
    b = b_ref[...]                              # (1, 4*h_pad), f32
    H = hidden_pad

    def step(lt, carry):
        h_prev, c_prev = carry                  # f32 (bs_blk, h_pad)
        x_t = x_ref[lt]                         # (bs_blk, i_pad)
        # Single fused MXU push: [x_t, h_prev] @ [W; U]  (f32 accumulation).
        zh = jnp.concatenate(
            [x_t.astype(w.dtype), h_prev.astype(w.dtype)], axis=-1)
        gates = jnp.dot(zh, w, preferred_element_type=jnp.float32) + b
        i_t = jax.nn.sigmoid(gates[:, 0 * H:1 * H])     # lane-aligned slices
        f_t = jax.nn.sigmoid(gates[:, 1 * H:2 * H])
        g_t = jnp.tanh(gates[:, 2 * H:3 * H])
        o_t = jax.nn.sigmoid(gates[:, 3 * H:4 * H])
        c_new = f_t * c_prev + i_t * g_t
        h_new = o_t * jnp.tanh(c_new)
        # Freeze the recurrence on (zero-)padded timesteps past seq_len.
        valid = (tt * t_blk + lt) < seq_len
        c_new = jnp.where(valid, c_new, c_prev)
        h_new = jnp.where(valid, h_new, h_prev)
        hseq_ref[lt] = h_new.astype(hseq_ref.dtype)     # (8k,128)-dense store
        return h_new, c_new

    h_fin, c_fin = lax.fori_loop(0, t_blk, step, (h_sc[...], c_sc[...]),
                                 unroll=True)
    h_sc[...] = h_fin
    c_sc[...] = c_fin

    # Only the final state matters; skip the per-step (bs, hidden) stores.
    @pl.when(tt == pl.num_programs(1) - 1)
    def _():
        hout_ref[...] = h_fin.astype(hout_ref.dtype)
        cout_ref[...] = c_fin.astype(cout_ref.dtype)


def custom_lstm_forward(x, W, U, bias, init_states=None, *,
                        t_blk=16, batch_blk=256, mxu_dtype=jnp.float32):
    """x: (bs, seq_len, input_size). Returns (hidden_seq, (h_T, c_T))."""
    bs, seq_len, input_size = x.shape
    four_h = W.shape[1]
    hidden = four_h // 4
    assert W.shape == (input_size, four_h)
    assert U.shape == (hidden, four_h)
    assert bias.shape == (four_h,)

    # Lane/sublane-dense padded sizes.
    h_pad = _round_up(hidden, 128)
    i_pad = _round_up(input_size, 128)
    t_blk = max(1, min(t_blk, seq_len))
    seq_pad = _round_up(seq_len, t_blk)
    bs_min = _round_up(max(bs, 8), 8)
    bs_blk = min(bs_min, _round_up(batch_blk, 8))
    bs_pad = _round_up(bs_min, bs_blk)
    n_b = bs_pad // bs_blk
    n_t = seq_pad // t_blk
    four_hp = 4 * h_pad
    kp = i_pad + h_pad

    # Pack [W; U] into one (i_pad + h_pad, 4*h_pad) matrix so each timestep is
    # a single MXU push over the concatenated [x_t, h_prev] operand. The x
    # half is padded to a 128 multiple so the h half starts on a lane boundary.
    # TODO(synk): for very large hidden on v7x (64 MiB/TC VMEM), tile the 4H
    # gate dimension of W_packed with an extra "arbitrary" grid axis instead
    # of keeping it fully resident.
    W_p = jnp.pad(W.astype(jnp.float32), ((0, i_pad - input_size), (0, 0)))
    U_p = jnp.pad(U.astype(jnp.float32), ((0, h_pad - hidden), (0, 0)))
    W_packed = jnp.concatenate(
        [_pad_gate_dim(W_p, hidden, h_pad), _pad_gate_dim(U_p, hidden, h_pad)],
        axis=0).astype(mxu_dtype)
    bias_p = _pad_gate_dim(bias.astype(jnp.float32), hidden,
                           h_pad).reshape(1, four_hp)

    if init_states is None:
        h0 = jnp.zeros((bs_pad, h_pad), x.dtype)
        c0 = jnp.zeros((bs_pad, h_pad), x.dtype)
    else:
        h0_in, c0_in = init_states
        h0 = jnp.zeros((bs_pad, h_pad), x.dtype).at[:bs, :hidden].set(
            h0_in.astype(x.dtype))
        c0 = jnp.zeros((bs_pad, h_pad), x.dtype).at[:bs, :hidden].set(
            c0_in.astype(x.dtype))

    # Kernel consumes a time-major (seq, batch, input) view so each inner
    # timestep reads one contiguous (bs, input) slab. NOTE: this transpose
    # (and the inverse on the way out) costs a full extra HBM read+write of
    # x / hidden_seq; callers that can provide/accept time-major data should
    # do so to avoid it.
    x_tm = jnp.transpose(x, (1, 0, 2))
    x_tm = jnp.pad(x_tm, ((0, seq_pad - seq_len), (0, bs_pad - bs),
                          (0, i_pad - input_size)))

    kernel = functools.partial(_lstm_kernel, seq_len=seq_len,
                               hidden_pad=h_pad, t_blk=t_blk)

    out_shapes = (
        jax.ShapeDtypeStruct((seq_pad, bs_pad, h_pad), x.dtype),  # hidden_seq
        jax.ShapeDtypeStruct((bs_pad, h_pad), x.dtype),           # h_T
        jax.ShapeDtypeStruct((bs_pad, h_pad), x.dtype),           # c_T
    )

    def _call(single_buffer_resident):
        # Resident (constant index_map) weights/bias: request single buffering
        # so they don't occupy 2x VMEM.
        resident = (dict(pipeline_mode=pl.Buffered(1))
                    if single_buffer_resident else {})
        grid_spec = pltpu.PrefetchScalarGridSpec(
            num_scalar_prefetch=0,
            grid=(n_b, n_t),                    # (parallel batch, sequential time)
            in_specs=[
                pl.BlockSpec((t_blk, bs_blk, i_pad),
                             lambda bb, tt: (tt, bb, 0)),            # x block
                pl.BlockSpec((kp, four_hp),
                             lambda bb, tt: (0, 0), **resident),     # [W;U]
                pl.BlockSpec((1, four_hp),
                             lambda bb, tt: (0, 0), **resident),     # bias
                pl.BlockSpec((bs_blk, h_pad), lambda bb, tt: (bb, 0)),  # h0
                pl.BlockSpec((bs_blk, h_pad), lambda bb, tt: (bb, 0)),  # c0
            ],
            out_specs=[
                pl.BlockSpec((t_blk, bs_blk, h_pad),
                             lambda bb, tt: (tt, bb, 0)),            # hidden_seq
                pl.BlockSpec((bs_blk, h_pad), lambda bb, tt: (bb, 0)),  # h_T
                pl.BlockSpec((bs_blk, h_pad), lambda bb, tt: (bb, 0)),  # c_T
            ],
            scratch_shapes=[
                pltpu.VMEM((bs_blk, h_pad), jnp.float32),   # h carry
                pltpu.VMEM((bs_blk, h_pad), jnp.float32),   # c carry
            ],
        )
        return pl.pallas_call(
            kernel,
            out_shape=out_shapes,
            grid_spec=grid_spec,
            compiler_params=pltpu.CompilerParams(
                # batch blocks are independent (megacore / v7x 2-TC sharding);
                # time must stay sequential for the state carry.
                dimension_semantics=("parallel", "arbitrary"),
                vmem_limit_bytes=32 * 1024 * 1024,
            ),
        )(x_tm, W_packed, bias_p, h0, c0)

    try:
        hseq_tm, h_T, c_T = _call(True)
    except Exception:
        # pl.Buffered(1) not supported on this jax version: fall back to the
        # default double-buffered resident weights (correctness unchanged).
        hseq_tm, h_T, c_T = _call(False)

    hidden_seq = jnp.transpose(hseq_tm[:seq_len, :bs, :hidden], (1, 0, 2))
    # TODO(synk): nn.Dropout(p=0.3) is identity in eval mode; training-mode
    # dropout mask is not applied here.
    return hidden_seq, (h_T[:bs, :hidden], c_T[:bs, :hidden])


def _reference_lstm(x, W, U, bias):
    bs, seq_len, _ = x.shape
    hidden = W.shape[1] // 4
    h = jnp.zeros((bs, hidden), jnp.float32)
    c = jnp.zeros((bs, hidden), jnp.float32)
    hs = []
    for t in range(seq_len):
        gates = x[:, t, :] @ W + h @ U + bias
        i, f, g, o = jnp.split(gates, 4, axis=1)
        i, f, g, o = jax.nn.sigmoid(i), jax.nn.sigmoid(f), jnp.tanh(g), jax.nn.sigmoid(o)
        c = f * c + i * g
        h = o * jnp.tanh(c)
        hs.append(h)
    return jnp.stack(hs, axis=1), (h, c)


if __name__ == "__main__":
    input_size = 10
    hidden_size = 32
    seq_len = 5
    bs = 2

    key = jax.random.PRNGKey(0)
    kx, kw, ku, kb = jax.random.split(key, 4)

    x = jax.random.normal(kx, (bs, seq_len, input_size), dtype=jnp.float32)
    # deterministic init matching nn.init.uniform_(p, -0.1, 0.1)
    W = jax.random.uniform(kw, (input_size, 4 * hidden_size), jnp.float32, -0.1, 0.1)
    U = jax.random.uniform(ku, (hidden_size, 4 * hidden_size), jnp.float32, -0.1, 0.1)
    bias = jax.random.uniform(kb, (4 * hidden_size,), jnp.float32, -0.1, 0.1)

    ref_seq, (ref_h, ref_c) = _reference_lstm(x, W, U, bias)

    # f32 MXU operands: should match the reference tightly.
    hidden_seq, (h_T, c_T) = custom_lstm_forward(x, W, U, bias)
    jax.block_until_ready((hidden_seq, h_T, c_T))
    assert hidden_seq.shape == (bs, seq_len, hidden_size)
    assert jnp.allclose(hidden_seq, ref_seq, atol=2e-5, rtol=2e-5)
    assert jnp.allclose(h_T, ref_h, atol=2e-5, rtol=2e-5)
    assert jnp.allclose(c_T, ref_c, atol=2e-5, rtol=2e-5)

    # bf16 MXU operands (f32 carries / elementwise): looser tolerance.
    bseq, (bh, bc) = custom_lstm_forward(x, W, U, bias, mxu_dtype=jnp.bfloat16)
    jax.block_until_ready((bseq, bh, bc))
    assert jnp.allclose(bseq, ref_seq, atol=5e-2, rtol=5e-2)
    assert jnp.allclose(bh, ref_h, atol=5e-2, rtol=5e-2)
    assert jnp.allclose(bc, ref_c, atol=5e-2, rtol=5e-2)

    print("KERNEL_OK")
</pallas_src>

<mosaic_0001>
module attributes {stable_mosaic.version = 11 : i64} {
  func.func @_lstm_kernel(%arg0: i32, %arg1: i32, %arg2: memref<5x8x128xf32, #tpu.memory_space<vmem>>, %arg3: memref<256x512xf32, #tpu.memory_space<vmem>>, %arg4: memref<1x512xf32, #tpu.memory_space<vmem>>, %arg5: memref<8x128xf32, #tpu.memory_space<vmem>>, %arg6: memref<8x128xf32, #tpu.memory_space<vmem>>, %arg7: memref<5x8x128xf32, #tpu.memory_space<vmem>>, %arg8: memref<8x128xf32, #tpu.memory_space<vmem>>, %arg9: memref<8x128xf32, #tpu.memory_space<vmem>>, %arg10: memref<8x128xf32, #tpu.memory_space<vmem>>, %arg11: memref<8x128xf32, #tpu.memory_space<vmem>>) attributes {dimension_semantics = [#tpu.dimension_semantics<parallel>, #tpu.dimension_semantics<arbitrary>], iteration_bounds = array<i64: 1, 1>, scalar_prefetch = 0 : i64, scratch_operands = 2 : i64, tpu.core_type = #tpu.core_type<tc>, window_params = [{transform_indices = @transform_0, window_bounds = array<i64: 5, 8, 128>}, {pipeline_mode = #tpu.pipeline_mode<synchronous>, transform_indices = @transform_1, window_bounds = array<i64: 256, 512>}, {pipeline_mode = #tpu.pipeline_mode<synchronous>, transform_indices = @transform_2, window_bounds = array<i64: 1, 512>}, {transform_indices = @transform_3, window_bounds = array<i64: 8, 128>}, {transform_indices = @transform_4, window_bounds = array<i64: 8, 128>}, {transform_indices = @transform_5, window_bounds = array<i64: 5, 8, 128>}, {transform_indices = @transform_6, window_bounds = array<i64: 8, 128>}, {transform_indices = @transform_7, window_bounds = array<i64: 8, 128>}]} {
    %c0_i32 = arith.constant 0 : i32
    %0 = arith.cmpi eq, %arg1, %c0_i32 : i32
    %1 = arith.extui %0 : i1 to i32
    %c0_i32_0 = arith.constant 0 : i32
    %2 = arith.cmpi ne, %1, %c0_i32_0 : i32
    scf.if %2 {
      %c0_64 = arith.constant 0 : index
      %c0_65 = arith.constant 0 : index
      %217 = vector.load %arg5[%c0_64, %c0_65] : memref<8x128xf32, #tpu.memory_space<vmem>>, vector<8x128xf32>
      %c0_66 = arith.constant 0 : index
      %c0_67 = arith.constant 0 : index
      %218 = vector.load %arg10[%c0_66, %c0_67] : memref<8x128xf32, #tpu.memory_space<vmem>>, vector<8x128xf32>
      tpu.vector_store %arg10[%c0_66, %c0_67], %217 {strides = array<i32>} : memref<8x128xf32, #tpu.memory_space<vmem>>, vector<8x128xf32>,
      %c0_68 = arith.constant 0 : index
      %c0_69 = arith.constant 0 : index
      %219 = vector.load %arg6[%c0_68, %c0_69] : memref<8x128xf32, #tpu.memory_space<vmem>>, vector<8x128xf32>
      %c0_70 = arith.constant 0 : index
      %c0_71 = arith.constant 0 : index
      %220 = vector.load %arg11[%c0_70, %c0_71] : memref<8x128xf32, #tpu.memory_space<vmem>>, vector<8x128xf32>
      tpu.vector_store %arg11[%c0_70, %c0_71], %219 {strides = array<i32>} : memref<8x128xf32, #tpu.memory_space<vmem>>, vector<8x128xf32>,
    } else {
    }
    %c0 = arith.constant 0 : index
    %c0_1 = arith.constant 0 : index
    %3 = vector.load %arg3[%c0, %c0_1] : memref<256x512xf32, #tpu.memory_space<vmem>>, vector<256x512xf32>
    %c0_2 = arith.constant 0 : index
    %c0_3 = arith.constant 0 : index
    %4 = vector.load %arg4[%c0_2, %c0_3] : memref<1x512xf32, #tpu.memory_space<vmem>>, vector<1x512xf32>
    %c0_4 = arith.constant 0 : index
    %c0_5 = arith.constant 0 : index
    %5 = vector.load %arg10[%c0_4, %c0_5] : memref<8x128xf32, #tpu.memory_space<vmem>>, vector<8x128xf32>
    %c0_6 = arith.constant 0 : index
    %c0_7 = arith.constant 0 : index
    %6 = vector.load %arg11[%c0_6, %c0_7] : memref<8x128xf32, #tpu.memory_space<vmem>>, vector<8x128xf32>
    %c0_i32_8 = arith.constant 0 : i32
    %7 = arith.index_cast %c0_i32_8 : i32 to index
    %c0_9 = arith.constant 0 : index
    %c0_10 = arith.constant 0 : index
    %8 = vector.load %arg2[%7, %c0_9, %c0_10] : memref<5x8x128xf32, #tpu.memory_space<vmem>>, vector<1x8x128xf32>
    %9 = vector.shape_cast %8 : vector<1x8x128xf32> to vector<8x128xf32>
    %10 = tpu.concatenate %9, %5 in 1 : vector<8x128xf32>, vector<8x128xf32> -> vector<8x256xf32>
    %cst = arith.constant dense<0.000000e+00> : vector<8x512xf32>
    %11 = tpu.matmul %10, %3, %cst {dimension_numbers = #tpu.dot_dimension_numbers<[1], [0], [0], [1], [0, 0, 1, 1], [], []>} : vector<8x256xf32>, vector<256x512xf32>, vector<8x512xf32> -> vector<8x512xf32>
    %12 = vector.broadcast %4 : vector<1x512xf32> to vector<8x512xf32>
    %13 = arith.addf %11, %12 : vector<8x512xf32>
    %14 = vector.extract_strided_slice %13 {offsets = [0, 0], sizes = [8, 128], strides = [1, 1]} : vector<8x512xf32> to vector<8x128xf32>
    %15 = arith.negf %14 : vector<8x128xf32>
    %16 = math.exp %15 : vector<8x128xf32>
    %cst_11 = arith.constant 1.000000e+00 : f32
    %17 = vector.broadcast %cst_11 : f32 to vector<8x128xf32>
    %18 = arith.addf %17, %16 : vector<8x128xf32>
    %19 = arith.divf %17, %18 : vector<8x128xf32>
    %20 = vector.extract_strided_slice %13 {offsets = [0, 128], sizes = [8, 128], strides = [1, 1]} : vector<8x512xf32> to vector<8x128xf32>
    %21 = arith.negf %20 : vector<8x128xf32>
    %22 = math.exp %21 : vector<8x128xf32>
    %cst_12 = arith.constant 1.000000e+00 : f32
    %23 = vector.broadcast %cst_12 : f32 to vector<8x128xf32>
    %24 = arith.addf %23, %22 : vector<8x128xf32>
    %25 = arith.divf %23, %24 : vector<8x128xf32>
    %26 = vector.extract_strided_slice %13 {offsets = [0, 256], sizes = [8, 128], strides = [1, 1]} : vector<8x512xf32> to vector<8x128xf32>
    %27 = math.tanh %26 : vector<8x128xf32>
    %28 = vector.extract_strided_slice %13 {offsets = [0, 384], sizes = [8, 128], strides = [1, 1]} : vector<8x512xf32> to vector<8x128xf32>
    %29 = arith.negf %28 : vector<8x128xf32>
    %30 = math.exp %29 : vector<8x128xf32>
    %cst_13 = arith.constant 1.000000e+00 : f32
    %31 = vector.broadcast %cst_13 : f32 to vector<8x128xf32>
    %32 = arith.addf %31, %30 : vector<8x128xf32>
    %33 = arith.divf %31, %32 : vector<8x128xf32>
    %34 = arith.mulf %25, %6 : vector<8x128xf32>
    %35 = arith.mulf %19, %27 : vector<8x128xf32>
    %36 = arith.addf %34, %35 : vector<8x128xf32>
    %37 = math.tanh %36 : vector<8x128xf32>
    %38 = arith.mulf %33, %37 : vector<8x128xf32>
    %c5_i32 = arith.constant 5 : i32
    %39 = arith.muli %arg1, %c5_i32 : i32
    %40 = arith.addi %39, %c0_i32_8 : i32
    %c5_i32_14 = arith.constant 5 : i32
    %41 = arith.cmpi slt, %40, %c5_i32_14 : i32
    %42 = arith.select %41, %36, %6 : vector<8x128xf32>
    %43 = arith.select %41, %38, %5 : vector<8x128xf32>
    %44 = arith.index_cast %c0_i32_8 : i32 to index
    %c0_15 = arith.constant 0 : index
    %c0_16 = arith.constant 0 : index
    %45 = vector.load %arg7[%44, %c0_15, %c0_16] : memref<5x8x128xf32, #tpu.memory_space<vmem>>, vector<1x8x128xf32>
    %46 = vector.shape_cast %45 : vector<1x8x128xf32> to vector<8x128xf32>
    %47 = vector.shape_cast %43 : vector<8x128xf32> to vector<1x8x128xf32>
    tpu.vector_store %arg7[%44, %c0_15, %c0_16], %47 {strides = array<i32>} : memref<5x8x128xf32, #tpu.memory_space<vmem>>, vector<1x8x128xf32>,
    %c1_i32 = arith.constant 1 : i32
    %48 = arith.index_cast %c1_i32 : i32 to index
    %c0_17 = arith.constant 0 : index
    %c0_18 = arith.constant 0 : index
    %49 = vector.load %arg2[%48, %c0_17, %c0_18] : memref<5x8x128xf32, #tpu.memory_space<vmem>>, vector<1x8x128xf32>
    %50 = vector.shape_cast %49 : vector<1x8x128xf32> to vector<8x128xf32>
    %51 = tpu.concatenate %50, %43 in 1 : vector<8x128xf32>, vector<8x128xf32> -> vector<8x256xf32>
    %cst_19 = arith.constant dense<0.000000e+00> : vector<8x512xf32>
    %52 = tpu.matmul %51, %3, %cst_19 {dimension_numbers = #tpu.dot_dimension_numbers<[1], [0], [0], [1], [0, 0, 1, 1], [], []>} : vector<8x256xf32>, vector<256x512xf32>, vector<8x512xf32> -> vector<8x512xf32>
    %53 = vector.broadcast %4 : vector<1x512xf32> to vector<8x512xf32>
    %54 = arith.addf %52, %53 : vector<8x512xf32>
    %55 = vector.extract_strided_slice %54 {offsets = [0, 0], sizes = [8, 128], strides = [1, 1]} : vector<8x512xf32> to vector<8x128xf32>
    %56 = arith.negf %55 : vector<8x128xf32>
    %57 = math.exp %56 : vector<8x128xf32>
    %cst_20 = arith.constant 1.000000e+00 : f32
    %58 = vector.broadcast %cst_20 : f32 to vector<8x128xf32>
    %59 = arith.addf %58, %57 : vector<8x128xf32>
    %60 = arith.divf %58, %59 : vector<8x128xf32>
    %61 = vector.extract_strided_slice %54 {offsets = [0, 128], sizes = [8, 128], strides = [1, 1]} : vector<8x512xf32> to vector<8x128xf32>
    %62 = arith.negf %61 : vector<8x128xf32>
    %63 = math.exp %62 : vector<8x128xf32>
    %cst_21 = arith.constant 1.000000e+00 : f32
    %64 = vector.broadcast %cst_21 : f32 to vector<8x128xf32>
    %65 = arith.addf %64, %63 : vector<8x128xf32>
    %66 = arith.divf %64, %65 : vector<8x128xf32>
    %67 = vector.extract_strided_slice %54 {offsets = [0, 256], sizes = [8, 128], strides = [1, 1]} : vector<8x512xf32> to vector<8x128xf32>
    %68 = math.tanh %67 : vector<8x128xf32>
    %69 = vector.extract_strided_slice %54 {offsets = [0, 384], sizes = [8, 128], strides = [1, 1]} : vector<8x512xf32> to vector<8x128xf32>
    %70 = arith.negf %69 : vector<8x128xf32>
    %71 = math.exp %70 : vector<8x128xf32>
    %cst_22 = arith.constant 1.000000e+00 : f32
    %72 = vector.broadcast %cst_22 : f32 to vector<8x128xf32>
    %73 = arith.addf %72, %71 : vector<8x128xf32>
    %74 = arith.divf %72, %73 : vector<8x128xf32>
    %75 = arith.mulf %66, %42 : vector<8x128xf32>
    %76 = arith.mulf %60, %68 : vector<8x128xf32>
    %77 = arith.addf %75, %76 : vector<8x128xf32>
    %78 = math.tanh %77 : vector<8x128xf32>
    %79 = arith.mulf %74, %78 : vector<8x128xf32>
    %c5_i32_23 = arith.constant 5 : i32
    %80 = arith.muli %arg1, %c5_i32_23 : i32
    %81 = arith.addi %80, %c1_i32 : i32
    %c5_i32_24 = arith.constant 5 : i32
    %82 = arith.cmpi slt, %81, %c5_i32_24 : i32
    %83 = arith.select %82, %77, %42 : vector<8x128xf32>
    %84 = arith.select %82, %79, %43 : vector<8x128xf32>
    %85 = arith.index_cast %c1_i32 : i32 to index
    %c0_25 = arith.constant 0 : index
    %c0_26 = arith.constant 0 : index
    %86 = vector.load %arg7[%85, %c0_25, %c0_26] : memref<5x8x128xf32, #tpu.memory_space<vmem>>, vector<1x8x128xf32>
    %87 = vector.shape_cast %86 : vector<1x8x128xf32> to vector<8x128xf32>
    %88 = vector.shape_cast %84 : vector<8x128xf32> to vector<1x8x128xf32>
    tpu.vector_store %arg7[%85, %c0_25, %c0_26], %88 {strides = array<i32>} : memref<5x8x128xf32, #tpu.memory_space<vmem>>, vector<1x8x128xf32>,
    %c2_i32 = arith.constant 2 : i32
    %89 = arith.index_cast %c2_i32 : i32 to index
    %c0_27 = arith.constant 0 : index
    %c0_28 = arith.constant 0 : index
    %90 = vector.load %arg2[%89, %c0_27, %c0_28] : memref<5x8x128xf32, #tpu.memory_space<vmem>>, vector<1x8x128xf32>
    %91 = vector.shape_cast %90 : vector<1x8x128xf32> to vector<8x128xf32>
    %92 = tpu.concatenate %91, %84 in 1 : vector<8x128xf32>, vector<8x128xf32> -> vector<8x256xf32>
    %cst_29 = arith.constant dense<0.000000e+00> : vector<8x512xf32>
    %93 = tpu.matmul %92, %3, %cst_29 {dimension_numbers = #tpu.dot_dimension_numbers<[1], [0], [0], [1], [0, 0, 1, 1], [], []>} : vector<8x256xf32>, vector<256x512xf32>, vector<8x512xf32> -> vector<8x512xf32>
    %94 = vector.broadcast %4 : vector<1x512xf32> to vector<8x512xf32>
    %95 = arith.addf %93, %94 : vector<8x512xf32>
    %96 = vector.extract_strided_slice %95 {offsets = [0, 0], sizes = [8, 128], strides = [1, 1]} : vector<8x512xf32> to vector<8x128xf32>
    %97 = arith.negf %96 : vector<8x128xf32>
    %98 = math.exp %97 : vector<8x128xf32>
    %cst_30 = arith.constant 1.000000e+00 : f32
    %99 = vector.broadcast %cst_30 : f32 to vector<8x128xf32>
    %100 = arith.addf %99, %98 : vector<8x128xf32>
    %101 = arith.divf %99, %100 : vector<8x128xf32>
    %102 = vector.extract_strided_slice %95 {offsets = [0, 128], sizes = [8, 128], strides = [1, 1]} : vector<8x512xf32> to vector<8x128xf32>
    %103 = arith.negf %102 : vector<8x128xf32>
    %104 = math.exp %103 : vector<8x128xf32>
    %cst_31 = arith.constant 1.000000e+00 : f32
    %105 = vector.broadcast %cst_31 : f32 to vector<8x128xf32>
    %106 = arith.addf %105, %104 : vector<8x128xf32>
    %107 = arith.divf %105, %106 : vector<8x128xf32>
    %108 = vector.extract_strided_slice %95 {offsets = [0, 256], sizes = [8, 128], strides = [1, 1]} : vector<8x512xf32> to vector<8x128xf32>
    %109 = math.tanh %108 : vector<8x128xf32>
    %110 = vector.extract_strided_slice %95 {offsets = [0, 384], sizes = [8, 128], strides = [1, 1]} : vector<8x512xf32> to vector<8x128xf32>
    %111 = arith.negf %110 : vector<8x128xf32>
    %112 = math.exp %111 : vector<8x128xf32>
    %cst_32 = arith.constant 1.000000e+00 : f32
    %113 = vector.broadcast %cst_32 : f32 to vector<8x128xf32>
    %114 = arith.addf %113, %112 : vector<8x128xf32>
    %115 = arith.divf %113, %114 : vector<8x128xf32>
    %116 = arith.mulf %107, %83 : vector<8x128xf32>
    %117 = arith.mulf %101, %109 : vector<8x128xf32>
    %118 = arith.addf %116, %117 : vector<8x128xf32>
    %119 = math.tanh %118 : vector<8x128xf32>
    %120 = arith.mulf %115, %119 : vector<8x128xf32>
    %c5_i32_33 = arith.constant 5 : i32
    %121 = arith.muli %arg1, %c5_i32_33 : i32
    %122 = arith.addi %121, %c2_i32 : i32
    %c5_i32_34 = arith.constant 5 : i32
    %123 = arith.cmpi slt, %122, %c5_i32_34 : i32
    %124 = arith.select %123, %118, %83 : vector<8x128xf32>
    %125 = arith.select %123, %120, %84 : vector<8x128xf32>
    %126 = arith.index_cast %c2_i32 : i32 to index
    %c0_35 = arith.constant 0 : index
    %c0_36 = arith.constant 0 : index
    %127 = vector.load %arg7[%126, %c0_35, %c0_36] : memref<5x8x128xf32, #tpu.memory_space<vmem>>, vector<1x8x128xf32>
    %128 = vector.shape_cast %127 : vector<1x8x128xf32> to vector<8x128xf32>
    %129 = vector.shape_cast %125 : vector<8x128xf32> to vector<1x8x128xf32>
    tpu.vector_store %arg7[%126, %c0_35, %c0_36], %129 {strides = array<i32>} : memref<5x8x128xf32, #tpu.memory_space<vmem>>, vector<1x8x128xf32>,
    %c3_i32 = arith.constant 3 : i32
    %130 = arith.index_cast %c3_i32 : i32 to index
    %c0_37 = arith.constant 0 : index
    %c0_38 = arith.constant 0 : index
    %131 = vector.load %arg2[%130, %c0_37, %c0_38] : memref<5x8x128xf32, #tpu.memory_space<vmem>>, vector<1x8x128xf32>
    %132 = vector.shape_cast %131 : vector<1x8x128xf32> to vector<8x128xf32>
    %133 = tpu.concatenate %132, %125 in 1 : vector<8x128xf32>, vector<8x128xf32> -> vector<8x256xf32>
    %cst_39 = arith.constant dense<0.000000e+00> : vector<8x512xf32>
    %134 = tpu.matmul %133, %3, %cst_39 {dimension_numbers = #tpu.dot_dimension_numbers<[1], [0], [0], [1], [0, 0, 1, 1], [], []>} : vector<8x256xf32>, vector<256x512xf32>, vector<8x512xf32> -> vector<8x512xf32>
    %135 = vector.broadcast %4 : vector<1x512xf32> to vector<8x512xf32>
    %136 = arith.addf %134, %135 : vector<8x512xf32>
    %137 = vector.extract_strided_slice %136 {offsets = [0, 0], sizes = [8, 128], strides = [1, 1]} : vector<8x512xf32> to vector<8x128xf32>
    %138 = arith.negf %137 : vector<8x128xf32>
    %139 = math.exp %138 : vector<8x128xf32>
    %cst_40 = arith.constant 1.000000e+00 : f32
    %140 = vector.broadcast %cst_40 : f32 to vector<8x128xf32>
    %141 = arith.addf %140, %139 : vector<8x128xf32>
    %142 = arith.divf %140, %141 : vector<8x128xf32>
    %143 = vector.extract_strided_slice %136 {offsets = [0, 128], sizes = [8, 128], strides = [1, 1]} : vector<8x512xf32> to vector<8x128xf32>
    %144 = arith.negf %143 : vector<8x128xf32>
    %145 = math.exp %144 : vector<8x128xf32>
    %cst_41 = arith.constant 1.000000e+00 : f32
    %146 = vector.broadcast %cst_41 : f32 to vector<8x128xf32>
    %147 = arith.addf %146, %145 : vector<8x128xf32>
    %148 = arith.divf %146, %147 : vector<8x128xf32>
    %149 = vector.extract_strided_slice %136 {offsets = [0, 256], sizes = [8, 128], strides = [1, 1]} : vector<8x512xf32> to vector<8x128xf32>
    %150 = math.tanh %149 : vector<8x128xf32>
    %151 = vector.extract_strided_slice %136 {offsets = [0, 384], sizes = [8, 128], strides = [1, 1]} : vector<8x512xf32> to vector<8x128xf32>
    %152 = arith.negf %151 : vector<8x128xf32>
    %153 = math.exp %152 : vector<8x128xf32>
    %cst_42 = arith.constant 1.000000e+00 : f32
    %154 = vector.broadcast %cst_42 : f32 to vector<8x128xf32>
    %155 = arith.addf %154, %153 : vector<8x128xf32>
    %156 = arith.divf %154, %155 : vector<8x128xf32>
    %157 = arith.mulf %148, %124 : vector<8x128xf32>
    %158 = arith.mulf %142, %150 : vector<8x128xf32>
    %159 = arith.addf %157, %158 : vector<8x128xf32>
    %160 = math.tanh %159 : vector<8x128xf32>
    %161 = arith.mulf %156, %160 : vector<8x128xf32>
    %c5_i32_43 = arith.constant 5 : i32
    %162 = arith.muli %arg1, %c5_i32_43 : i32
    %163 = arith.addi %162, %c3_i32 : i32
    %c5_i32_44 = arith.constant 5 : i32
    %164 = arith.cmpi slt, %163, %c5_i32_44 : i32
    %165 = arith.select %164, %159, %124 : vector<8x128xf32>
    %166 = arith.select %164, %161, %125 : vector<8x128xf32>
    %167 = arith.index_cast %c3_i32 : i32 to index
    %c0_45 = arith.constant 0 : index
    %c0_46 = arith.constant 0 : index
    %168 = vector.load %arg7[%167, %c0_45, %c0_46] : memref<5x8x128xf32, #tpu.memory_space<vmem>>, vector<1x8x128xf32>
    %169 = vector.shape_cast %168 : vector<1x8x128xf32> to vector<8x128xf32>
    %170 = vector.shape_cast %166 : vector<8x128xf32> to vector<1x8x128xf32>
    tpu.vector_store %arg7[%167, %c0_45, %c0_46], %170 {strides = array<i32>} : memref<5x8x128xf32, #tpu.memory_space<vmem>>, vector<1x8x128xf32>,
    %c4_i32 = arith.constant 4 : i32
    %171 = arith.index_cast %c4_i32 : i32 to index
    %c0_47 = arith.constant 0 : index
    %c0_48 = arith.constant 0 : index
    %172 = vector.load %arg2[%171, %c0_47, %c0_48] : memref<5x8x128xf32, #tpu.memory_space<vmem>>, vector<1x8x128xf32>
    %173 = vector.shape_cast %172 : vector<1x8x128xf32> to vector<8x128xf32>
    %174 = tpu.concatenate %173, %166 in 1 : vector<8x128xf32>, vector<8x128xf32> -> vector<8x256xf32>
    %cst_49 = arith.constant dense<0.000000e+00> : vector<8x512xf32>
    %175 = tpu.matmul %174, %3, %cst_49 {dimension_numbers = #tpu.dot_dimension_numbers<[1], [0], [0], [1], [0, 0, 1, 1], [], []>} : vector<8x256xf32>, vector<256x512xf32>, vector<8x512xf32> -> vector<8x512xf32>
    %176 = vector.broadcast %4 : vector<1x512xf32> to vector<8x512xf32>
    %177 = arith.addf %175, %176 : vector<8x512xf32>
    %178 = vector.extract_strided_slice %177 {offsets = [0, 0], sizes = [8, 128], strides = [1, 1]} : vector<8x512xf32> to vector<8x128xf32>
    %179 = arith.negf %178 : vector<8x128xf32>
    %180 = math.exp %179 : vector<8x128xf32>
    %cst_50 = arith.constant 1.000000e+00 : f32
    %181 = vector.broadcast %cst_50 : f32 to vector<8x128xf32>
    %182 = arith.addf %181, %180 : vector<8x128xf32>
    %183 = arith.divf %181, %182 : vector<8x128xf32>
    %184 = vector.extract_strided_slice %177 {offsets = [0, 128], sizes = [8, 128], strides = [1, 1]} : vector<8x512xf32> to vector<8x128xf32>
    %185 = arith.negf %184 : vector<8x128xf32>
    %186 = math.exp %185 : vector<8x128xf32>
    %cst_51 = arith.constant 1.000000e+00 : f32
    %187 = vector.broadcast %cst_51 : f32 to vector<8x128xf32>
    %188 = arith.addf %187, %186 : vector<8x128xf32>
    %189 = arith.divf %187, %188 : vector<8x128xf32>
    %190 = vector.extract_strided_slice %177 {offsets = [0, 256], sizes = [8, 128], strides = [1, 1]} : vector<8x512xf32> to vector<8x128xf32>
    %191 = math.tanh %190 : vector<8x128xf32>
    %192 = vector.extract_strided_slice %177 {offsets = [0, 384], sizes = [8, 128], strides = [1, 1]} : vector<8x512xf32> to vector<8x128xf32>
    %193 = arith.negf %192 : vector<8x128xf32>
    %194 = math.exp %193 : vector<8x128xf32>
    %cst_52 = arith.constant 1.000000e+00 : f32
    %195 = vector.broadcast %cst_52 : f32 to vector<8x128xf32>
    %196 = arith.addf %195, %194 : vector<8x128xf32>
    %197 = arith.divf %195, %196 : vector<8x128xf32>
    %198 = arith.mulf %189, %165 : vector<8x128xf32>
    %199 = arith.mulf %183, %191 : vector<8x128xf32>
    %200 = arith.addf %198, %199 : vector<8x128xf32>
    %201 = math.tanh %200 : vector<8x128xf32>
    %202 = arith.mulf %197, %201 : vector<8x128xf32>
    %c5_i32_53 = arith.constant 5 : i32
    %203 = arith.muli %arg1, %c5_i32_53 : i32
    %204 = arith.addi %203, %c4_i32 : i32
    %c5_i32_54 = arith.constant 5 : i32
    %205 = arith.cmpi slt, %204, %c5_i32_54 : i32
    %206 = arith.select %205, %200, %165 : vector<8x128xf32>
    %207 = arith.select %205, %202, %166 : vector<8x128xf32>
    %208 = arith.index_cast %c4_i32 : i32 to index
    %c0_55 = arith.constant 0 : index
    %c0_56 = arith.constant 0 : index
    %209 = vector.load %arg7[%208, %c0_55, %c0_56] : memref<5x8x128xf32, #tpu.memory_space<vmem>>, vector<1x8x128xf32>
    %210 = vector.shape_cast %209 : vector<1x8x128xf32> to vector<8x128xf32>
    %211 = vector.shape_cast %207 : vector<8x128xf32> to vector<1x8x128xf32>
    tpu.vector_store %arg7[%208, %c0_55, %c0_56], %211 {strides = array<i32>} : memref<5x8x128xf32, #tpu.memory_space<vmem>>, vector<1x8x128xf32>,
    %c5_i32_57 = arith.constant 5 : i32
    %c0_58 = arith.constant 0 : index
    %c0_59 = arith.constant 0 : index
    %212 = vector.load %arg10[%c0_58, %c0_59] : memref<8x128xf32, #tpu.memory_space<vmem>>, vector<8x128xf32>
    tpu.vector_store %arg10[%c0_58, %c0_59], %207 {strides = array<i32>} : memref<8x128xf32, #tpu.memory_space<vmem>>, vector<8x128xf32>,
    %c0_60 = arith.constant 0 : index
    %c0_61 = arith.constant 0 : index
    %213 = vector.load %arg11[%c0_60, %c0_61] : memref<8x128xf32, #tpu.memory_space<vmem>>, vector<8x128xf32>
    tpu.vector_store %arg11[%c0_60, %c0_61], %206 {strides = array<i32>} : memref<8x128xf32, #tpu.memory_space<vmem>>, vector<8x128xf32>,
    %c0_i32_62 = arith.constant 0 : i32
    %214 = arith.cmpi eq, %arg1, %c0_i32_62 : i32
    %215 = arith.extui %214 : i1 to i32
    %c0_i32_63 = arith.constant 0 : i32
    %216 = arith.cmpi ne, %215, %c0_i32_63 : i32
    scf.if %216 {
      %c0_64 = arith.constant 0 : index
      %c0_65 = arith.constant 0 : index
      %217 = vector.load %arg8[%c0_64, %c0_65] : memref<8x128xf32, #tpu.memory_space<vmem>>, vector<8x128xf32>
      tpu.vector_store %arg8[%c0_64, %c0_65], %207 {strides = array<i32>} : memref<8x128xf32, #tpu.memory_space<vmem>>, vector<8x128xf32>,
      %c0_66 = arith.constant 0 : index
      %c0_67 = arith.constant 0 : index
      %218 = vector.load %arg9[%c0_66, %c0_67] : memref<8x128xf32, #tpu.memory_space<vmem>>, vector<8x128xf32>
      tpu.vector_store %arg9[%c0_66, %c0_67], %206 {strides = array<i32>} : memref<8x128xf32, #tpu.memory_space<vmem>>, vector<8x128xf32>,
    } else {
    }
    return
  }
  func.func @transform_0(%arg0: i32, %arg1: i32) -> (i32, i32, i32) {
    %c0_i32 = arith.constant 0 : i32
    %c0_i32_0 = arith.constant 0 : i32
    return %arg1, %arg0, %c0_i32 : i32, i32, i32
  }
  func.func @transform_1(%arg0: i32, %arg1: i32) -> (i32, i32) {
    %c0_i32 = arith.constant 0 : i32
    %c0_i32_0 = arith.constant 0 : i32
    %c0_i32_1 = arith.constant 0 : i32
    return %c0_i32, %c0_i32_0 : i32, i32
  }
  func.func @transform_2(%arg0: i32, %arg1: i32) -> (i32, i32) {
    %c0_i32 = arith.constant 0 : i32
    %c0_i32_0 = arith.constant 0 : i32
    %c0_i32_1 = arith.constant 0 : i32
    return %c0_i32, %c0_i32_0 : i32, i32
  }
  func.func @transform_3(%arg0: i32, %arg1: i32) -> (i32, i32) {
    %c0_i32 = arith.constant 0 : i32
    %c0_i32_0 = arith.constant 0 : i32
    return %arg0, %c0_i32 : i32, i32
  }
  func.func @transform_4(%arg0: i32, %arg1: i32) -> (i32, i32) {
    %c0_i32 = arith.constant 0 : i32
    %c0_i32_0 = arith.constant 0 : i32
    return %arg0, %c0_i32 : i32, i32
  }
  func.func @transform_5(%arg0: i32, %arg1: i32) -> (i32, i32, i32) {
    %c0_i32 = arith.constant 0 : i32
    %c0_i32_0 = arith.constant 0 : i32
    return %arg1, %arg0, %c0_i32 : i32, i32, i32
  }
  func.func @transform_6(%arg0: i32, %arg1: i32) -> (i32, i32) {
    %c0_i32 = arith.constant 0 : i32
    %c0_i32_0 = arith.constant 0 : i32
    return %arg0, %c0_i32 : i32, i32
  }
  func.func @transform_7(%arg0: i32, %arg1: i32) -> (i32, i32) {
    %c0_i32 = arith.constant 0 : i32
    %c0_i32_0 = arith.constant 0 : i32
    return %arg0, %c0_i32 : i32, i32
  }
}

module attributes {stable_mosaic.version = 11 : i64} {
  func.func @_lstm_kernel(%arg0: i32, %arg1: i32, %arg2: memref<5x8x128xf32, #tpu.memory_space<vmem>>, %arg3: memref<256x512xf32, #tpu.memory_space<vmem>>, %arg4: memref<1x512xf32, #tpu.memory_space<vmem>>, %arg5: memref<8x128xf32, #tpu.memory_space<vmem>>, %arg6: memref<8x128xf32, #tpu.memory_space<vmem>>, %arg7: memref<5x8x128xf32, #tpu.memory_space<vmem>>, %arg8: memref<8x128xf32, #tpu.memory_space<vmem>>, %arg9: memref<8x128xf32, #tpu.memory_space<vmem>>, %arg10: memref<8x128xf32, #tpu.memory_space<vmem>>, %arg11: memref<8x128xf32, #tpu.memory_space<vmem>>) attributes {dimension_semantics = [#tpu.dimension_semantics<parallel>, #tpu.dimension_semantics<arbitrary>], iteration_bounds = array<i64: 1, 1>, scalar_prefetch = 0 : i64, scratch_operands = 2 : i64, tpu.core_type = #tpu.core_type<tc>, window_params = [{transform_indices = @transform_0, window_bounds = array<i64: 5, 8, 128>}, {pipeline_mode = #tpu.pipeline_mode<synchronous>, transform_indices = @transform_1, window_bounds = array<i64: 256, 512>}, {pipeline_mode = #tpu.pipeline_mode<synchronous>, transform_indices = @transform_2, window_bounds = array<i64: 1, 512>}, {transform_indices = @transform_3, window_bounds = array<i64: 8, 128>}, {transform_indices = @transform_4, window_bounds = array<i64: 8, 128>}, {transform_indices = @transform_5, window_bounds = array<i64: 5, 8, 128>}, {transform_indices = @transform_6, window_bounds = array<i64: 8, 128>}, {transform_indices = @transform_7, window_bounds = array<i64: 8, 128>}]} {
    %c0_i32 = arith.constant 0 : i32
    %0 = arith.cmpi eq, %arg1, %c0_i32 : i32
    %1 = arith.extui %0 : i1 to i32
    %c0_i32_0 = arith.constant 0 : i32
    %2 = arith.cmpi ne, %1, %c0_i32_0 : i32
    scf.if %2 {
      %c0_64 = arith.constant 0 : index
      %c0_65 = arith.constant 0 : index
      %217 = vector.load %arg5[%c0_64, %c0_65] : memref<8x128xf32, #tpu.memory_space<vmem>>, vector<8x128xf32>
      %c0_66 = arith.constant 0 : index
      %c0_67 = arith.constant 0 : index
      %218 = vector.load %arg10[%c0_66, %c0_67] : memref<8x128xf32, #tpu.memory_space<vmem>>, vector<8x128xf32>
      tpu.vector_store %arg10[%c0_66, %c0_67], %217 {strides = array<i32>} : memref<8x128xf32, #tpu.memory_space<vmem>>, vector<8x128xf32>,
      %c0_68 = arith.constant 0 : index
      %c0_69 = arith.constant 0 : index
      %219 = vector.load %arg6[%c0_68, %c0_69] : memref<8x128xf32, #tpu.memory_space<vmem>>, vector<8x128xf32>
      %c0_70 = arith.constant 0 : index
      %c0_71 = arith.constant 0 : index
      %220 = vector.load %arg11[%c0_70, %c0_71] : memref<8x128xf32, #tpu.memory_space<vmem>>, vector<8x128xf32>
      tpu.vector_store %arg11[%c0_70, %c0_71], %219 {strides = array<i32>} : memref<8x128xf32, #tpu.memory_space<vmem>>, vector<8x128xf32>,
    } else {
    }
    %c0 = arith.constant 0 : index
    %c0_1 = arith.constant 0 : index
    %3 = vector.load %arg3[%c0, %c0_1] : memref<256x512xf32, #tpu.memory_space<vmem>>, vector<256x512xf32>
    %c0_2 = arith.constant 0 : index
    %c0_3 = arith.constant 0 : index
    %4 = vector.load %arg4[%c0_2, %c0_3] : memref<1x512xf32, #tpu.memory_space<vmem>>, vector<1x512xf32>
    %c0_4 = arith.constant 0 : index
    %c0_5 = arith.constant 0 : index
    %5 = vector.load %arg10[%c0_4, %c0_5] : memref<8x128xf32, #tpu.memory_space<vmem>>, vector<8x128xf32>
    %c0_6 = arith.constant 0 : index
    %c0_7 = arith.constant 0 : index
    %6 = vector.load %arg11[%c0_6, %c0_7] : memref<8x128xf32, #tpu.memory_space<vmem>>, vector<8x128xf32>
    %c0_i32_8 = arith.constant 0 : i32
    %7 = arith.index_cast %c0_i32_8 : i32 to index
    %c0_9 = arith.constant 0 : index
    %c0_10 = arith.constant 0 : index
    %8 = vector.load %arg2[%7, %c0_9, %c0_10] : memref<5x8x128xf32, #tpu.memory_space<vmem>>, vector<1x8x128xf32>
    %9 = vector.shape_cast %8 : vector<1x8x128xf32> to vector<8x128xf32>
    %10 = tpu.concatenate %9, %5 in 1 : vector<8x128xf32>, vector<8x128xf32> -> vector<8x256xf32>
    %cst = arith.constant dense<0.000000e+00> : vector<8x512xf32>
    %11 = tpu.matmul %10, %3, %cst {dimension_numbers = #tpu.dot_dimension_numbers<[1], [0], [0], [1], [0, 0, 1, 1], [], []>} : vector<8x256xf32>, vector<256x512xf32>, vector<8x512xf32> -> vector<8x512xf32>
    %12 = vector.broadcast %4 : vector<1x512xf32> to vector<8x512xf32>
    %13 = arith.addf %11, %12 : vector<8x512xf32>
    %14 = vector.extract_strided_slice %13 {offsets = [0, 0], sizes = [8, 128], strides = [1, 1]} : vector<8x512xf32> to vector<8x128xf32>
    %15 = arith.negf %14 : vector<8x128xf32>
    %16 = math.exp %15 : vector<8x128xf32>
    %cst_11 = arith.constant 1.000000e+00 : f32
    %17 = vector.broadcast %cst_11 : f32 to vector<8x128xf32>
    %18 = arith.addf %17, %16 : vector<8x128xf32>
    %19 = arith.divf %17, %18 : vector<8x128xf32>
    %20 = vector.extract_strided_slice %13 {offsets = [0, 128], sizes = [8, 128], strides = [1, 1]} : vector<8x512xf32> to vector<8x128xf32>
    %21 = arith.negf %20 : vector<8x128xf32>
    %22 = math.exp %21 : vector<8x128xf32>
    %cst_12 = arith.constant 1.000000e+00 : f32
    %23 = vector.broadcast %cst_12 : f32 to vector<8x128xf32>
    %24 = arith.addf %23, %22 : vector<8x128xf32>
    %25 = arith.divf %23, %24 : vector<8x128xf32>
    %26 = vector.extract_strided_slice %13 {offsets = [0, 256], sizes = [8, 128], strides = [1, 1]} : vector<8x512xf32> to vector<8x128xf32>
    %27 = math.tanh %26 : vector<8x128xf32>
    %28 = vector.extract_strided_slice %13 {offsets = [0, 384], sizes = [8, 128], strides = [1, 1]} : vector<8x512xf32> to vector<8x128xf32>
    %29 = arith.negf %28 : vector<8x128xf32>
    %30 = math.exp %29 : vector<8x128xf32>
    %cst_13 = arith.constant 1.000000e+00 : f32
    %31 = vector.broadcast %cst_13 : f32 to vector<8x128xf32>
    %32 = arith.addf %31, %30 : vector<8x128xf32>
    %33 = arith.divf %31, %32 : vector<8x128xf32>
    %34 = arith.mulf %25, %6 : vector<8x128xf32>
    %35 = arith.mulf %19, %27 : vector<8x128xf32>
    %36 = arith.addf %34, %35 : vector<8x128xf32>
    %37 = math.tanh %36 : vector<8x128xf32>
    %38 = arith.mulf %33, %37 : vector<8x128xf32>
    %c5_i32 = arith.constant 5 : i32
    %39 = arith.muli %arg1, %c5_i32 : i32
    %40 = arith.addi %39, %c0_i32_8 : i32
    %c5_i32_14 = arith.constant 5 : i32
    %41 = arith.cmpi slt, %40, %c5_i32_14 : i32
    %42 = arith.select %41, %36, %6 : vector<8x128xf32>
    %43 = arith.select %41, %38, %5 : vector<8x128xf32>
    %44 = arith.index_cast %c0_i32_8 : i32 to index
    %c0_15 = arith.constant 0 : index
    %c0_16 = arith.constant 0 : index
    %45 = vector.load %arg7[%44, %c0_15, %c0_16] : memref<5x8x128xf32, #tpu.memory_space<vmem>>, vector<1x8x128xf32>
    %46 = vector.shape_cast %45 : vector<1x8x128xf32> to vector<8x128xf32>
    %47 = vector.shape_cast %43 : vector<8x128xf32> to vector<1x8x128xf32>
    tpu.vector_store %arg7[%44, %c0_15, %c0_16], %47 {strides = array<i32>} : memref<5x8x128xf32, #tpu.memory_space<vmem>>, vector<1x8x128xf32>,
    %c1_i32 = arith.constant 1 : i32
    %48 = arith.index_cast %c1_i32 : i32 to index
    %c0_17 = arith.constant 0 : index
    %c0_18 = arith.constant 0 : index
    %49 = vector.load %arg2[%48, %c0_17, %c0_18] : memref<5x8x128xf32, #tpu.memory_space<vmem>>, vector<1x8x128xf32>
    %50 = vector.shape_cast %49 : vector<1x8x128xf32> to vector<8x128xf32>
    %51 = tpu.concatenate %50, %43 in 1 : vector<8x128xf32>, vector<8x128xf32> -> vector<8x256xf32>
    %cst_19 = arith.constant dense<0.000000e+00> : vector<8x512xf32>
    %52 = tpu.matmul %51, %3, %cst_19 {dimension_numbers = #tpu.dot_dimension_numbers<[1], [0], [0], [1], [0, 0, 1, 1], [], []>} : vector<8x256xf32>, vector<256x512xf32>, vector<8x512xf32> -> vector<8x512xf32>
    %53 = vector.broadcast %4 : vector<1x512xf32> to vector<8x512xf32>
    %54 = arith.addf %52, %53 : vector<8x512xf32>
    %55 = vector.extract_strided_slice %54 {offsets = [0, 0], sizes = [8, 128], strides = [1, 1]} : vector<8x512xf32> to vector<8x128xf32>
    %56 = arith.negf %55 : vector<8x128xf32>
    %57 = math.exp %56 : vector<8x128xf32>
    %cst_20 = arith.constant 1.000000e+00 : f32
    %58 = vector.broadcast %cst_20 : f32 to vector<8x128xf32>
    %59 = arith.addf %58, %57 : vector<8x128xf32>
    %60 = arith.divf %58, %59 : vector<8x128xf32>
    %61 = vector.extract_strided_slice %54 {offsets = [0, 128], sizes = [8, 128], strides = [1, 1]} : vector<8x512xf32> to vector<8x128xf32>
    %62 = arith.negf %61 : vector<8x128xf32>
    %63 = math.exp %62 : vector<8x128xf32>
    %cst_21 = arith.constant 1.000000e+00 : f32
    %64 = vector.broadcast %cst_21 : f32 to vector<8x128xf32>
    %65 = arith.addf %64, %63 : vector<8x128xf32>
    %66 = arith.divf %64, %65 : vector<8x128xf32>
    %67 = vector.extract_strided_slice %54 {offsets = [0, 256], sizes = [8, 128], strides = [1, 1]} : vector<8x512xf32> to vector<8x128xf32>
    %68 = math.tanh %67 : vector<8x128xf32>
    %69 = vector.extract_strided_slice %54 {offsets = [0, 384], sizes = [8, 128], strides = [1, 1]} : vector<8x512xf32> to vector<8x128xf32>
    %70 = arith.negf %69 : vector<8x128xf32>
    %71 = math.exp %70 : vector<8x128xf32>
    %cst_22 = arith.constant 1.000000e+00 : f32
    %72 = vector.broadcast %cst_22 : f32 to vector<8x128xf32>
    %73 = arith.addf %72, %71 : vector<8x128xf32>
    %74 = arith.divf %72, %73 : vector<8x128xf32>
    %75 = arith.mulf %66, %42 : vector<8x128xf32>
    %76 = arith.mulf %60, %68 : vector<8x128xf32>
    %77 = arith.addf %75, %76 : vector<8x128xf32>
    %78 = math.tanh %77 : vector<8x128xf32>
    %79 = arith.mulf %74, %78 : vector<8x128xf32>
    %c5_i32_23 = arith.constant 5 : i32
    %80 = arith.muli %arg1, %c5_i32_23 : i32
    %81 = arith.addi %80, %c1_i32 : i32
    %c5_i32_24 = arith.constant 5 : i32
    %82 = arith.cmpi slt, %81, %c5_i32_24 : i32
    %83 = arith.select %82, %77, %42 : vector<8x128xf32>
    %84 = arith.select %82, %79, %43 : vector<8x128xf32>
    %85 = arith.index_cast %c1_i32 : i32 to index
    %c0_25 = arith.constant 0 : index
    %c0_26 = arith.constant 0 : index
    %86 = vector.load %arg7[%85, %c0_25, %c0_26] : memref<5x8x128xf32, #tpu.memory_space<vmem>>, vector<1x8x128xf32>
    %87 = vector.shape_cast %86 : vector<1x8x128xf32> to vector<8x128xf32>
    %88 = vector.shape_cast %84 : vector<8x128xf32> to vector<1x8x128xf32>
    tpu.vector_store %arg7[%85, %c0_25, %c0_26], %88 {strides = array<i32>} : memref<5x8x128xf32, #tpu.memory_space<vmem>>, vector<1x8x128xf32>,
    %c2_i32 = arith.constant 2 : i32
    %89 = arith.index_cast %c2_i32 : i32 to index
    %c0_27 = arith.constant 0 : index
    %c0_28 = arith.constant 0 : index
    %90 = vector.load %arg2[%89, %c0_27, %c0_28] : memref<5x8x128xf32, #tpu.memory_space<vmem>>, vector<1x8x128xf32>
    %91 = vector.shape_cast %90 : vector<1x8x128xf32> to vector<8x128xf32>
    %92 = tpu.concatenate %91, %84 in 1 : vector<8x128xf32>, vector<8x128xf32> -> vector<8x256xf32>
    %cst_29 = arith.constant dense<0.000000e+00> : vector<8x512xf32>
    %93 = tpu.matmul %92, %3, %cst_29 {dimension_numbers = #tpu.dot_dimension_numbers<[1], [0], [0], [1], [0, 0, 1, 1], [], []>} : vector<8x256xf32>, vector<256x512xf32>, vector<8x512xf32> -> vector<8x512xf32>
    %94 = vector.broadcast %4 : vector<1x512xf32> to vector<8x512xf32>
    %95 = arith.addf %93, %94 : vector<8x512xf32>
    %96 = vector.extract_strided_slice %95 {offsets = [0, 0], sizes = [8, 128], strides = [1, 1]} : vector<8x512xf32> to vector<8x128xf32>
    %97 = arith.negf %96 : vector<8x128xf32>
    %98 = math.exp %97 : vector<8x128xf32>
    %cst_30 = arith.constant 1.000000e+00 : f32
    %99 = vector.broadcast %cst_30 : f32 to vector<8x128xf32>
    %100 = arith.addf %99, %98 : vector<8x128xf32>
    %101 = arith.divf %99, %100 : vector<8x128xf32>
    %102 = vector.extract_strided_slice %95 {offsets = [0, 128], sizes = [8, 128], strides = [1, 1]} : vector<8x512xf32> to vector<8x128xf32>
    %103 = arith.negf %102 : vector<8x128xf32>
    %104 = math.exp %103 : vector<8x128xf32>
    %cst_31 = arith.constant 1.000000e+00 : f32
    %105 = vector.broadcast %cst_31 : f32 to vector<8x128xf32>
    %106 = arith.addf %105, %104 : vector<8x128xf32>
    %107 = arith.divf %105, %106 : vector<8x128xf32>
    %108 = vector.extract_strided_slice %95 {offsets = [0, 256], sizes = [8, 128], strides = [1, 1]} : vector<8x512xf32> to vector<8x128xf32>
    %109 = math.tanh %108 : vector<8x128xf32>
    %110 = vector.extract_strided_slice %95 {offsets = [0, 384], sizes = [8, 128], strides = [1, 1]} : vector<8x512xf32> to vector<8x128xf32>
    %111 = arith.negf %110 : vector<8x128xf32>
    %112 = math.exp %111 : vector<8x128xf32>
    %cst_32 = arith.constant 1.000000e+00 : f32
    %113 = vector.broadcast %cst_32 : f32 to vector<8x128xf32>
    %114 = arith.addf %113, %112 : vector<8x128xf32>
    %115 = arith.divf %113, %114 : vector<8x128xf32>
    %116 = arith.mulf %107, %83 : vector<8x128xf32>
    %117 = arith.mulf %101, %109 : vector<8x128xf32>
    %118 = arith.addf %116, %117 : vector<8x128xf32>
    %119 = math.tanh %118 : vector<8x128xf32>
    %120 = arith.mulf %115, %119 : vector<8x128xf32>
    %c5_i32_33 = arith.constant 5 : i32
    %121 = arith.muli %arg1, %c5_i32_33 : i32
    %122 = arith.addi %121, %c2_i32 : i32
    %c5_i32_34 = arith.constant 5 : i32
    %123 = arith.cmpi slt, %122, %c5_i32_34 : i32
    %124 = arith.select %123, %118, %83 : vector<8x128xf32>
    %125 = arith.select %123, %120, %84 : vector<8x128xf32>
    %126 = arith.index_cast %c2_i32 : i32 to index
    %c0_35 = arith.constant 0 : index
    %c0_36 = arith.constant 0 : index
    %127 = vector.load %arg7[%126, %c0_35, %c0_36] : memref<5x8x128xf32, #tpu.memory_space<vmem>>, vector<1x8x128xf32>
    %128 = vector.shape_cast %127 : vector<1x8x128xf32> to vector<8x128xf32>
    %129 = vector.shape_cast %125 : vector<8x128xf32> to vector<1x8x128xf32>
    tpu.vector_store %arg7[%126, %c0_35, %c0_36], %129 {strides = array<i32>} : memref<5x8x128xf32, #tpu.memory_space<vmem>>, vector<1x8x128xf32>,
    %c3_i32 = arith.constant 3 : i32
    %130 = arith.index_cast %c3_i32 : i32 to index
    %c0_37 = arith.constant 0 : index
    %c0_38 = arith.constant 0 : index
    %131 = vector.load %arg2[%130, %c0_37, %c0_38] : memref<5x8x128xf32, #tpu.memory_space<vmem>>, vector<1x8x128xf32>
    %132 = vector.shape_cast %131 : vector<1x8x128xf32> to vector<8x128xf32>
    %133 = tpu.concatenate %132, %125 in 1 : vector<8x128xf32>, vector<8x128xf32> -> vector<8x256xf32>
    %cst_39 = arith.constant dense<0.000000e+00> : vector<8x512xf32>
    %134 = tpu.matmul %133, %3, %cst_39 {dimension_numbers = #tpu.dot_dimension_numbers<[1], [0], [0], [1], [0, 0, 1, 1], [], []>} : vector<8x256xf32>, vector<256x512xf32>, vector<8x512xf32> -> vector<8x512xf32>
    %135 = vector.broadcast %4 : vector<1x512xf32> to vector<8x512xf32>
    %136 = arith.addf %134, %135 : vector<8x512xf32>
    %137 = vector.extract_strided_slice %136 {offsets = [0, 0], sizes = [8, 128], strides = [1, 1]} : vector<8x512xf32> to vector<8x128xf32>
    %138 = arith.negf %137 : vector<8x128xf32>
    %139 = math.exp %138 : vector<8x128xf32>
    %cst_40 = arith.constant 1.000000e+00 : f32
    %140 = vector.broadcast %cst_40 : f32 to vector<8x128xf32>
    %141 = arith.addf %140, %139 : vector<8x128xf32>
    %142 = arith.divf %140, %141 : vector<8x128xf32>
    %143 = vector.extract_strided_slice %136 {offsets = [0, 128], sizes = [8, 128], strides = [1, 1]} : vector<8x512xf32> to vector<8x128xf32>
    %144 = arith.negf %143 : vector<8x128xf32>
    %145 = math.exp %144 : vector<8x128xf32>
    %cst_41 = arith.constant 1.000000e+00 : f32
    %146 = vector.broadcast %cst_41 : f32 to vector<8x128xf32>
    %147 = arith.addf %146, %145 : vector<8x128xf32>
    %148 = arith.divf %146, %147 : vector<8x128xf32>
    %149 = vector.extract_strided_slice %136 {offsets = [0, 256], sizes = [8, 128], strides = [1, 1]} : vector<8x512xf32> to vector<8x128xf32>
    %150 = math.tanh %149 : vector<8x128xf32>
    %151 = vector.extract_strided_slice %136 {offsets = [0, 384], sizes = [8, 128], strides = [1, 1]} : vector<8x512xf32> to vector<8x128xf32>
    %152 = arith.negf %151 : vector<8x128xf32>
    %153 = math.exp %152 : vector<8x128xf32>
    %cst_42 = arith.constant 1.000000e+00 : f32
    %154 = vector.broadcast %cst_42 : f32 to vector<8x128xf32>
    %155 = arith.addf %154, %153 : vector<8x128xf32>
    %156 = arith.divf %154, %155 : vector<8x128xf32>
    %157 = arith.mulf %148, %124 : vector<8x128xf32>
    %158 = arith.mulf %142, %150 : vector<8x128xf32>
    %159 = arith.addf %157, %158 : vector<8x128xf32>
    %160 = math.tanh %159 : vector<8x128xf32>
    %161 = arith.mulf %156, %160 : vector<8x128xf32>
    %c5_i32_43 = arith.constant 5 : i32
    %162 = arith.muli %arg1, %c5_i32_43 : i32
    %163 = arith.addi %162, %c3_i32 : i32
    %c5_i32_44 = arith.constant 5 : i32
    %164 = arith.cmpi slt, %163, %c5_i32_44 : i32
    %165 = arith.select %164, %159, %124 : vector<8x128xf32>
    %166 = arith.select %164, %161, %125 : vector<8x128xf32>
    %167 = arith.index_cast %c3_i32 : i32 to index
    %c0_45 = arith.constant 0 : index
    %c0_46 = arith.constant 0 : index
    %168 = vector.load %arg7[%167, %c0_45, %c0_46] : memref<5x8x128xf32, #tpu.memory_space<vmem>>, vector<1x8x128xf32>
    %169 = vector.shape_cast %168 : vector<1x8x128xf32> to vector<8x128xf32>
    %170 = vector.shape_cast %166 : vector<8x128xf32> to vector<1x8x128xf32>
    tpu.vector_store %arg7[%167, %c0_45, %c0_46], %170 {strides = array<i32>} : memref<5x8x128xf32, #tpu.memory_space<vmem>>, vector<1x8x128xf32>,
    %c4_i32 = arith.constant 4 : i32
    %171 = arith.index_cast %c4_i32 : i32 to index
    %c0_47 = arith.constant 0 : index
    %c0_48 = arith.constant 0 : index
    %172 = vector.load %arg2[%171, %c0_47, %c0_48] : memref<5x8x128xf32, #tpu.memory_space<vmem>>, vector<1x8x128xf32>
    %173 = vector.shape_cast %172 : vector<1x8x128xf32> to vector<8x128xf32>
    %174 = tpu.concatenate %173, %166 in 1 : vector<8x128xf32>, vector<8x128xf32> -> vector<8x256xf32>
    %cst_49 = arith.constant dense<0.000000e+00> : vector<8x512xf32>
    %175 = tpu.matmul %174, %3, %cst_49 {dimension_numbers = #tpu.dot_dimension_numbers<[1], [0], [0], [1], [0, 0, 1, 1], [], []>} : vector<8x256xf32>, vector<256x512xf32>, vector<8x512xf32> -> vector<8x512xf32>
    %176 = vector.broadcast %4 : vector<1x512xf32> to vector<8x512xf32>
    %177 = arith.addf %175, %176 : vector<8x512xf32>
    %178 = vector.extract_strided_slice %177 {offsets = [0, 0], sizes = [8, 128], strides = [1, 1]} : vector<8x512xf32> to vector<8x128xf32>
    %179 = arith.negf %178 : vector<8x128xf32>
    %180 = math.exp %179 : vector<8x128xf32>
    %cst_50 = arith.constant 1.000000e+00 : f32
    %181 = vector.broadcast %cst_50 : f32 to vector<8x128xf32>
    %182 = arith.addf %181, %180 : vector<8x128xf32>
    %183 = arith.divf %181, %182 : vector<8x128xf32>
    %184 = vector.extract_strided_slice %177 {offsets = [0, 128], sizes = [8, 128], strides = [1, 1]} : vector<8x512xf32> to vector<8x128xf32>
    %185 = arith.negf %184 : vector<8x128xf32>
    %186 = math.exp %185 : vector<8x128xf32>
    %cst_51 = arith.constant 1.000000e+00 : f32
    %187 = vector.broadcast %cst_51 : f32 to vector<8x128xf32>
    %188 = arith.addf %187, %186 : vector<8x128xf32>
    %189 = arith.divf %187, %188 : vector<8x128xf32>
    %190 = vector.extract_strided_slice %177 {offsets = [0, 256], sizes = [8, 128], strides = [1, 1]} : vector<8x512xf32> to vector<8x128xf32>
    %191 = math.tanh %190 : vector<8x128xf32>
    %192 = vector.extract_strided_slice %177 {offsets = [0, 384], sizes = [8, 128], strides = [1, 1]} : vector<8x512xf32> to vector<8x128xf32>
    %193 = arith.negf %192 : vector<8x128xf32>
    %194 = math.exp %193 : vector<8x128xf32>
    %cst_52 = arith.constant 1.000000e+00 : f32
    %195 = vector.broadcast %cst_52 : f32 to vector<8x128xf32>
    %196 = arith.addf %195, %194 : vector<8x128xf32>
    %197 = arith.divf %195, %196 : vector<8x128xf32>
    %198 = arith.mulf %189, %165 : vector<8x128xf32>
    %199 = arith.mulf %183, %191 : vector<8x128xf32>
    %200 = arith.addf %198, %199 : vector<8x128xf32>
    %201 = math.tanh %200 : vector<8x128xf32>
    %202 = arith.mulf %197, %201 : vector<8x128xf32>
    %c5_i32_53 = arith.constant 5 : i32
    %203 = arith.muli %arg1, %c5_i32_53 : i32
    %204 = arith.addi %203, %c4_i32 : i32
    %c5_i32_54 = arith.constant 5 : i32
    %205 = arith.cmpi slt, %204, %c5_i32_54 : i32
    %206 = arith.select %205, %200, %165 : vector<8x128xf32>
    %207 = arith.select %205, %202, %166 : vector<8x128xf32>
    %208 = arith.index_cast %c4_i32 : i32 to index
    %c0_55 = arith.constant 0 : index
    %c0_56 = arith.constant 0 : index
    %209 = vector.load %arg7[%208, %c0_55, %c0_56] : memref<5x8x128xf32, #tpu.memory_space<vmem>>, vector<1x8x128xf32>
    %210 = vector.shape_cast %209 : vector<1x8x128xf32> to vector<8x128xf32>
    %211 = vector.shape_cast %207 : vector<8x128xf32> to vector<1x8x128xf32>
    tpu.vector_store %arg7[%208, %c0_55, %c0_56], %211 {strides = array<i32>} : memref<5x8x128xf32, #tpu.memory_space<vmem>>, vector<1x8x128xf32>,
    %c5_i32_57 = arith.constant 5 : i32
    %c0_58 = arith.constant 0 : index
    %c0_59 = arith.constant 0 : index
    %212 = vector.load %arg10[%c0_58, %c0_59] : memref<8x128xf32, #tpu.memory_space<vmem>>, vector<8x128xf32>
    tpu.vector_store %arg10[%c0_58, %c0_59], %207 {strides = array<i32>} : memref<8x128xf32, #tpu.memory_space<vmem>>, vector<8x128xf32>,
    %c0_60 = arith.constant 0 : index
    %c0_61 = arith.constant 0 : index
    %213 = vector.load %arg11[%c0_60, %c0_61] : memref<8x128xf32, #tpu.memory_space<vmem>>, vector<8x128xf32>
    tpu.vector_store %arg11[%c0_60, %c0_61], %206 {strides = array<i32>} : memref<8x128xf32, #tpu.memory_space<vmem>>, vector<8x128xf32>,
    %c0_i32_62 = arith.constant 0 : i32
    %214 = arith.cmpi eq, %arg1, %c0_i32_62 : i32
    %215 = arith.extui %214 : i1 to i32
    %c0_i32_63 = arith.constant 0 : i32
    %216 = arith.cmpi ne, %215, %c0_i32_63 : i32
    scf.if %216 {
      %c0_64 = arith.constant 0 : index
      %c0_65 = arith.constant 0 : index
      %217 = vector.load %arg8[%c0_64, %c0_65] : memref<8x128xf32, #tpu.memory_space<vmem>>, vector<8x128xf32>
      tpu.vector_store %arg8[%c0_64, %c0_65], %207 {strides = array<i32>} : memref<8x128xf32, #tpu.memory_space<vmem>>, vector<8x128xf32>,
      %c0_66 = arith.constant 0 : index
      %c0_67 = arith.constant 0 : index
      %218 = vector.load %arg9[%c0_66, %c0_67] : memref<8x128xf32, #tpu.memory_space<vmem>>, vector<8x128xf32>
      tpu.vector_store %arg9[%c0_66, %c0_67], %206 {strides = array<i32>} : memref<8x128xf32, #tpu.memory_space<vmem>>, vector<8x128xf32>,
    } else {
    }
    return
  }
  func.func @transform_0(%arg0: i32, %arg1: i32) -> (i32, i32, i32) {
    %c0_i32 = arith.constant 0 : i32
    %c0_i32_0 = arith.constant 0 : i32
    return %arg1, %arg0, %c0_i32 : i32, i32, i32
  }
  func.func @transform_1(%arg0: i32, %arg1: i32) -> (i32, i32) {
    %c0_i32 = arith.constant 0 : i32
    %c0_i32_0 = arith.constant 0 : i32
    %c0_i32_1 = arith.constant 0 : i32
    return %c0_i32, %c0_i32_0 : i32, i32
  }
  func.func @transform_2(%arg0: i32, %arg1: i32) -> (i32, i32) {
    %c0_i32 = arith.constant 0 : i32
    %c0_i32_0 = arith.constant 0 : i32
    %c0_i32_1 = arith.constant 0 : i32
    return %c0_i32, %c0_i32_0 : i32, i32
  }
  func.func @transform_3(%arg0: i32, %arg1: i32) -> (i32, i32) {
    %c0_i32 = arith.constant 0 : i32
    %c0_i32_0 = arith.constant 0 : i32
    return %arg0, %c0_i32 : i32, i32
  }
  func.func @transform_4(%arg0: i32, %arg1: i32) -> (i32, i32) {
    %c0_i32 = arith.constant 0 : i32
    %c0_i32_0 = arith.constant 0 : i32
    return %arg0, %c0_i32 : i32, i32
  }
  func.func @transform_5(%arg0: i32, %arg1: i32) -> (i32, i32, i32) {
    %c0_i32 = arith.constant 0 : i32
    %c0_i32_0 = arith.constant 0 : i32
    return %arg1, %arg0, %c0_i32 : i32, i32, i32
  }
  func.func @transform_6(%arg0: i32, %arg1: i32) -> (i32, i32) {
    %c0_i32 = arith.constant 0 : i32
    %c0_i32_0 = arith.constant 0 : i32
    return %arg0, %c0_i32 : i32, i32
  }
  func.func @transform_7(%arg0: i32, %arg1: i32) -> (i32, i32) {
    %c0_i32 = arith.constant 0 : i32
    %c0_i32_0 = arith.constant 0 : i32
    return %arg0, %c0_i32 : i32, i32
  }
}

</mosaic_0001>

<llo_original>
// kernel: tpu_custom_call.1
$region0: #{tpu_custom_call.1}
  #allocation0 [shape = 'u32[]', space=smem, size = 0x4, offset = 0x4, fixed_abs, tag = 'smem constant byte address 0x4 - core index']
  #allocation1 [shape = 'u32[144,128]{1,0:T(1,128)}', space=vmem, size = 0x12000, scoped, tag = 'internal scratch']
  #allocation2 [shape = 'f32[8,128]{1,0:T(8,128)}', space=vmem, size = 0x1000, scoped, tag = 'scratch operand']
  #allocation3 [shape = 'f32[8,128]{1,0:T(8,128)}', space=vmem, size = 0x1000, scoped, tag = 'scratch operand']
  %s0 = inlined_call_operand.hbm [shape: f32[5,8,128], index: 0, kind: input, shape index: {}]
  %s1 = inlined_call_operand.hbm [shape: f32[256,512], index: 1, kind: input, shape index: {}]
  %s2 = inlined_call_operand.hbm [shape: f32[1,512], index: 2, kind: input, shape index: {}]
  %s3 = inlined_call_operand.hbm [shape: f32[8,128], index: 3, kind: input, shape index: {}]
  %s4 = inlined_call_operand.hbm [shape: f32[8,128], index: 4, kind: input, shape index: {}]
  %s5 = inlined_call_operand.hbm [shape: f32[5,8,128], index: 5, kind: output, shape index: {0}]
  %s6 = inlined_call_operand.hbm [shape: f32[8,128], index: 6, kind: output, shape index: {1}]
  %s7 = inlined_call_operand.hbm [shape: f32[8,128], index: 7, kind: output, shape index: {2}]
  %8 = xla_tuple %s5, %s6, %s7
  %s9 = sld [smem:[#allocation0]]
  $region74: #{tpu_custom_call.1} parent=0
    _
  %s11 = ssub.s32 1, %s9
  %s12 = scalar_select 0, %s11, %s9
  $region1: #{tpu_custom_call.1} parent=0
    #allocation4 [shape = 'u8[20480]{0}', space=vmem, size = 0x5000, scoped, tag = 'input window, operand 0, single buffered']
    #allocation5 [shape = 's32[1]{0}', space=sflag, size = 0x4, scoped, tag = 'scoped memory for tpu_custom_call.1']
    #allocation6 [shape = 's32[1]{0}', space=sflag, size = 0x4, scoped, tag = 'scoped memory for tpu_custom_call.1']
    #allocation7 [shape = 'u8[524288]{0}', space=vmem, size = 0x80000, scoped, tag = 'input window, operand 1, single buffered']
    #allocation8 [shape = 's32[1]{0}', space=sflag, size = 0x4, scoped, tag = 'scoped memory for tpu_custom_call.1']
    #allocation9 [shape = 'u8[2048]{0}', space=vmem, size = 0x800, scoped, tag = 'input window, operand 2, single buffered']
    #allocation10 [shape = 'u8[4096]{0}', space=vmem, size = 0x1000, scoped, tag = 'input window, operand 3, single buffered']
    #allocation11 [shape = 's32[1]{0}', space=sflag, size = 0x4, scoped, tag = 'scoped memory for tpu_custom_call.1']
    #allocation12 [shape = 'u8[4096]{0}', space=vmem, size = 0x1000, scoped, tag = 'input window, operand 4, single buffered']
    #allocation13 [shape = 'u8[20480]{0}', space=vmem, size = 0x5000, scoped, tag = 'output window, operand 0, single buffered']
    #allocation14 [shape = 'u8[4096]{0}', space=vmem, size = 0x1000, scoped, tag = 'output window, operand 1, single buffered']
    #allocation15 [shape = 's32[1]{0}', space=sflag, size = 0x4, scoped, tag = 'scoped memory for tpu_custom_call.1']
    #allocation16 [shape = 'u8[4096]{0}', space=vmem, size = 0x1000, scoped, tag = 'output window, operand 2, single buffered']
    %13 = vsyncpa [#allocation5], 0
    %14 = vsyncpa [#allocation8], 0
    %15 = vsyncpa [#allocation11], 0
    %16 = vsyncpa [#allocation6], 0
    %17 = vsyncpa [#allocation15], 0
    // Predicated region
    $region2: #{tpu_custom_call.1} parent=1 // pred_check
      _
    $region3: #{tpu_custom_call.1} parent=1 // pred_check_branch
      %19 = sbr.rel (0) target = $region5
    $region4: #{tpu_custom_call.1} parent=1 // pred_region
      %s21 = ssub.s32 640, 640
      %22 = vsyncadd [#allocation5], %s21
      %s23 = sshll.u32 [#allocation4], 4
      %s24 = int_to_ptr.vmem [resolvable:$true] %s23
      %29 = dma.hbm_to_vmem [thread:$0]  %s0, 640, %s24, [#allocation5], 128, 128, 8
    $region5: #{tpu_custom_call.1} parent=1 // pred_fallthru
      _
    // Predicated region
    $region6: #{tpu_custom_call.1} parent=1 // pred_check
      _
    $region7: #{tpu_custom_call.1} parent=1 // pred_check_branch
      %31 = sbr.rel (0) target = $region9
    $region8: #{tpu_custom_call.1} parent=1 // pred_region
      %s33 = ssub.s32 16384, 16384
      %34 = vsyncadd [#allocation8], %s33
      %s35 = sshll.u32 [#allocation7], 4
      %s36 = int_to_ptr.vmem [resolvable:$true] %s35
      %41 = dma.hbm_to_vmem [thread:$0]  %s1, 16384, %s36, [#allocation8], 512, 512, 32
    $region9: #{tpu_custom_call.1} parent=1 // pred_fallthru
      _
    // Predicated region
    $region10: #{tpu_custom_call.1} parent=1 // pred_check
      _
    $region11: #{tpu_custom_call.1} parent=1 // pred_check_branch
      %43 = sbr.rel (0) target = $region13
    $region12: #{tpu_custom_call.1} parent=1 // pred_region
      %s45 = ssub.s32 64, 64
      %46 = vsyncadd [#allocation8], %s45
      %s48 = sshll.u32 [#allocation9], 4
      %s49 = int_to_ptr.vmem [resolvable:$true] %s48
      %51 = dma.hbm_to_vmem [thread:$0]  %s2, 64, %s49, [#allocation8]
    $region13: #{tpu_custom_call.1} parent=1 // pred_fallthru
      _
    // Predicated region
    $region14: #{tpu_custom_call.1} parent=1 // pred_check
      _
    $region15: #{tpu_custom_call.1} parent=1 // pred_check_branch
      %53 = sbr.rel (0) target = $region17
    $region16: #{tpu_custom_call.1} parent=1 // pred_region
      %s55 = ssub.s32 128, 128
      %56 = vsyncadd [#allocation11], %s55
      %s58 = sshll.u32 [#allocation10], 4
      %s59 = int_to_ptr.vmem [resolvable:$true] %s58
      %61 = dma.hbm_to_vmem [thread:$0]  %s3, 128, %s59, [#allocation11]
    $region17: #{tpu_custom_call.1} parent=1 // pred_fallthru
      _
    // Predicated region
    $region18: #{tpu_custom_call.1} parent=1 // pred_check
      _
    $region19: #{tpu_custom_call.1} parent=1 // pred_check_branch
      %63 = sbr.rel (0) target = $region21
    $region20: #{tpu_custom_call.1} parent=1 // pred_region
      %s65 = ssub.s32 128, 128
      %66 = vsyncadd [#allocation11], %s65
      %s68 = sshll.u32 [#allocation12], 4
      %s69 = int_to_ptr.vmem [resolvable:$true] %s68
      %71 = dma.hbm_to_vmem [thread:$0]  %s4, 128, %s69, [#allocation11]
    $region21: #{tpu_custom_call.1} parent=1 // pred_fallthru
      _
    // Predicated region
    $region22: #{tpu_custom_call.1} parent=1 // pred_check
      _
    $region23: #{tpu_custom_call.1} parent=1 // pred_check_branch
      %73 = sbr.rel (0) target = $region25
    $region24: #{tpu_custom_call.1} parent=1 // pred_region
      %74 = dma.done [#allocation5], 640
    $region25: #{tpu_custom_call.1} parent=1 // pred_fallthru
      _
    // Predicated region
    $region26: #{tpu_custom_call.1} parent=1 // pred_check
      _
    $region27: #{tpu_custom_call.1} parent=1 // pred_check_branch
      %76 = sbr.rel (0) target = $region29
    $region28: #{tpu_custom_call.1} parent=1 // pred_region
      %77 = dma.done [#allocation8], 16384
    $region29: #{tpu_custom_call.1} parent=1 // pred_fallthru
      _
    // Predicated region
    $region30: #{tpu_custom_call.1} parent=1 // pred_check
      _
    $region31: #{tpu_custom_call.1} parent=1 // pred_check_branch
      %79 = sbr.rel (0) target = $region33
    $region32: #{tpu_custom_call.1} parent=1 // pred_region
      %80 = dma.done [#allocation8], 64
    $region33: #{tpu_custom_call.1} parent=1 // pred_fallthru
      _
    // Predicated region
    $region34: #{tpu_custom_call.1} parent=1 // pred_check
      _
    $region35: #{tpu_custom_call.1} parent=1 // pred_check_branch
      %82 = sbr.rel (0) target = $region37
    $region36: #{tpu_custom_call.1} parent=1 // pred_region
      %83 = dma.done [#allocation11], 128
    $region37: #{tpu_custom_call.1} parent=1 // pred_fallthru
      _
    // Predicated region
    $region38: #{tpu_custom_call.1} parent=1 // pred_check
      _
    $region39: #{tpu_custom_call.1} parent=1 // pred_check_branch
      %85 = sbr.rel (0) target = $region41
    $region40: #{tpu_custom_call.1} parent=1 // pred_region
      %86 = dma.done [#allocation11], 128
    $region41: #{tpu_custom_call.1} parent=1 // pred_fallthru
      _
    %p87 = scmp.eq.s32.totalorder 0, 0
    // Predicated region
    $region42: #{tpu_custom_call.1} parent=1 // pred_check
      %p88 = pneg %p87
    $region43: #{tpu_custom_call.1} parent=1 // pred_check_branch
      %90 = sbr.rel (%p88) target = $region45
    $region44: #{tpu_custom_call.1} parent=1 // pred_region
      %v91 = vld [vmem:[#allocation10] sm:$0xff]
      %92 = vst [vmem:[#allocation2] sm:$0xff] %v91
      %v93 = vld [vmem:[#allocation12] sm:$0xff]
      %94 = vst [vmem:[#allocation3] sm:$0xff] %v93
    $region45: #{tpu_custom_call.1} parent=1 // pred_fallthru
      _
    %v95 = vld [vmem:[#allocation7] sm:$0xff]
    %v96 = vld [vmem:[#allocation7 + $0x8] sm:$0xff]
    %v97 = vld [vmem:[#allocation7 + $0x10] sm:$0xff]
    %v98 = vld [vmem:[#allocation7 + $0x18] sm:$0xff]
    %v99 = vld [vmem:[#allocation7 + $0x20] sm:$0xff]
    %v100 = vld [vmem:[#allocation7 + $0x28] sm:$0xff]
    %v101 = vld [vmem:[#allocation7 + $0x30] sm:$0xff]
    %v102 = vld [vmem:[#allocation7 + $0x38] sm:$0xff]
    %v103 = vld [vmem:[#allocation7 + $0x40] sm:$0xff]
    %v104 = vld [vmem:[#allocation7 + $0x48] sm:$0xff]
    %v105 = vld [vmem:[#allocation7 + $0x50] sm:$0xff]
    %v106 = vld [vmem:[#allocation7 + $0x58] sm:$0xff]
    %v107 = vld [vmem:[#allocation7 + $0x60] sm:$0xff]
    %v108 = vld [vmem:[#allocation7 + $0x68] sm:$0xff]
    %v109 = vld [vmem:[#allocation7 + $0x70] sm:$0xff]
    %v110 = vld [vmem:[#allocation7 + $0x78] sm:$0xff]
    %v111 = vld [vmem:[#allocation7 + $0x80] sm:$0xff]
    %v112 = vld [vmem:[#allocation7 + $0x88] sm:$0xff]
    %v113 = vld [vmem:[#allocation7 + $0x90] sm:$0xff]
    %v114 = vld [vmem:[#allocation7 + $0x98] sm:$0xff]
    %v115 = vld [vmem:[#allocation7 + $0xa0] sm:$0xff]
    %v116 = vld [vmem:[#allocation7 + $0xa8] sm:$0xff]
    %v117 = vld [vmem:[#allocation7 + $0xb0] sm:$0xff]
    %v118 = vld [vmem:[#allocation7 + $0xb8] sm:$0xff]
    %v119 = vld [vmem:[#allocation7 + $0xc0] sm:$0xff]
    %v120 = vld [vmem:[#allocation7 + $0xc8] sm:$0xff]
    %v121 = vld [vmem:[#allocation7 + $0xd0] sm:$0xff]
    %v122 = vld [vmem:[#allocation7 + $0xd8] sm:$0xff]
    %v123 = vld [vmem:[#allocation7 + $0xe0] sm:$0xff]
    %v124 = vld [vmem:[#allocation7 + $0xe8] sm:$0xff]
    %v125 = vld [vmem:[#allocation7 + $0xf0] sm:$0xff]
    %v126 = vld [vmem:[#allocation7 + $0xf8] sm:$0xff]
    %v127 = vld [vmem:[#allocation7 + $0x100] sm:$0xff]
    %v128 = vld [vmem:[#allocation7 + $0x108] sm:$0xff]
    %v129 = vld [vmem:[#allocation7 + $0x110] sm:$0xff]
    %v130 = vld [vmem:[#allocation7 + $0x118] sm:$0xff]
    %v131 = vld [vmem:[#allocation7 + $0x120] sm:$0xff]
    %v132 = vld [vmem:[#allocation7 + $0x128] sm:$0xff]
    %v133 = vld [vmem:[#allocation7 + $0x130] sm:$0xff]
    %v134 = vld [vmem:[#allocation7 + $0x138] sm:$0xff]
    %v135 = vld [vmem:[#allocation7 + $0x140] sm:$0xff]
    %v136 = vld [vmem:[#allocation7 + $0x148] sm:$0xff]
    %v137 = vld [vmem:[#allocation7 + $0x150] sm:$0xff]
    %v138 = vld [vmem:[#allocation7 + $0x158] sm:$0xff]
    %v139 = vld [vmem:[#allocation7 + $0x160] sm:$0xff]
    %v140 = vld [vmem:[#allocation7 + $0x168] sm:$0xff]
    %v141 = vld [vmem:[#allocation7 + $0x170] sm:$0xff]
    %v142 = vld [vmem:[#allocation7 + $0x178] sm:$0xff]
    %v143 = vld [vmem:[#allocation7 + $0x180] sm:$0xff]
    %v144 = vld [vmem:[#allocation7 + $0x188] sm:$0xff]
    %v145 = vld [vmem:[#allocation7 + $0x190] sm:$0xff]
    %v146 = vld [vmem:[#allocation7 + $0x198] sm:$0xff]
    %v147 = vld [vmem:[#allocation7 + $0x1a0] sm:$0xff]
    %v148 = vld [vmem:[#allocation7 + $0x1a8] sm:$0xff]
    %v149 = vld [vmem:[#allocation7 + $0x1b0] sm:$0xff]
    %v150 = vld [vmem:[#allocation7 + $0x1b8] sm:$0xff]
    %v151 = vld [vmem:[#allocation7 + $0x1c0] sm:$0xff]
    %v152 = vld [vmem:[#allocation7 + $0x1c8] sm:$0xff]
    %v153 = vld [vmem:[#allocation7 + $0x1d0] sm:$0xff]
    %v154 = vld [vmem:[#allocation7 + $0x1d8] sm:$0xff]
    %v155 = vld [vmem:[#allocation7 + $0x1e0] sm:$0xff]
    %v156 = vld [vmem:[#allocation7 + $0x1e8] sm:$0xff]
    %v157 = vld [vmem:[#allocation7 + $0x1f0] sm:$0xff]
    %v158 = vld [vmem:[#allocation7 + $0x1f8] sm:$0xff]
    %v159 = vld [vmem:[#allocation7 + $0x200] sm:$0xff]
    %v160 = vld [vmem:[#allocation7 + $0x208] sm:$0xff]
    %v161 = vld [vmem:[#allocation7 + $0x210] sm:$0xff]
    %v162 = vld [vmem:[#allocation7 + $0x218] sm:$0xff]
    %v163 = vld [vmem:[#allocation7 + $0x220] sm:$0xff]
    %v164 = vld [vmem:[#allocation7 + $0x228] sm:$0xff]
    %v165 = vld [vmem:[#allocation7 + $0x230] sm:$0xff]
    %v166 = vld [vmem:[#allocation7 + $0x238] sm:$0xff]
    %v167 = vld [vmem:[#allocation7 + $0x240] sm:$0xff]
    %v168 = vld [vmem:[#allocation7 + $0x248] sm:$0xff]
    %v169 = vld [vmem:[#allocation7 + $0x250] sm:$0xff]
    %v170 = vld [vmem:[#allocation7 + $0x258] sm:$0xff]
    %v171 = vld [vmem:[#allocation7 + $0x260] sm:$0xff]
    %v172 = vld [vmem:[#allocation7 + $0x268] sm:$0xff]
    %v173 = vld [vmem:[#allocation7 + $0x270] sm:$0xff]
    %v174 = vld [vmem:[#allocation7 + $0x278] sm:$0xff]
    %v175 = vld [vmem:[#allocation7 + $0x280] sm:$0xff]
    %v176 = vld [vmem:[#allocation7 + $0x288] sm:$0xff]
    %v177 = vld [vmem:[#allocation7 + $0x290] sm:$0xff]
    %v178 = vld [vmem:[#allocation7 + $0x298] sm:$0xff]
    %v179 = vld [vmem:[#allocation7 + $0x2a0] sm:$0xff]
    %v180 = vld [vmem:[#allocation7 + $0x2a8] sm:$0xff]
    %v181 = vld [vmem:[#allocation7 + $0x2b0] sm:$0xff]
    %v182 = vld [vmem:[#allocation7 + $0x2b8] sm:$0xff]
    %v183 = vld [vmem:[#allocation7 + $0x2c0] sm:$0xff]
    %v184 = vld [vmem:[#allocation7 + $0x2c8] sm:$0xff]
    %v185 = vld [vmem:[#allocation7 + $0x2d0] sm:$0xff]
    %v186 = vld [vmem:[#allocation7 + $0x2d8] sm:$0xff]
    %v187 = vld [vmem:[#allocation7 + $0x2e0] sm:$0xff]
    %v188 = vld [vmem:[#allocation7 + $0x2e8] sm:$0xff]
    %v189 = vld [vmem:[#allocation7 + $0x2f0] sm:$0xff]
    %v190 = vld [vmem:[#allocation7 + $0x2f8] sm:$0xff]
    %v191 = vld [vmem:[#allocation7 + $0x300] sm:$0xff]
    %v192 = vld [vmem:[#allocation7 + $0x308] sm:$0xff]
    %v193 = vld [vmem:[#allocation7 + $0x310] sm:$0xff]
    %v194 = vld [vmem:[#allocation7 + $0x318] sm:$0xff]
    %v195 = vld [vmem:[#allocation7 + $0x320] sm:$0xff]
    %v196 = vld [vmem:[#allocation7 + $0x328] sm:$0xff]
    %v197 = vld [vmem:[#allocation7 + $0x330] sm:$0xff]
    %v198 = vld [vmem:[#allocation7 + $0x338] sm:$0xff]
    %v199 = vld [vmem:[#allocation7 + $0x340] sm:$0xff]
    %v200 = vld [vmem:[#allocation7 + $0x348] sm:$0xff]
    %v201 = vld [vmem:[#allocation7 + $0x350] sm:$0xff]
    %v202 = vld [vmem:[#allocation7 + $0x358] sm:$0xff]
    %v203 = vld [vmem:[#allocation7 + $0x360] sm:$0xff]
    %v204 = vld [vmem:[#allocation7 + $0x368] sm:$0xff]
    %v205 = vld [vmem:[#allocation7 + $0x370] sm:$0xff]
    %v206 = vld [vmem:[#allocation7 + $0x378] sm:$0xff]
    %v207 = vld [vmem:[#allocation7 + $0x380] sm:$0xff]
    %v208 = vld [vmem:[#allocation7 + $0x388] sm:$0xff]
    %v209 = vld [vmem:[#allocation7 + $0x390] sm:$0xff]
    %v210 = vld [vmem:[#allocation7 + $0x398] sm:$0xff]
    %v211 = vld [vmem:[#allocation7 + $0x3a0] sm:$0xff]
    %v212 = vld [vmem:[#allocation7 + $0x3a8] sm:$0xff]
    %v213 = vld [vmem:[#allocation7 + $0x3b0] sm:$0xff]
    %v214 = vld [vmem:[#allocation7 + $0x3b8] sm:$0xff]
    %v215 = vld [vmem:[#allocation7 + $0x3c0] sm:$0xff]
    %v216 = vld [vmem:[#allocation7 + $0x3c8] sm:$0xff]
    %v217 = vld [vmem:[#allocation7 + $0x3d0] sm:$0xff]
    %v218 = vld [vmem:[#allocation7 + $0x3d8] sm:$0xff]
    %v219 = vld [vmem:[#allocation7 + $0x3e0] sm:$0xff]
    %v220 = vld [vmem:[#allocation7 + $0x3e8] sm:$0xff]
    %v221 = vld [vmem:[#allocation7 + $0x3f0] sm:$0xff]
    %v222 = vld [vmem:[#allocation7 + $0x3f8] sm:$0xff]
    %v223 = vld [vmem:[#allocation9] sm:$0xf]
    %v224 = vld [vmem:[#allocation2] sm:$0xff]
    %v225 = vld [vmem:[#allocation3] sm:$0xff]
    %v226 = vld [vmem:[#allocation4] sm:$0xff]
    %v228 = vlaneseq
    %v229 = vshrl.u32 %v228, 7
    %v230 = vsub.s32 0, %v229
    %v231 = vrot.slane %v223, %v230
    %v232 = vlaneseq
    %v233 = vshrl.u32 %v232, 7
    %v234 = vsub.s32 1, %v233
    %v235 = vrot.slane %v223, %v234
    %v236 = vlaneseq
    %v237 = vshrl.u32 %v236, 7
    %v238 = vsub.s32 2, %v237
    %v239 = vrot.slane %v223, %v238
    %v240 = vlaneseq
    %v241 = vshrl.u32 %v240, 7
    %v242 = vsub.s32 3, %v241
    %v243 = vrot.slane %v223, %v242
    %248 = vmatprep.subr.mxu0 %v156
    %249 = vmatpush1.msra.mxu0 %v155
    %250 = vmatprep.subr.mxu0 %v152
    %251 = vmatpush1.msra.mxu0 %v151
    %252 = vmatprep.subr.mxu0 %v148
    %253 = vmatpush1.msra.mxu0 %v147
    %254 = vmatprep.subr.mxu0 %v144
    %255 = vmatpush1.msra.mxu0 %v143
    %256 = vmatprep.subr.mxu0 %v140
    %257 = vmatpush1.msra.mxu0 %v139
    %258 = vmatprep.subr.mxu0 %v136
    %259 = vmatpush1.msra.mxu0 %v135
    %260 = vmatprep.subr.mxu0 %v132
    %261 = vmatpush1.msra.mxu0 %v131
    %262 = vmatprep.subr.mxu0 %v128
    %263 = vmatpush1.msra.mxu0 %v127
    %264 = vmatprep.subr.mxu0 %v124
    %265 = vmatpush1.msra.mxu0 %v123
    %266 = vmatprep.subr.mxu0 %v120
    %267 = vmatpush1.msra.mxu0 %v119
    %268 = vmatprep.subr.mxu0 %v116
    %269 = vmatpush1.msra.mxu0 %v115
    %270 = vmatprep.subr.mxu0 %v112
    %271 = vmatpush1.msra.mxu0 %v111
    %272 = vmatprep.subr.mxu0 %v108
    %273 = vmatpush1.msra.mxu0 %v107
    %274 = vmatprep.subr.mxu0 %v104
    %275 = vmatpush1.msra.mxu0 %v103
    %276 = vmatprep.subr.mxu0 %v100
    %277 = vmatpush1.msra.mxu0 %v99
    %278 = vmatprep.subr.mxu0 %v96
    %279 = vmatpush1.msra.mxu0 %v95
    %280 = vmatprep.subr.mxu0 %v220
    %281 = vmatpush2.msra.mxu0 %v219
    %282 = vmatprep.subr.mxu0 %v216
    %283 = vmatpush2.msra.mxu0 %v215
    %284 = vmatprep.subr.mxu0 %v212
    %285 = vmatpush2.msra.mxu0 %v211
    %286 = vmatprep.subr.mxu0 %v208
    %287 = vmatpush2.msra.mxu0 %v207
    %288 = vmatprep.subr.mxu0 %v204
    %289 = vmatpush2.msra.mxu0 %v203
    %290 = vmatprep.subr.mxu0 %v200
    %291 = vmatpush2.msra.mxu0 %v199
    %292 = vmatprep.subr.mxu0 %v196
    %293 = vmatpush2.msra.mxu0 %v195
    %294 = vmatprep.subr.mxu0 %v192
    %295 = vmatpush2.msra.mxu0 %v191
    %296 = vmatprep.subr.mxu0 %v188
    %297 = vmatpush2.msra.mxu0 %v187
    %298 = vmatprep.subr.mxu0 %v184
    %299 = vmatpush2.msra.mxu0 %v183
    %300 = vmatprep.subr.mxu0 %v180
    %301 = vmatpush2.msra.mxu0 %v179
    %302 = vmatprep.subr.mxu0 %v176
    %303 = vmatpush2.msra.mxu0 %v175
    %304 = vmatprep.subr.mxu0 %v172
    %305 = vmatpush2.msra.mxu0 %v171
    %306 = vmatprep.subr.mxu0 %v168
    %307 = vmatpush2.msra.mxu0 %v167
    %308 = vmatprep.subr.mxu0 %v164
    %309 = vmatpush2.msra.mxu0 %v163
    %310 = vmatprep.subr.mxu0 %v160
    %311 = vmatpush2.msra.mxu0 %v159
    %312 = vmatprep.mubr.f32.mxu0 %v224
    %313 = vmatmul.mubr.f32.gmra.mxu0 %v226
    %v314 = vpop.f32.mrf.mxu0
    %v315 = vadd.f32 %v231, %v314
    %v316 = vpop.f32.mrf.mxu0
    %v317 = vadd.f32 %v235, %v316
    %318 = vdwg.mxu0
    %319 = vmatprep.subr.mxu0 %v158
    %320 = vmatpush1.msra.mxu0 %v157
    %321 = vmatprep.subr.mxu0 %v154
    %322 = vmatpush1.msra.mxu0 %v153
    %323 = vmatprep.subr.mxu0 %v150
    %324 = vmatpush1.msra.mxu0 %v149
    %325 = vmatprep.subr.mxu0 %v146
    %326 = vmatpush1.msra.mxu0 %v145
    %327 = vmatprep.subr.mxu0 %v142
    %328 = vmatpush1.msra.mxu0 %v141
    %329 = vmatprep.subr.mxu0 %v138
    %330 = vmatpush1.msra.mxu0 %v137
    %331 = vmatprep.subr.mxu0 %v134
    %332 = vmatpush1.msra.mxu0 %v133
    %333 = vmatprep.subr.mxu0 %v130
    %334 = vmatpush1.msra.mxu0 %v129
    %335 = vmatprep.subr.mxu0 %v126
    %336 = vmatpush1.msra.mxu0 %v125
    %337 = vmatprep.subr.mxu0 %v122
    %338 = vmatpush1.msra.mxu0 %v121
    %339 = vmatprep.subr.mxu0 %v118
    %340 = vmatpush1.msra.mxu0 %v117
    %341 = vmatprep.subr.mxu0 %v114
    %342 = vmatpush1.msra.mxu0 %v113
    %343 = vmatprep.subr.mxu0 %v110
    %344 = vmatpush1.msra.mxu0 %v109
    %345 = vmatprep.subr.mxu0 %v106
    %346 = vmatpush1.msra.mxu0 %v105
    %347 = vmatprep.subr.mxu0 %v102
    %348 = vmatpush1.msra.mxu0 %v101
    %349 = vmatprep.subr.mxu0 %v98
    %350 = vmatpush1.msra.mxu0 %v97
    %351 = vmatprep.subr.mxu0 %v222
    %352 = vmatpush2.msra.mxu0 %v221
    %353 = vmatprep.subr.mxu0 %v218
    %354 = vmatpush2.msra.mxu0 %v217
    %355 = vmatprep.subr.mxu0 %v214
    %356 = vmatpush2.msra.mxu0 %v213
    %357 = vmatprep.subr.mxu0 %v210
    %358 = vmatpush2.msra.mxu0 %v209
    %359 = vmatprep.subr.mxu0 %v206
    %360 = vmatpush2.msra.mxu0 %v205
    %361 = vmatprep.subr.mxu0 %v202
    %362 = vmatpush2.msra.mxu0 %v201
    %363 = vmatprep.subr.mxu0 %v198
    %364 = vmatpush2.msra.mxu0 %v197
    %365 = vmatprep.subr.mxu0 %v194
    %366 = vmatpush2.msra.mxu0 %v193
    %367 = vmatprep.subr.mxu0 %v190
    %368 = vmatpush2.msra.mxu0 %v189
    %369 = vmatprep.subr.mxu0 %v186
    %370 = vmatpush2.msra.mxu0 %v185
    %371 = vmatprep.subr.mxu0 %v182
    %372 = vmatpush2.msra.mxu0 %v181
    %373 = vmatprep.subr.mxu0 %v178
    %374 = vmatpush2.msra.mxu0 %v177
    %375 = vmatprep.subr.mxu0 %v174
    %376 = vmatpush2.msra.mxu0 %v173
    %377 = vmatprep.subr.mxu0 %v170
    %378 = vmatpush2.msra.mxu0 %v169
    %379 = vmatprep.subr.mxu0 %v166
    %380 = vmatpush2.msra.mxu0 %v165
    %381 = vmatprep.subr.mxu0 %v162
    %382 = vmatpush2.msra.mxu0 %v161
    %383 = vmatprep.mubr.f32.mxu0 %v224
    %384 = vmatmul.mubr.f32.gmra.mxu0 %v226
    %v385 = vpop.f32.mrf.mxu0
    %v386 = vadd.f32 %v239, %v385
    %v387 = vpop.f32.mrf.mxu0
    %v388 = vadd.f32 %v243, %v387
    %389 = vdwg.mxu0
    %v390 = vxor.u32 %v315, 2147483648
    %v391 = vmul.f32 %v390, 1.442695
    %v392 = vpow.pop %v391
    %v393 = vadd.f32 %v392, 1.0
    %v394 = vrcp.pop %v393
    %v395 = vmul.f32 1.0, %v394
    %v396 = vxor.u32 %v317, 2147483648
    %v397 = vmul.f32 %v396, 1.442695
    %v398 = vpow.pop %v397
    %v399 = vadd.f32 %v398, 1.0
    %v400 = vrcp.pop %v399
    %v401 = vmul.f32 1.0, %v400
    %v402 = vtanh.pop %v386
    %v403 = vxor.u32 %v388, 2147483648
    %v404 = vmul.f32 %v403, 1.442695
    %v405 = vpow.pop %v404
    %v406 = vadd.f32 %v405, 1.0
    %v407 = vrcp.pop %v406
    %v408 = vmul.f32 1.0, %v407
    %v409 = vmul.f32 %v401, %v225
    %v410 = vmul.f32 %v395, %v402
    %v411 = vadd.f32 %v409, %v410
    %v412 = vtanh.pop %v411
    %v413 = vmul.f32 %v408, %v412
    %s414 = smul.u32 0, 5
    %p415 = scmp.lt.s32.totalorder %s414, 5
    %s416 = scalar_select %p415, 1, 0
    %v417 = vstv %s416
    %vm418 = vcmp.eq.s32.totalorder %v417, 1
    %v419 = vsel %vm418, %v411, %v225
    %v420 = vsel %vm418, %v413, %v224
    %421 = vst [vmem:[#allocation13] sm:$0xff] %v420
    %s422 = scalar_lea.vmem [#allocation4], 8
    %v423 = vld [vmem:[%s422] sm:$0xff]
    %424 = vmatprep.subr.mxu0 %v156
    %425 = vmatpush1.msra.mxu0 %v155
    %426 = vmatprep.subr.mxu0 %v152
    %427 = vmatpush1.msra.mxu0 %v151
    %428 = vmatprep.subr.mxu0 %v148
    %429 = vmatpush1.msra.mxu0 %v147
    %430 = vmatprep.subr.mxu0 %v144
    %431 = vmatpush1.msra.mxu0 %v143
    %432 = vmatprep.subr.mxu0 %v140
    %433 = vmatpush1.msra.mxu0 %v139
    %434 = vmatprep.subr.mxu0 %v136
    %435 = vmatpush1.msra.mxu0 %v135
    %436 = vmatprep.subr.mxu0 %v132
    %437 = vmatpush1.msra.mxu0 %v131
    %438 = vmatprep.subr.mxu0 %v128
    %439 = vmatpush1.msra.mxu0 %v127
    %440 = vmatprep.subr.mxu0 %v124
    %441 = vmatpush1.msra.mxu0 %v123
    %442 = vmatprep.subr.mxu0 %v120
    %443 = vmatpush1.msra.mxu0 %v119
    %444 = vmatprep.subr.mxu0 %v116
    %445 = vmatpush1.msra.mxu0 %v115
    %446 = vmatprep.subr.mxu0 %v112
    %447 = vmatpush1.msra.mxu0 %v111
    %448 = vmatprep.subr.mxu0 %v108
    %449 = vmatpush1.msra.mxu0 %v107
    %450 = vmatprep.subr.mxu0 %v104
    %451 = vmatpush1.msra.mxu0 %v103
    %452 = vmatprep.subr.mxu0 %v100
    %453 = vmatpush1.msra.mxu0 %v99
    %454 = vmatprep.subr.mxu0 %v96
    %455 = vmatpush1.msra.mxu0 %v95
    %456 = vmatprep.subr.mxu0 %v220
    %457 = vmatpush2.msra.mxu0 %v219
    %458 = vmatprep.subr.mxu0 %v216
    %459 = vmatpush2.msra.mxu0 %v215
    %460 = vmatprep.subr.mxu0 %v212
    %461 = vmatpush2.msra.mxu0 %v211
    %462 = vmatprep.subr.mxu0 %v208
    %463 = vmatpush2.msra.mxu0 %v207
    %464 = vmatprep.subr.mxu0 %v204
    %465 = vmatpush2.msra.mxu0 %v203
    %466 = vmatprep.subr.mxu0 %v200
    %467 = vmatpush2.msra.mxu0 %v199
    %468 = vmatprep.subr.mxu0 %v196
    %469 = vmatpush2.msra.mxu0 %v195
    %470 = vmatprep.subr.mxu0 %v192
    %471 = vmatpush2.msra.mxu0 %v191
    %472 = vmatprep.subr.mxu0 %v188
    %473 = vmatpush2.msra.mxu0 %v187
    %474 = vmatprep.subr.mxu0 %v184
    %475 = vmatpush2.msra.mxu0 %v183
    %476 = vmatprep.subr.mxu0 %v180
    %477 = vmatpush2.msra.mxu0 %v179
    %478 = vmatprep.subr.mxu0 %v176
    %479 = vmatpush2.msra.mxu0 %v175
    %480 = vmatprep.subr.mxu0 %v172
    %481 = vmatpush2.msra.mxu0 %v171
    %482 = vmatprep.subr.mxu0 %v168
    %483 = vmatpush2.msra.mxu0 %v167
    %484 = vmatprep.subr.mxu0 %v164
    %485 = vmatpush2.msra.mxu0 %v163
    %486 = vmatprep.subr.mxu0 %v160
    %487 = vmatpush2.msra.mxu0 %v159
    %488 = vmatprep.mubr.f32.mxu0 %v420
    %489 = vmatmul.mubr.f32.gmra.mxu0 %v423
    %v490 = vpop.f32.mrf.mxu0
    %v491 = vadd.f32 %v231, %v490
    %v492 = vpop.f32.mrf.mxu0
    %v493 = vadd.f32 %v235, %v492
    %494 = vdwg.mxu0
    %495 = vmatprep.subr.mxu0 %v158
    %496 = vmatpush1.msra.mxu0 %v157
    %497 = vmatprep.subr.mxu0 %v154
    %498 = vmatpush1.msra.mxu0 %v153
    %499 = vmatprep.subr.mxu0 %v150
    %500 = vmatpush1.msra.mxu0 %v149
    %501 = vmatprep.subr.mxu0 %v146
    %502 = vmatpush1.msra.mxu0 %v145
    %503 = vmatprep.subr.mxu0 %v142
    %504 = vmatpush1.msra.mxu0 %v141
    %505 = vmatprep.subr.mxu0 %v138
    %506 = vmatpush1.msra.mxu0 %v137
    %507 = vmatprep.subr.mxu0 %v134
    %508 = vmatpush1.msra.mxu0 %v133
    %509 = vmatprep.subr.mxu0 %v130
    %510 = vmatpush1.msra.mxu0 %v129
    %511 = vmatprep.subr.mxu0 %v126
    %512 = vmatpush1.msra.mxu0 %v125
    %513 = vmatprep.subr.mxu0 %v122
    %514 = vmatpush1.msra.mxu0 %v121
    %515 = vmatprep.subr.mxu0 %v118
    %516 = vmatpush1.msra.mxu0 %v117
    %517 = vmatprep.subr.mxu0 %v114
    %518 = vmatpush1.msra.mxu0 %v113
    %519 = vmatprep.subr.mxu0 %v110
    %520 = vmatpush1.msra.mxu0 %v109
    %521 = vmatprep.subr.mxu0 %v106
    %522 = vmatpush1.msra.mxu0 %v105
    %523 = vmatprep.subr.mxu0 %v102
    %524 = vmatpush1.msra.mxu0 %v101
    %525 = vmatprep.subr.mxu0 %v98
    %526 = vmatpush1.msra.mxu0 %v97
    %527 = vmatprep.subr.mxu0 %v222
    %528 = vmatpush2.msra.mxu0 %v221
    %529 = vmatprep.subr.mxu0 %v218
    %530 = vmatpush2.msra.mxu0 %v217
    %531 = vmatprep.subr.mxu0 %v214
    %532 = vmatpush2.msra.mxu0 %v213
    %533 = vmatprep.subr.mxu0 %v210
    %534 = vmatpush2.msra.mxu0 %v209
    %535 = vmatprep.subr.mxu0 %v206
    %536 = vmatpush2.msra.mxu0 %v205
    %537 = vmatprep.subr.mxu0 %v202
    %538 = vmatpush2.msra.mxu0 %v201
    %539 = vmatprep.subr.mxu0 %v198
    %540 = vmatpush2.msra.mxu0 %v197
    %541 = vmatprep.subr.mxu0 %v194
    %542 = vmatpush2.msra.mxu0 %v193
    %543 = vmatprep.subr.mxu0 %v190
    %544 = vmatpush2.msra.mxu0 %v189
    %545 = vmatprep.subr.mxu0 %v186
    %546 = vmatpush2.msra.mxu0 %v185
    %547 = vmatprep.subr.mxu0 %v182
    %548 = vmatpush2.msra.mxu0 %v181
    %549 = vmatprep.subr.mxu0 %v178
    %550 = vmatpush2.msra.mxu0 %v177
    %551 = vmatprep.subr.mxu0 %v174
    %552 = vmatpush2.msra.mxu0 %v173
    %553 = vmatprep.subr.mxu0 %v170
    %554 = vmatpush2.msra.mxu0 %v169
    %555 = vmatprep.subr.mxu0 %v166
    %556 = vmatpush2.msra.mxu0 %v165
    %557 = vmatprep.subr.mxu0 %v162
    %558 = vmatpush2.msra.mxu0 %v161
    %559 = vmatprep.mubr.f32.mxu0 %v420
    %560 = vmatmul.mubr.f32.gmra.mxu0 %v423
    %v561 = vpop.f32.mrf.mxu0
    %v562 = vadd.f32 %v239, %v561
    %v563 = vpop.f32.mrf.mxu0
    %v564 = vadd.f32 %v243, %v563
    %565 = vdwg.mxu0
    %v566 = vxor.u32 %v491, 2147483648
    %v567 = vmul.f32 %v566, 1.442695
    %v568 = vpow.pop %v567
    %v569 = vadd.f32 %v568, 1.0
    %v570 = vrcp.pop %v569
    %v571 = vmul.f32 1.0, %v570
    %v572 = vxor.u32 %v493, 2147483648
    %v573 = vmul.f32 %v572, 1.442695
    %v574 = vpow.pop %v573
    %v575 = vadd.f32 %v574, 1.0
    %v576 = vrcp.pop %v575
    %v577 = vmul.f32 1.0, %v576
    %v578 = vtanh.pop %v562
    %v579 = vxor.u32 %v564, 2147483648
    %v580 = vmul.f32 %v579, 1.442695
    %v581 = vpow.pop %v580
    %v582 = vadd.f32 %v581, 1.0
    %v583 = vrcp.pop %v582
    %v584 = vmul.f32 1.0, %v583
    %v585 = vmul.f32 %v577, %v419
    %v586 = vmul.f32 %v571, %v578
    %v587 = vadd.f32 %v585, %v586
    %v588 = vtanh.pop %v587
    %v589 = vmul.f32 %v584, %v588
    %s590 = sadd.s32 %s414, 1
    %p591 = scmp.lt.s32.totalorder %s590, 5
    %s592 = scalar_select %p591, 1, 0
    %v593 = vstv %s592
    %vm594 = vcmp.eq.s32.totalorder %v593, 1
    %v595 = vsel %vm594, %v587, %v419
    %v596 = vsel %vm594, %v589, %v420
    %s597 = scalar_lea.vmem [#allocation13], 8
    %598 = vst [vmem:[%s597] sm:$0xff] %v596
    %s599 = scalar_lea.vmem [#allocation4], 16
    %v600 = vld [vmem:[%s599] sm:$0xff]
    %601 = vmatprep.subr.mxu0 %v156
    %602 = vmatpush1.msra.mxu0 %v155
    %603 = vmatprep.subr.mxu0 %v152
    %604 = vmatpush1.msra.mxu0 %v151
    %605 = vmatprep.subr.mxu0 %v148
    %606 = vmatpush1.msra.mxu0 %v147
    %607 = vmatprep.subr.mxu0 %v144
    %608 = vmatpush1.msra.mxu0 %v143
    %609 = vmatprep.subr.mxu0 %v140
    %610 = vmatpush1.msra.mxu0 %v139
    %611 = vmatprep.subr.mxu0 %v136
    %612 = vmatpush1.msra.mxu0 %v135
    %613 = vmatprep.subr.mxu0 %v132
    %614 = vmatpush1.msra.mxu0 %v131
    %615 = vmatprep.subr.mxu0 %v128
    %616 = vmatpush1.msra.mxu0 %v127
    %617 = vmatprep.subr.mxu0 %v124
    %618 = vmatpush1.msra.mxu0 %v123
    %619 = vmatprep.subr.mxu0 %v120
    %620 = vmatpush1.msra.mxu0 %v119
    %621 = vmatprep.subr.mxu0 %v116
    %622 = vmatpush1.msra.mxu0 %v115
    %623 = vmatprep.subr.mxu0 %v112
    %624 = vmatpush1.msra.mxu0 %v111
    %625 = vmatprep.subr.mxu0 %v108
    %626 = vmatpush1.msra.mxu0 %v107
    %627 = vmatprep.subr.mxu0 %v104
    %628 = vmatpush1.msra.mxu0 %v103
    %629 = vmatprep.subr.mxu0 %v100
    %630 = vmatpush1.msra.mxu0 %v99
    %631 = vmatprep.subr.mxu0 %v96
    %632 = vmatpush1.msra.mxu0 %v95
    %633 = vmatprep.subr.mxu0 %v220
    %634 = vmatpush2.msra.mxu0 %v219
    %635 = vmatprep.subr.mxu0 %v216
    %636 = vmatpush2.msra.mxu0 %v215
    %637 = vmatprep.subr.mxu0 %v212
    %638 = vmatpush2.msra.mxu0 %v211
    %639 = vmatprep.subr.mxu0 %v208
    %640 = vmatpush2.msra.mxu0 %v207
    %641 = vmatprep.subr.mxu0 %v204
    %642 = vmatpush2.msra.mxu0 %v203
    %643 = vmatprep.subr.mxu0 %v200
    %644 = vmatpush2.msra.mxu0 %v199
    %645 = vmatprep.subr.mxu0 %v196
    %646 = vmatpush2.msra.mxu0 %v195
    %647 = vmatprep.subr.mxu0 %v192
    %648 = vmatpush2.msra.mxu0 %v191
    %649 = vmatprep.subr.mxu0 %v188
    %650 = vmatpush2.msra.mxu0 %v187
    %651 = vmatprep.subr.mxu0 %v184
    %652 = vmatpush2.msra.mxu0 %v183
    %653 = vmatprep.subr.mxu0 %v180
    %654 = vmatpush2.msra.mxu0 %v179
    %655 = vmatprep.subr.mxu0 %v176
    %656 = vmatpush2.msra.mxu0 %v175
    %657 = vmatprep.subr.mxu0 %v172
    %658 = vmatpush2.msra.mxu0 %v171
    %659 = vmatprep.subr.mxu0 %v168
    %660 = vmatpush2.msra.mxu0 %v167
    %661 = vmatprep.subr.mxu0 %v164
    %662 = vmatpush2.msra.mxu0 %v163
    %663 = vmatprep.subr.mxu0 %v160
    %664 = vmatpush2.msra.mxu0 %v159
    %665 = vmatprep.mubr.f32.mxu0 %v596
    %666 = vmatmul.mubr.f32.gmra.mxu0 %v600
    %v667 = vpop.f32.mrf.mxu0
    %v668 = vadd.f32 %v231, %v667
    %v669 = vpop.f32.mrf.mxu0
    %v670 = vadd.f32 %v235, %v669
    %671 = vdwg.mxu0
    %672 = vmatprep.subr.mxu0 %v158
    %673 = vmatpush1.msra.mxu0 %v157
    %674 = vmatprep.subr.mxu0 %v154
    %675 = vmatpush1.msra.mxu0 %v153
    %676 = vmatprep.subr.mxu0 %v150
    %677 = vmatpush1.msra.mxu0 %v149
    %678 = vmatprep.subr.mxu0 %v146
    %679 = vmatpush1.msra.mxu0 %v145
    %680 = vmatprep.subr.mxu0 %v142
    %681 = vmatpush1.msra.mxu0 %v141
    %682 = vmatprep.subr.mxu0 %v138
    %683 = vmatpush1.msra.mxu0 %v137
    %684 = vmatprep.subr.mxu0 %v134
    %685 = vmatpush1.msra.mxu0 %v133
    %686 = vmatprep.subr.mxu0 %v130
    %687 = vmatpush1.msra.mxu0 %v129
    %688 = vmatprep.subr.mxu0 %v126
    %689 = vmatpush1.msra.mxu0 %v125
    %690 = vmatprep.subr.mxu0 %v122
    %691 = vmatpush1.msra.mxu0 %v121
    %692 = vmatprep.subr.mxu0 %v118
    %693 = vmatpush1.msra.mxu0 %v117
    %694 = vmatprep.subr.mxu0 %v114
    %695 = vmatpush1.msra.mxu0 %v113
    %696 = vmatprep.subr.mxu0 %v110
    %697 = vmatpush1.msra.mxu0 %v109
    %698 = vmatprep.subr.mxu0 %v106
    %699 = vmatpush1.msra.mxu0 %v105
    %700 = vmatprep.subr.mxu0 %v102
    %701 = vmatpush1.msra.mxu0 %v101
    %702 = vmatprep.subr.mxu0 %v98
    %703 = vmatpush1.msra.mxu0 %v97
    %704 = vmatprep.subr.mxu0 %v222
    %705 = vmatpush2.msra.mxu0 %v221
    %706 = vmatprep.subr.mxu0 %v218
    %707 = vmatpush2.msra.mxu0 %v217
    %708 = vmatprep.subr.mxu0 %v214
    %709 = vmatpush2.msra.mxu0 %v213
    %710 = vmatprep.subr.mxu0 %v210
    %711 = vmatpush2.msra.mxu0 %v209
    %712 = vmatprep.subr.mxu0 %v206
    %713 = vmatpush2.msra.mxu0 %v205
    %714 = vmatprep.subr.mxu0 %v202
    %715 = vmatpush2.msra.mxu0 %v201
    %716 = vmatprep.subr.mxu0 %v198
    %717 = vmatpush2.msra.mxu0 %v197
    %718 = vmatprep.subr.mxu0 %v194
    %719 = vmatpush2.msra.mxu0 %v193
    %720 = vmatprep.subr.mxu0 %v190
    %721 = vmatpush2.msra.mxu0 %v189
    %722 = vmatprep.subr.mxu0 %v186
    %723 = vmatpush2.msra.mxu0 %v185
    %724 = vmatprep.subr.mxu0 %v182
    %725 = vmatpush2.msra.mxu0 %v181
    %726 = vmatprep.subr.mxu0 %v178
    %727 = vmatpush2.msra.mxu0 %v177
    %728 = vmatprep.subr.mxu0 %v174
    %729 = vmatpush2.msra.mxu0 %v173
    %730 = vmatprep.subr.mxu0 %v170
    %731 = vmatpush2.msra.mxu0 %v169
    %732 = vmatprep.subr.mxu0 %v166
    %733 = vmatpush2.msra.mxu0 %v165
    %734 = vmatprep.subr.mxu0 %v162
    %735 = vmatpush2.msra.mxu0 %v161
    %736 = vmatprep.mubr.f32.mxu0 %v596
    %737 = vmatmul.mubr.f32.gmra.mxu0 %v600
    %v738 = vpop.f32.mrf.mxu0
    %v739 = vadd.f32 %v239, %v738
    %v740 = vpop.f32.mrf.mxu0
    %v741 = vadd.f32 %v243, %v740
    %742 = vdwg.mxu0
    %v743 = vxor.u32 %v668, 2147483648
    %v744 = vmul.f32 %v743, 1.442695
    %v745 = vpow.pop %v744
    %v746 = vadd.f32 %v745, 1.0
    %v747 = vrcp.pop %v746
    %v748 = vmul.f32 1.0, %v747
    %v749 = vxor.u32 %v670, 2147483648
    %v750 = vmul.f32 %v749, 1.442695
    %v751 = vpow.pop %v750
    %v752 = vadd.f32 %v751, 1.0
    %v753 = vrcp.pop %v752
    %v754 = vmul.f32 1.0, %v753
    %v755 = vtanh.pop %v739
    %v756 = vxor.u32 %v741, 2147483648
    %v757 = vmul.f32 %v756, 1.442695
    %v758 = vpow.pop %v757
    %v759 = vadd.f32 %v758, 1.0
    %v760 = vrcp.pop %v759
    %v761 = vmul.f32 1.0, %v760
    %v762 = vmul.f32 %v754, %v595
    %v763 = vmul.f32 %v748, %v755
    %v764 = vadd.f32 %v762, %v763
    %v765 = vtanh.pop %v764
    %v766 = vmul.f32 %v761, %v765
    %s767 = sadd.s32 %s414, 2
    %p768 = scmp.lt.s32.totalorder %s767, 5
    %s769 = scalar_select %p768, 1, 0
    %v770 = vstv %s769
    %vm771 = vcmp.eq.s32.totalorder %v770, 1
    %v772 = vsel %vm771, %v764, %v595
    %v773 = vsel %vm771, %v766, %v596
    %s774 = scalar_lea.vmem [#allocation13], 16
    %775 = vst [vmem:[%s774] sm:$0xff] %v773
    %s776 = scalar_lea.vmem [#allocation4], 24
    %v777 = vld [vmem:[%s776] sm:$0xff]
    %778 = vmatprep.subr.mxu0 %v156
    %779 = vmatpush1.msra.mxu0 %v155
    %780 = vmatprep.subr.mxu0 %v152
    %781 = vmatpush1.msra.mxu0 %v151
    %782 = vmatprep.subr.mxu0 %v148
    %783 = vmatpush1.msra.mxu0 %v147
    %784 = vmatprep.subr.mxu0 %v144
    %785 = vmatpush1.msra.mxu0 %v143
    %786 = vmatprep.subr.mxu0 %v140
    %787 = vmatpush1.msra.mxu0 %v139
    %788 = vmatprep.subr.mxu0 %v136
    %789 = vmatpush1.msra.mxu0 %v135
    %790 = vmatprep.subr.mxu0 %v132
    %791 = vmatpush1.msra.mxu0 %v131
    %792 = vmatprep.subr.mxu0 %v128
    %793 = vmatpush1.msra.mxu0 %v127
    %794 = vmatprep.subr.mxu0 %v124
    %795 = vmatpush1.msra.mxu0 %v123
    %796 = vmatprep.subr.mxu0 %v120
    %797 = vmatpush1.msra.mxu0 %v119
    %798 = vmatprep.subr.mxu0 %v116
    %799 = vmatpush1.msra.mxu0 %v115
    %800 = vmatprep.subr.mxu0 %v112
    %801 = vmatpush1.msra.mxu0 %v111
    %802 = vmatprep.subr.mxu0 %v108
    %803 = vmatpush1.msra.mxu0 %v107
    %804 = vmatprep.subr.mxu0 %v104
    %805 = vmatpush1.msra.mxu0 %v103
    %806 = vmatprep.subr.mxu0 %v100
    %807 = vmatpush1.msra.mxu0 %v99
    %808 = vmatprep.subr.mxu0 %v96
    %809 = vmatpush1.msra.mxu0 %v95
    %810 = vmatprep.subr.mxu0 %v220
    %811 = vmatpush2.msra.mxu0 %v219
    %812 = vmatprep.subr.mxu0 %v216
    %813 = vmatpush2.msra.mxu0 %v215
    %814 = vmatprep.subr.mxu0 %v212
    %815 = vmatpush2.msra.mxu0 %v211
    %816 = vmatprep.subr.mxu0 %v208
    %817 = vmatpush2.msra.mxu0 %v207
    %818 = vmatprep.subr.mxu0 %v204
    %819 = vmatpush2.msra.mxu0 %v203
    %820 = vmatprep.subr.mxu0 %v200
    %821 = vmatpush2.msra.mxu0 %v199
    %822 = vmatprep.subr.mxu0 %v196
    %823 = vmatpush2.msra.mxu0 %v195
    %824 = vmatprep.subr.mxu0 %v192
    %825 = vmatpush2.msra.mxu0 %v191
    %826 = vmatprep.subr.mxu0 %v188
    %827 = vmatpush2.msra.mxu0 %v187
    %828 = vmatprep.subr.mxu0 %v184
    %829 = vmatpush2.msra.mxu0 %v183
    %830 = vmatprep.subr.mxu0 %v180
    %831 = vmatpush2.msra.mxu0 %v179
    %832 = vmatprep.subr.mxu0 %v176
    %833 = vmatpush2.msra.mxu0 %v175
    %834 = vmatprep.subr.mxu0 %v172
    %835 = vmatpush2.msra.mxu0 %v171
    %836 = vmatprep.subr.mxu0 %v168
    %837 = vmatpush2.msra.mxu0 %v167
    %838 = vmatprep.subr.mxu0 %v164
    %839 = vmatpush2.msra.mxu0 %v163
    %840 = vmatprep.subr.mxu0 %v160
    %841 = vmatpush2.msra.mxu0 %v159
    %842 = vmatprep.mubr.f32.mxu0 %v773
    %843 = vmatmul.mubr.f32.gmra.mxu0 %v777
    %v844 = vpop.f32.mrf.mxu0
    %v845 = vadd.f32 %v231, %v844
    %v846 = vpop.f32.mrf.mxu0
    %v847 = vadd.f32 %v235, %v846
    %848 = vdwg.mxu0
    %849 = vmatprep.subr.mxu0 %v158
    %850 = vmatpush1.msra.mxu0 %v157
    %851 = vmatprep.subr.mxu0 %v154
    %852 = vmatpush1.msra.mxu0 %v153
    %853 = vmatprep.subr.mxu0 %v150
    %854 = vmatpush1.msra.mxu0 %v149
    %855 = vmatprep.subr.mxu0 %v146
    %856 = vmatpush1.msra.mxu0 %v145
    %857 = vmatprep.subr.mxu0 %v142
    %858 = vmatpush1.msra.mxu0 %v141
    %859 = vmatprep.subr.mxu0 %v138
    %860 = vmatpush1.msra.mxu0 %v137
    %861 = vmatprep.subr.mxu0 %v134
    %862 = vmatpush1.msra.mxu0 %v133
    %863 = vmatprep.subr.mxu0 %v130
    %864 = vmatpush1.msra.mxu0 %v129
    %865 = vmatprep.subr.mxu0 %v126
    %866 = vmatpush1.msra.mxu0 %v125
    %867 = vmatprep.subr.mxu0 %v122
    %868 = vmatpush1.msra.mxu0 %v121
    %869 = vmatprep.subr.mxu0 %v118
    %870 = vmatpush1.msra.mxu0 %v117
    %871 = vmatprep.subr.mxu0 %v114
    %872 = vmatpush1.msra.mxu0 %v113
    %873 = vmatprep.subr.mxu0 %v110
    %874 = vmatpush1.msra.mxu0 %v109
    %875 = vmatprep.subr.mxu0 %v106
    %876 = vmatpush1.msra.mxu0 %v105
    %877 = vmatprep.subr.mxu0 %v102
    %878 = vmatpush1.msra.mxu0 %v101
    %879 = vmatprep.subr.mxu0 %v98
    %880 = vmatpush1.msra.mxu0 %v97
    %881 = vmatprep.subr.mxu0 %v222
    %882 = vmatpush2.msra.mxu0 %v221
    %883 = vmatprep.subr.mxu0 %v218
    %884 = vmatpush2.msra.mxu0 %v217
    %885 = vmatprep.subr.mxu0 %v214
    %886 = vmatpush2.msra.mxu0 %v213
    %887 = vmatprep.subr.mxu0 %v210
    %888 = vmatpush2.msra.mxu0 %v209
    %889 = vmatprep.subr.mxu0 %v206
    %890 = vmatpush2.msra.mxu0 %v205
    %891 = vmatprep.subr.mxu0 %v202
    %892 = vmatpush2.msra.mxu0 %v201
    %893 = vmatprep.subr.mxu0 %v198
    %894 = vmatpush2.msra.mxu0 %v197
    %895 = vmatprep.subr.mxu0 %v194
    %896 = vmatpush2.msra.mxu0 %v193
    %897 = vmatprep.subr.mxu0 %v190
    %898 = vmatpush2.msra.mxu0 %v189
    %899 = vmatprep.subr.mxu0 %v186
    %900 = vmatpush2.msra.mxu0 %v185
    %901 = vmatprep.subr.mxu0 %v182
    %902 = vmatpush2.msra.mxu0 %v181
    %903 = vmatprep.subr.mxu0 %v178
    %904 = vmatpush2.msra.mxu0 %v177
    %905 = vmatprep.subr.mxu0 %v174
    %906 = vmatpush2.msra.mxu0 %v173
    %907 = vmatprep.subr.mxu0 %v170
    %908 = vmatpush2.msra.mxu0 %v169
    %909 = vmatprep.subr.mxu0 %v166
    %910 = vmatpush2.msra.mxu0 %v165
    %911 = vmatprep.subr.mxu0 %v162
    %912 = vmatpush2.msra.mxu0 %v161
    %913 = vmatprep.mubr.f32.mxu0 %v773
    %914 = vmatmul.mubr.f32.gmra.mxu0 %v777
    %v915 = vpop.f32.mrf.mxu0
    %v916 = vadd.f32 %v239, %v915
    %v917 = vpop.f32.mrf.mxu0
    %v918 = vadd.f32 %v243, %v917
    %919 = vdwg.mxu0
    %v920 = vxor.u32 %v845, 2147483648
    %v921 = vmul.f32 %v920, 1.442695
    %v922 = vpow.pop %v921
    %v923 = vadd.f32 %v922, 1.0
    %v924 = vrcp.pop %v923
    %v925 = vmul.f32 1.0, %v924
    %v926 = vxor.u32 %v847, 2147483648
    %v927 = vmul.f32 %v926, 1.442695
    %v928 = vpow.pop %v927
    %v929 = vadd.f32 %v928, 1.0
    %v930 = vrcp.pop %v929
    %v931 = vmul.f32 1.0, %v930
    %v932 = vtanh.pop %v916
    %v933 = vxor.u32 %v918, 2147483648
    %v934 = vmul.f32 %v933, 1.442695
    %v935 = vpow.pop %v934
    %v936 = vadd.f32 %v935, 1.0
    %v937 = vrcp.pop %v936
    %v938 = vmul.f32 1.0, %v937
    %v939 = vmul.f32 %v931, %v772
    %v940 = vmul.f32 %v925, %v932
    %v941 = vadd.f32 %v939, %v940
    %v942 = vtanh.pop %v941
    %v943 = vmul.f32 %v938, %v942
    %s944 = sadd.s32 %s414, 3
    %p945 = scmp.lt.s32.totalorder %s944, 5
    %s946 = scalar_select %p945, 1, 0
    %v947 = vstv %s946
    %vm948 = vcmp.eq.s32.totalorder %v947, 1
    %v949 = vsel %vm948, %v941, %v772
    %v950 = vsel %vm948, %v943, %v773
    %s951 = scalar_lea.vmem [#allocation13], 24
    %952 = vst [vmem:[%s951] sm:$0xff] %v950
    %s953 = scalar_lea.vmem [#allocation4], 32
    %v954 = vld [vmem:[%s953] sm:$0xff]
    %955 = vmatprep.subr.mxu0 %v156
    %956 = vmatpush1.msra.mxu0 %v155
    %957 = vmatprep.subr.mxu0 %v152
    %958 = vmatpush1.msra.mxu0 %v151
    %959 = vmatprep.subr.mxu0 %v148
    %960 = vmatpush1.msra.mxu0 %v147
    %961 = vmatprep.subr.mxu0 %v144
    %962 = vmatpush1.msra.mxu0 %v143
    %963 = vmatprep.subr.mxu0 %v140
    %964 = vmatpush1.msra.mxu0 %v139
    %965 = vmatprep.subr.mxu0 %v136
    %966 = vmatpush1.msra.mxu0 %v135
    %967 = vmatprep.subr.mxu0 %v132
    %968 = vmatpush1.msra.mxu0 %v131
    %969 = vmatprep.subr.mxu0 %v128
    %970 = vmatpush1.msra.mxu0 %v127
    %971 = vmatprep.subr.mxu0 %v124
    %972 = vmatpush1.msra.mxu0 %v123
    %973 = vmatprep.subr.mxu0 %v120
    %974 = vmatpush1.msra.mxu0 %v119
    %975 = vmatprep.subr.mxu0 %v116
    %976 = vmatpush1.msra.mxu0 %v115
    %977 = vmatprep.subr.mxu0 %v112
    %978 = vmatpush1.msra.mxu0 %v111
    %979 = vmatprep.subr.mxu0 %v108
    %980 = vmatpush1.msra.mxu0 %v107
    %981 = vmatprep.subr.mxu0 %v104
    %982 = vmatpush1.msra.mxu0 %v103
    %983 = vmatprep.subr.mxu0 %v100
    %984 = vmatpush1.msra.mxu0 %v99
    %985 = vmatprep.subr.mxu0 %v96
    %986 = vmatpush1.msra.mxu0 %v95
    %987 = vmatprep.subr.mxu0 %v220
    %988 = vmatpush2.msra.mxu0 %v219
    %989 = vmatprep.subr.mxu0 %v216
    %990 = vmatpush2.msra.mxu0 %v215
    %991 = vmatprep.subr.mxu0 %v212
    %992 = vmatpush2.msra.mxu0 %v211
    %993 = vmatprep.subr.mxu0 %v208
    %994 = vmatpush2.msra.mxu0 %v207
    %995 = vmatprep.subr.mxu0 %v204
    %996 = vmatpush2.msra.mxu0 %v203
    %997 = vmatprep.subr.mxu0 %v200
    %998 = vmatpush2.msra.mxu0 %v199
    %999 = vmatprep.subr.mxu0 %v196
    %1000 = vmatpush2.msra.mxu0 %v195
    %1001 = vmatprep.subr.mxu0 %v192
    %1002 = vmatpush2.msra.mxu0 %v191
    %1003 = vmatprep.subr.mxu0 %v188
    %1004 = vmatpush2.msra.mxu0 %v187
    %1005 = vmatprep.subr.mxu0 %v184
    %1006 = vmatpush2.msra.mxu0 %v183
    %1007 = vmatprep.subr.mxu0 %v180
    %1008 = vmatpush2.msra.mxu0 %v179
    %1009 = vmatprep.subr.mxu0 %v176
    %1010 = vmatpush2.msra.mxu0 %v175
    %1011 = vmatprep.subr.mxu0 %v172
    %1012 = vmatpush2.msra.mxu0 %v171
    %1013 = vmatprep.subr.mxu0 %v168
    %1014 = vmatpush2.msra.mxu0 %v167
    %1015 = vmatprep.subr.mxu0 %v164
    %1016 = vmatpush2.msra.mxu0 %v163
    %1017 = vmatprep.subr.mxu0 %v160
    %1018 = vmatpush2.msra.mxu0 %v159
    %1019 = vmatprep.mubr.f32.mxu0 %v950
    %1020 = vmatmul.mubr.f32.gmra.mxu0 %v954
    %v1021 = vpop.f32.mrf.mxu0
    %v1022 = vadd.f32 %v231, %v1021
    %v1023 = vpop.f32.mrf.mxu0
    %v1024 = vadd.f32 %v235, %v1023
    %1025 = vdwg.mxu0
    %1026 = vmatprep.subr.mxu0 %v158
    %1027 = vmatpush1.msra.mxu0 %v157
    %1028 = vmatprep.subr.mxu0 %v154
    %1029 = vmatpush1.msra.mxu0 %v153
    %1030 = vmatprep.subr.mxu0 %v150
    %1031 = vmatpush1.msra.mxu0 %v149
    %1032 = vmatprep.subr.mxu0 %v146
    %1033 = vmatpush1.msra.mxu0 %v145
    %1034 = vmatprep.subr.mxu0 %v142
    %1035 = vmatpush1.msra.mxu0 %v141
    %1036 = vmatprep.subr.mxu0 %v138
    %1037 = vmatpush1.msra.mxu0 %v137
    %1038 = vmatprep.subr.mxu0 %v134
    %1039 = vmatpush1.msra.mxu0 %v133
    %1040 = vmatprep.subr.mxu0 %v130
    %1041 = vmatpush1.msra.mxu0 %v129
    %1042 = vmatprep.subr.mxu0 %v126
    %1043 = vmatpush1.msra.mxu0 %v125
    %1044 = vmatprep.subr.mxu0 %v122
    %1045 = vmatpush1.msra.mxu0 %v121
    %1046 = vmatprep.subr.mxu0 %v118
    %1047 = vmatpush1.msra.mxu0 %v117
    %1048 = vmatprep.subr.mxu0 %v114
    %1049 = vmatpush1.msra.mxu0 %v113
    %1050 = vmatprep.subr.mxu0 %v110
    %1051 = vmatpush1.msra.mxu0 %v109
    %1052 = vmatprep.subr.mxu0 %v106
    %1053 = vmatpush1.msra.mxu0 %v105
    %1054 = vmatprep.subr.mxu0 %v102
    %1055 = vmatpush1.msra.mxu0 %v101
    %1056 = vmatprep.subr.mxu0 %v98
    %1057 = vmatpush1.msra.mxu0 %v97
    %1058 = vmatprep.subr.mxu0 %v222
    %1059 = vmatpush2.msra.mxu0 %v221
    %1060 = vmatprep.subr.mxu0 %v218
    %1061 = vmatpush2.msra.mxu0 %v217
    %1062 = vmatprep.subr.mxu0 %v214
    %1063 = vmatpush2.msra.mxu0 %v213
    %1064 = vmatprep.subr.mxu0 %v210
    %1065 = vmatpush2.msra.mxu0 %v209
    %1066 = vmatprep.subr.mxu0 %v206
    %1067 = vmatpush2.msra.mxu0 %v205
    %1068 = vmatprep.subr.mxu0 %v202
    %1069 = vmatpush2.msra.mxu0 %v201
    %1070 = vmatprep.subr.mxu0 %v198
    %1071 = vmatpush2.msra.mxu0 %v197
    %1072 = vmatprep.subr.mxu0 %v194
    %1073 = vmatpush2.msra.mxu0 %v193
    %1074 = vmatprep.subr.mxu0 %v190
    %1075 = vmatpush2.msra.mxu0 %v189
    %1076 = vmatprep.subr.mxu0 %v186
    %1077 = vmatpush2.msra.mxu0 %v185
    %1078 = vmatprep.subr.mxu0 %v182
    %1079 = vmatpush2.msra.mxu0 %v181
    %1080 = vmatprep.subr.mxu0 %v178
    %1081 = vmatpush2.msra.mxu0 %v177
    %1082 = vmatprep.subr.mxu0 %v174
    %1083 = vmatpush2.msra.mxu0 %v173
    %1084 = vmatprep.subr.mxu0 %v170
    %1085 = vmatpush2.msra.mxu0 %v169
    %1086 = vmatprep.subr.mxu0 %v166
    %1087 = vmatpush2.msra.mxu0 %v165
    %1088 = vmatprep.subr.mxu0 %v162
    %1089 = vmatpush2.msra.mxu0 %v161
    %1090 = vmatprep.mubr.f32.mxu0 %v950
    %1091 = vmatmul.mubr.f32.gmra.mxu0 %v954
    %v1092 = vpop.f32.mrf.mxu0
    %v1093 = vadd.f32 %v239, %v1092
    %v1094 = vpop.f32.mrf.mxu0
    %v1095 = vadd.f32 %v243, %v1094
    %1096 = vdwg.mxu0
    %v1097 = vxor.u32 %v1022, 2147483648
    %v1098 = vmul.f32 %v1097, 1.442695
    %v1099 = vpow.pop %v1098
    %v1100 = vadd.f32 %v1099, 1.0
    %v1101 = vrcp.pop %v1100
    %v1102 = vmul.f32 1.0, %v1101
    %v1103 = vxor.u32 %v1024, 2147483648
    %v1104 = vmul.f32 %v1103, 1.442695
    %v1105 = vpow.pop %v1104
    %v1106 = vadd.f32 %v1105, 1.0
    %v1107 = vrcp.pop %v1106
    %v1108 = vmul.f32 1.0, %v1107
    %v1109 = vtanh.pop %v1093
    %v1110 = vxor.u32 %v1095, 2147483648
    %v1111 = vmul.f32 %v1110, 1.442695
    %v1112 = vpow.pop %v1111
    %v1113 = vadd.f32 %v1112, 1.0
    %v1114 = vrcp.pop %v1113
    %v1115 = vmul.f32 1.0, %v1114
    %v1116 = vmul.f32 %v1108, %v949
    %v1117 = vmul.f32 %v1102, %v1109
    %v1118 = vadd.f32 %v1116, %v1117
    %v1119 = vtanh.pop %v1118
    %v1120 = vmul.f32 %v1115, %v1119
    %s1121 = sadd.s32 %s414, 4
    %p1122 = scmp.lt.s32.totalorder %s1121, 5
    %s1123 = scalar_select %p1122, 1, 0
    %v1124 = vstv %s1123
    %vm1125 = vcmp.eq.s32.totalorder %v1124, 1
    %v1126 = vsel %vm1125, %v1118, %v949
    %v1127 = vsel %vm1125, %v1120, %v950
    %s1128 = scalar_lea.vmem [#allocation13], 32
    %1129 = vst [vmem:[%s1128] sm:$0xff] %v1127
    %1130 = vst [vmem:[#allocation2] sm:$0xff] %v1127
    %1131 = vst [vmem:[#allocation3] sm:$0xff] %v1126
    // Predicated region
    $region46: #{tpu_custom_call.1} parent=1 // pred_check
      %p1132 = pneg %p87
    $region47: #{tpu_custom_call.1} parent=1 // pred_check_branch
      %1134 = sbr.rel (%p1132) target = $region49
    $region48: #{tpu_custom_call.1} parent=1 // pred_region
      %1135 = vst [vmem:[#allocation14] sm:$0xff] %v1127
      %1136 = vst [vmem:[#allocation16] sm:$0xff] %v1126
    $region49: #{tpu_custom_call.1} parent=1 // pred_fallthru
      _
    // Predicated region
    $region50: #{tpu_custom_call.1} parent=1 // pred_check
      _
    $region51: #{tpu_custom_call.1} parent=1 // pred_check_branch
      %1138 = sbr.rel (0) target = $region53
    $region52: #{tpu_custom_call.1} parent=1 // pred_region
      %s1140 = ssub.s32 640, 640
      %1141 = vsyncadd [#allocation6], %s1140
      %s1142 = sshll.u32 [#allocation13], 4
      %s1143 = int_to_ptr.vmem [resolvable:$true] %s1142
      %1148 = dma.vmem_to_hbm [thread:$0]  %s1143, 640, %s5, [#allocation6], 128, 128, 8
    $region53: #{tpu_custom_call.1} parent=1 // pred_fallthru
      _
    // Predicated region
    $region54: #{tpu_custom_call.1} parent=1 // pred_check
      _
    $region55: #{tpu_custom_call.1} parent=1 // pred_check_branch
      %1150 = sbr.rel (0) target = $region57
    $region56: #{tpu_custom_call.1} parent=1 // pred_region
      %s1152 = ssub.s32 128, 128
      %1153 = vsyncadd [#allocation15], %s1152
      %s1155 = sshll.u32 [#allocation14], 4
      %s1156 = int_to_ptr.vmem [resolvable:$true] %s1155
      %1158 = dma.vmem_to_hbm [thread:$0]  %s1156, 128, %s6, [#allocation15]
    $region57: #{tpu_custom_call.1} parent=1 // pred_fallthru
      _
    // Predicated region
    $region58: #{tpu_custom_call.1} parent=1 // pred_check
      _
    $region59: #{tpu_custom_call.1} parent=1 // pred_check_branch
      %1160 = sbr.rel (0) target = $region61
    $region60: #{tpu_custom_call.1} parent=1 // pred_region
      %s1162 = ssub.s32 128, 128
      %1163 = vsyncadd [#allocation15], %s1162
      %s1165 = sshll.u32 [#allocation16], 4
      %s1166 = int_to_ptr.vmem [resolvable:$true] %s1165
      %1168 = dma.vmem_to_hbm [thread:$0]  %s1166, 128, %s7, [#allocation15]
    $region61: #{tpu_custom_call.1} parent=1 // pred_fallthru
      _
    // Predicated region
    $region62: #{tpu_custom_call.1} parent=1 // pred_check
      _
    $region63: #{tpu_custom_call.1} parent=1 // pred_check_branch
      %1170 = sbr.rel (0) target = $region65
    $region64: #{tpu_custom_call.1} parent=1 // pred_region
      %1171 = dma.done [#allocation6], 640
    $region65: #{tpu_custom_call.1} parent=1 // pred_fallthru
      _
    // Predicated region
    $region66: #{tpu_custom_call.1} parent=1 // pred_check
      _
    $region67: #{tpu_custom_call.1} parent=1 // pred_check_branch
      %1173 = sbr.rel (0) target = $region69
    $region68: #{tpu_custom_call.1} parent=1 // pred_region
      %1174 = dma.done [#allocation15], 128
    $region69: #{tpu_custom_call.1} parent=1 // pred_fallthru
      _
    // Predicated region
    $region70: #{tpu_custom_call.1} parent=1 // pred_check
      _
    $region71: #{tpu_custom_call.1} parent=1 // pred_check_branch
      %1176 = sbr.rel (0) target = $region73
    $region72: #{tpu_custom_call.1} parent=1 // pred_region
      %1177 = dma.done [#allocation15], 128
    $region73: #{tpu_custom_call.1} parent=1 // pred_fallthru
      _
    %1178 = vsyncpa [#allocation5], 1
    %1179 = vsyncpa [#allocation8], 1
    %1180 = vsyncpa [#allocation11], 1
    %1181 = vsyncpa [#allocation6], 1
    %1182 = vsyncpa [#allocation15], 1

// kernel: tpu_custom_call.1
$region0: #{tpu_custom_call.1}
  #allocation0 [shape = 'u32[]', space=smem, size = 0x4, offset = 0x4, fixed_abs, tag = 'smem constant byte address 0x4 - core index']
  #allocation1 [shape = 'u32[144,128]{1,0:T(1,128)}', space=vmem, size = 0x12000, scoped, tag = 'internal scratch']
  #allocation2 [shape = 'f32[8,128]{1,0:T(8,128)}', space=vmem, size = 0x1000, scoped, tag = 'scratch operand']
  #allocation3 [shape = 'f32[8,128]{1,0:T(8,128)}', space=vmem, size = 0x1000, scoped, tag = 'scratch operand']
  %s0 = inlined_call_operand.hbm [shape: f32[5,8,128], index: 0, kind: input, shape index: {}]
  %s1 = inlined_call_operand.hbm [shape: f32[256,512], index: 1, kind: input, shape index: {}]
  %s2 = inlined_call_operand.hbm [shape: f32[1,512], index: 2, kind: input, shape index: {}]
  %s3 = inlined_call_operand.hbm [shape: f32[8,128], index: 3, kind: input, shape index: {}]
  %s4 = inlined_call_operand.hbm [shape: f32[8,128], index: 4, kind: input, shape index: {}]
  %s5 = inlined_call_operand.hbm [shape: f32[5,8,128], index: 5, kind: output, shape index: {0}]
  %s6 = inlined_call_operand.hbm [shape: f32[8,128], index: 6, kind: output, shape index: {1}]
  %s7 = inlined_call_operand.hbm [shape: f32[8,128], index: 7, kind: output, shape index: {2}]
  %8 = xla_tuple %s5, %s6, %s7
  %s9 = sld [smem:[#allocation0]]
  $region74: #{tpu_custom_call.1} parent=0
    _
  %s11 = ssub.s32 1, %s9
  %s12 = scalar_select 0, %s11, %s9
  $region1: #{tpu_custom_call.1} parent=0
    #allocation4 [shape = 'u8[20480]{0}', space=vmem, size = 0x5000, scoped, tag = 'input window, operand 0, single buffered']
    #allocation5 [shape = 's32[1]{0}', space=sflag, size = 0x4, scoped, tag = 'scoped memory for tpu_custom_call.1']
    #allocation6 [shape = 's32[1]{0}', space=sflag, size = 0x4, scoped, tag = 'scoped memory for tpu_custom_call.1']
    #allocation7 [shape = 'u8[524288]{0}', space=vmem, size = 0x80000, scoped, tag = 'input window, operand 1, single buffered']
    #allocation8 [shape = 's32[1]{0}', space=sflag, size = 0x4, scoped, tag = 'scoped memory for tpu_custom_call.1']
    #allocation9 [shape = 'u8[2048]{0}', space=vmem, size = 0x800, scoped, tag = 'input window, operand 2, single buffered']
    #allocation10 [shape = 'u8[4096]{0}', space=vmem, size = 0x1000, scoped, tag = 'input window, operand 3, single buffered']
    #allocation11 [shape = 's32[1]{0}', space=sflag, size = 0x4, scoped, tag = 'scoped memory for tpu_custom_call.1']
    #allocation12 [shape = 'u8[4096]{0}', space=vmem, size = 0x1000, scoped, tag = 'input window, operand 4, single buffered']
    #allocation13 [shape = 'u8[20480]{0}', space=vmem, size = 0x5000, scoped, tag = 'output window, operand 0, single buffered']
    #allocation14 [shape = 'u8[4096]{0}', space=vmem, size = 0x1000, scoped, tag = 'output window, operand 1, single buffered']
    #allocation15 [shape = 's32[1]{0}', space=sflag, size = 0x4, scoped, tag = 'scoped memory for tpu_custom_call.1']
    #allocation16 [shape = 'u8[4096]{0}', space=vmem, size = 0x1000, scoped, tag = 'output window, operand 2, single buffered']
    %13 = vsyncpa [#allocation5], 0
    %14 = vsyncpa [#allocation8], 0
    %15 = vsyncpa [#allocation11], 0
    %16 = vsyncpa [#allocation6], 0
    %17 = vsyncpa [#allocation15], 0
    // Predicated region
    $region2: #{tpu_custom_call.1} parent=1 // pred_check
      _
    $region3: #{tpu_custom_call.1} parent=1 // pred_check_branch
      %19 = sbr.rel (0) target = $region5
    $region4: #{tpu_custom_call.1} parent=1 // pred_region
      %s21 = ssub.s32 640, 640
      %22 = vsyncadd [#allocation5], %s21
      %s23 = sshll.u32 [#allocation4], 4
      %s24 = int_to_ptr.vmem [resolvable:$true] %s23
      %29 = dma.hbm_to_vmem [thread:$0]  %s0, 640, %s24, [#allocation5], 128, 128, 8
    $region5: #{tpu_custom_call.1} parent=1 // pred_fallthru
      _
    // Predicated region
    $region6: #{tpu_custom_call.1} parent=1 // pred_check
      _
    $region7: #{tpu_custom_call.1} parent=1 // pred_check_branch
      %31 = sbr.rel (0) target = $region9
    $region8: #{tpu_custom_call.1} parent=1 // pred_region
      %s33 = ssub.s32 16384, 16384
      %34 = vsyncadd [#allocation8], %s33
      %s35 = sshll.u32 [#allocation7], 4
      %s36 = int_to_ptr.vmem [resolvable:$true] %s35
      %41 = dma.hbm_to_vmem [thread:$0]  %s1, 16384, %s36, [#allocation8], 512, 512, 32
    $region9: #{tpu_custom_call.1} parent=1 // pred_fallthru
      _
    // Predicated region
    $region10: #{tpu_custom_call.1} parent=1 // pred_check
      _
    $region11: #{tpu_custom_call.1} parent=1 // pred_check_branch
      %43 = sbr.rel (0) target = $region13
    $region12: #{tpu_custom_call.1} parent=1 // pred_region
      %s45 = ssub.s32 64, 64
      %46 = vsyncadd [#allocation8], %s45
      %s48 = sshll.u32 [#allocation9], 4
      %s49 = int_to_ptr.vmem [resolvable:$true] %s48
      %51 = dma.hbm_to_vmem [thread:$0]  %s2, 64, %s49, [#allocation8]
    $region13: #{tpu_custom_call.1} parent=1 // pred_fallthru
      _
    // Predicated region
    $region14: #{tpu_custom_call.1} parent=1 // pred_check
      _
    $region15: #{tpu_custom_call.1} parent=1 // pred_check_branch
      %53 = sbr.rel (0) target = $region17
    $region16: #{tpu_custom_call.1} parent=1 // pred_region
      %s55 = ssub.s32 128, 128
      %56 = vsyncadd [#allocation11], %s55
      %s58 = sshll.u32 [#allocation10], 4
      %s59 = int_to_ptr.vmem [resolvable:$true] %s58
      %61 = dma.hbm_to_vmem [thread:$0]  %s3, 128, %s59, [#allocation11]
    $region17: #{tpu_custom_call.1} parent=1 // pred_fallthru
      _
    // Predicated region
    $region18: #{tpu_custom_call.1} parent=1 // pred_check
      _
    $region19: #{tpu_custom_call.1} parent=1 // pred_check_branch
      %63 = sbr.rel (0) target = $region21
    $region20: #{tpu_custom_call.1} parent=1 // pred_region
      %s65 = ssub.s32 128, 128
      %66 = vsyncadd [#allocation11], %s65
      %s68 = sshll.u32 [#allocation12], 4
      %s69 = int_to_ptr.vmem [resolvable:$true] %s68
      %71 = dma.hbm_to_vmem [thread:$0]  %s4, 128, %s69, [#allocation11]
    $region21: #{tpu_custom_call.1} parent=1 // pred_fallthru
      _
    // Predicated region
    $region22: #{tpu_custom_call.1} parent=1 // pred_check
      _
    $region23: #{tpu_custom_call.1} parent=1 // pred_check_branch
      %73 = sbr.rel (0) target = $region25
    $region24: #{tpu_custom_call.1} parent=1 // pred_region
      %74 = dma.done [#allocation5], 640
    $region25: #{tpu_custom_call.1} parent=1 // pred_fallthru
      _
    // Predicated region
    $region26: #{tpu_custom_call.1} parent=1 // pred_check
      _
    $region27: #{tpu_custom_call.1} parent=1 // pred_check_branch
      %76 = sbr.rel (0) target = $region29
    $region28: #{tpu_custom_call.1} parent=1 // pred_region
      %77 = dma.done [#allocation8], 16384
    $region29: #{tpu_custom_call.1} parent=1 // pred_fallthru
      _
    // Predicated region
    $region30: #{tpu_custom_call.1} parent=1 // pred_check
      _
    $region31: #{tpu_custom_call.1} parent=1 // pred_check_branch
      %79 = sbr.rel (0) target = $region33
    $region32: #{tpu_custom_call.1} parent=1 // pred_region
      %80 = dma.done [#allocation8], 64
    $region33: #{tpu_custom_call.1} parent=1 // pred_fallthru
      _
    // Predicated region
    $region34: #{tpu_custom_call.1} parent=1 // pred_check
      _
    $region35: #{tpu_custom_call.1} parent=1 // pred_check_branch
      %82 = sbr.rel (0) target = $region37
    $region36: #{tpu_custom_call.1} parent=1 // pred_region
      %83 = dma.done [#allocation11], 128
    $region37: #{tpu_custom_call.1} parent=1 // pred_fallthru
      _
    // Predicated region
    $region38: #{tpu_custom_call.1} parent=1 // pred_check
      _
    $region39: #{tpu_custom_call.1} parent=1 // pred_check_branch
      %85 = sbr.rel (0) target = $region41
    $region40: #{tpu_custom_call.1} parent=1 // pred_region
      %86 = dma.done [#allocation11], 128
    $region41: #{tpu_custom_call.1} parent=1 // pred_fallthru
      _
    %p87 = scmp.eq.s32.totalorder 0, 0
    // Predicated region
    $region42: #{tpu_custom_call.1} parent=1 // pred_check
      %p88 = pneg %p87
    $region43: #{tpu_custom_call.1} parent=1 // pred_check_branch
      %90 = sbr.rel (%p88) target = $region45
    $region44: #{tpu_custom_call.1} parent=1 // pred_region
      %v91 = vld [vmem:[#allocation10] sm:$0xff]
      %92 = vst [vmem:[#allocation2] sm:$0xff] %v91
      %v93 = vld [vmem:[#allocation12] sm:$0xff]
      %94 = vst [vmem:[#allocation3] sm:$0xff] %v93
    $region45: #{tpu_custom_call.1} parent=1 // pred_fallthru
      _
    %v95 = vld [vmem:[#allocation7] sm:$0xff]
    %v96 = vld [vmem:[#allocation7 + $0x8] sm:$0xff]
    %v97 = vld [vmem:[#allocation7 + $0x10] sm:$0xff]
    %v98 = vld [vmem:[#allocation7 + $0x18] sm:$0xff]
    %v99 = vld [vmem:[#allocation7 + $0x20] sm:$0xff]
    %v100 = vld [vmem:[#allocation7 + $0x28] sm:$0xff]
    %v101 = vld [vmem:[#allocation7 + $0x30] sm:$0xff]
    %v102 = vld [vmem:[#allocation7 + $0x38] sm:$0xff]
    %v103 = vld [vmem:[#allocation7 + $0x40] sm:$0xff]
    %v104 = vld [vmem:[#allocation7 + $0x48] sm:$0xff]
    %v105 = vld [vmem:[#allocation7 + $0x50] sm:$0xff]
    %v106 = vld [vmem:[#allocation7 + $0x58] sm:$0xff]
    %v107 = vld [vmem:[#allocation7 + $0x60] sm:$0xff]
    %v108 = vld [vmem:[#allocation7 + $0x68] sm:$0xff]
    %v109 = vld [vmem:[#allocation7 + $0x70] sm:$0xff]
    %v110 = vld [vmem:[#allocation7 + $0x78] sm:$0xff]
    %v111 = vld [vmem:[#allocation7 + $0x80] sm:$0xff]
    %v112 = vld [vmem:[#allocation7 + $0x88] sm:$0xff]
    %v113 = vld [vmem:[#allocation7 + $0x90] sm:$0xff]
    %v114 = vld [vmem:[#allocation7 + $0x98] sm:$0xff]
    %v115 = vld [vmem:[#allocation7 + $0xa0] sm:$0xff]
    %v116 = vld [vmem:[#allocation7 + $0xa8] sm:$0xff]
    %v117 = vld [vmem:[#allocation7 + $0xb0] sm:$0xff]
    %v118 = vld [vmem:[#allocation7 + $0xb8] sm:$0xff]
    %v119 = vld [vmem:[#allocation7 + $0xc0] sm:$0xff]
    %v120 = vld [vmem:[#allocation7 + $0xc8] sm:$0xff]
    %v121 = vld [vmem:[#allocation7 + $0xd0] sm:$0xff]
    %v122 = vld [vmem:[#allocation7 + $0xd8] sm:$0xff]
    %v123 = vld [vmem:[#allocation7 + $0xe0] sm:$0xff]
    %v124 = vld [vmem:[#allocation7 + $0xe8] sm:$0xff]
    %v125 = vld [vmem:[#allocation7 + $0xf0] sm:$0xff]
    %v126 = vld [vmem:[#allocation7 + $0xf8] sm:$0xff]
    %v127 = vld [vmem:[#allocation7 + $0x100] sm:$0xff]
    %v128 = vld [vmem:[#allocation7 + $0x108] sm:$0xff]
    %v129 = vld [vmem:[#allocation7 + $0x110] sm:$0xff]
    %v130 = vld [vmem:[#allocation7 + $0x118] sm:$0xff]
    %v131 = vld [vmem:[#allocation7 + $0x120] sm:$0xff]
    %v132 = vld [vmem:[#allocation7 + $0x128] sm:$0xff]
    %v133 = vld [vmem:[#allocation7 + $0x130] sm:$0xff]
    %v134 = vld [vmem:[#allocation7 + $0x138] sm:$0xff]
    %v135 = vld [vmem:[#allocation7 + $0x140] sm:$0xff]
    %v136 = vld [vmem:[#allocation7 + $0x148] sm:$0xff]
    %v137 = vld [vmem:[#allocation7 + $0x150] sm:$0xff]
    %v138 = vld [vmem:[#allocation7 + $0x158] sm:$0xff]
    %v139 = vld [vmem:[#allocation7 + $0x160] sm:$0xff]
    %v140 = vld [vmem:[#allocation7 + $0x168] sm:$0xff]
    %v141 = vld [vmem:[#allocation7 + $0x170] sm:$0xff]
    %v142 = vld [vmem:[#allocation7 + $0x178] sm:$0xff]
    %v143 = vld [vmem:[#allocation7 + $0x180] sm:$0xff]
    %v144 = vld [vmem:[#allocation7 + $0x188] sm:$0xff]
    %v145 = vld [vmem:[#allocation7 + $0x190] sm:$0xff]
    %v146 = vld [vmem:[#allocation7 + $0x198] sm:$0xff]
    %v147 = vld [vmem:[#allocation7 + $0x1a0] sm:$0xff]
    %v148 = vld [vmem:[#allocation7 + $0x1a8] sm:$0xff]
    %v149 = vld [vmem:[#allocation7 + $0x1b0] sm:$0xff]
    %v150 = vld [vmem:[#allocation7 + $0x1b8] sm:$0xff]
    %v151 = vld [vmem:[#allocation7 + $0x1c0] sm:$0xff]
    %v152 = vld [vmem:[#allocation7 + $0x1c8] sm:$0xff]
    %v153 = vld [vmem:[#allocation7 + $0x1d0] sm:$0xff]
    %v154 = vld [vmem:[#allocation7 + $0x1d8] sm:$0xff]
    %v155 = vld [vmem:[#allocation7 + $0x1e0] sm:$0xff]
    %v156 = vld [vmem:[#allocation7 + $0x1e8] sm:$0xff]
    %v157 = vld [vmem:[#allocation7 + $0x1f0] sm:$0xff]
    %v158 = vld [vmem:[#allocation7 + $0x1f8] sm:$0xff]
    %v159 = vld [vmem:[#allocation7 + $0x200] sm:$0xff]
    %v160 = vld [vmem:[#allocation7 + $0x208] sm:$0xff]
    %v161 = vld [vmem:[#allocation7 + $0x210] sm:$0xff]
    %v162 = vld [vmem:[#allocation7 + $0x218] sm:$0xff]
    %v163 = vld [vmem:[#allocation7 + $0x220] sm:$0xff]
    %v164 = vld [vmem:[#allocation7 + $0x228] sm:$0xff]
    %v165 = vld [vmem:[#allocation7 + $0x230] sm:$0xff]
    %v166 = vld [vmem:[#allocation7 + $0x238] sm:$0xff]
    %v167 = vld [vmem:[#allocation7 + $0x240] sm:$0xff]
    %v168 = vld [vmem:[#allocation7 + $0x248] sm:$0xff]
    %v169 = vld [vmem:[#allocation7 + $0x250] sm:$0xff]
    %v170 = vld [vmem:[#allocation7 + $0x258] sm:$0xff]
    %v171 = vld [vmem:[#allocation7 + $0x260] sm:$0xff]
    %v172 = vld [vmem:[#allocation7 + $0x268] sm:$0xff]
    %v173 = vld [vmem:[#allocation7 + $0x270] sm:$0xff]
    %v174 = vld [vmem:[#allocation7 + $0x278] sm:$0xff]
    %v175 = vld [vmem:[#allocation7 + $0x280] sm:$0xff]
    %v176 = vld [vmem:[#allocation7 + $0x288] sm:$0xff]
    %v177 = vld [vmem:[#allocation7 + $0x290] sm:$0xff]
    %v178 = vld [vmem:[#allocation7 + $0x298] sm:$0xff]
    %v179 = vld [vmem:[#allocation7 + $0x2a0] sm:$0xff]
    %v180 = vld [vmem:[#allocation7 + $0x2a8] sm:$0xff]
    %v181 = vld [vmem:[#allocation7 + $0x2b0] sm:$0xff]
    %v182 = vld [vmem:[#allocation7 + $0x2b8] sm:$0xff]
    %v183 = vld [vmem:[#allocation7 + $0x2c0] sm:$0xff]
    %v184 = vld [vmem:[#allocation7 + $0x2c8] sm:$0xff]
    %v185 = vld [vmem:[#allocation7 + $0x2d0] sm:$0xff]
    %v186 = vld [vmem:[#allocation7 + $0x2d8] sm:$0xff]
    %v187 = vld [vmem:[#allocation7 + $0x2e0] sm:$0xff]
    %v188 = vld [vmem:[#allocation7 + $0x2e8] sm:$0xff]
    %v189 = vld [vmem:[#allocation7 + $0x2f0] sm:$0xff]
    %v190 = vld [vmem:[#allocation7 + $0x2f8] sm:$0xff]
    %v191 = vld [vmem:[#allocation7 + $0x300] sm:$0xff]
    %v192 = vld [vmem:[#allocation7 + $0x308] sm:$0xff]
    %v193 = vld [vmem:[#allocation7 + $0x310] sm:$0xff]
    %v194 = vld [vmem:[#allocation7 + $0x318] sm:$0xff]
    %v195 = vld [vmem:[#allocation7 + $0x320] sm:$0xff]
    %v196 = vld [vmem:[#allocation7 + $0x328] sm:$0xff]
    %v197 = vld [vmem:[#allocation7 + $0x330] sm:$0xff]
    %v198 = vld [vmem:[#allocation7 + $0x338] sm:$0xff]
    %v199 = vld [vmem:[#allocation7 + $0x340] sm:$0xff]
    %v200 = vld [vmem:[#allocation7 + $0x348] sm:$0xff]
    %v201 = vld [vmem:[#allocation7 + $0x350] sm:$0xff]
    %v202 = vld [vmem:[#allocation7 + $0x358] sm:$0xff]
    %v203 = vld [vmem:[#allocation7 + $0x360] sm:$0xff]
    %v204 = vld [vmem:[#allocation7 + $0x368] sm:$0xff]
    %v205 = vld [vmem:[#allocation7 + $0x370] sm:$0xff]
    %v206 = vld [vmem:[#allocation7 + $0x378] sm:$0xff]
    %v207 = vld [vmem:[#allocation7 + $0x380] sm:$0xff]
    %v208 = vld [vmem:[#allocation7 + $0x388] sm:$0xff]
    %v209 = vld [vmem:[#allocation7 + $0x390] sm:$0xff]
    %v210 = vld [vmem:[#allocation7 + $0x398] sm:$0xff]
    %v211 = vld [vmem:[#allocation7 + $0x3a0] sm:$0xff]
    %v212 = vld [vmem:[#allocation7 + $0x3a8] sm:$0xff]
    %v213 = vld [vmem:[#allocation7 + $0x3b0] sm:$0xff]
    %v214 = vld [vmem:[#allocation7 + $0x3b8] sm:$0xff]
    %v215 = vld [vmem:[#allocation7 + $0x3c0] sm:$0xff]
    %v216 = vld [vmem:[#allocation7 + $0x3c8] sm:$0xff]
    %v217 = vld [vmem:[#allocation7 + $0x3d0] sm:$0xff]
    %v218 = vld [vmem:[#allocation7 + $0x3d8] sm:$0xff]
    %v219 = vld [vmem:[#allocation7 + $0x3e0] sm:$0xff]
    %v220 = vld [vmem:[#allocation7 + $0x3e8] sm:$0xff]
    %v221 = vld [vmem:[#allocation7 + $0x3f0] sm:$0xff]
    %v222 = vld [vmem:[#allocation7 + $0x3f8] sm:$0xff]
    %v223 = vld [vmem:[#allocation9] sm:$0xf]
    %v224 = vld [vmem:[#allocation2] sm:$0xff]
    %v225 = vld [vmem:[#allocation3] sm:$0xff]
    %v226 = vld [vmem:[#allocation4] sm:$0xff]
    %v228 = vlaneseq
    %v229 = vshrl.u32 %v228, 7
    %v230 = vsub.s32 0, %v229
    %v231 = vrot.slane %v223, %v230
    %v232 = vlaneseq
    %v233 = vshrl.u32 %v232, 7
    %v234 = vsub.s32 1, %v233
    %v235 = vrot.slane %v223, %v234
    %v236 = vlaneseq
    %v237 = vshrl.u32 %v236, 7
    %v238 = vsub.s32 2, %v237
    %v239 = vrot.slane %v223, %v238
    %v240 = vlaneseq
    %v241 = vshrl.u32 %v240, 7
    %v242 = vsub.s32 3, %v241
    %v243 = vrot.slane %v223, %v242
    %248 = vmatprep.subr.mxu0 %v156
    %249 = vmatpush1.msra.mxu0 %v155
    %250 = vmatprep.subr.mxu0 %v152
    %251 = vmatpush1.msra.mxu0 %v151
    %252 = vmatprep.subr.mxu0 %v148
    %253 = vmatpush1.msra.mxu0 %v147
    %254 = vmatprep.subr.mxu0 %v144
    %255 = vmatpush1.msra.mxu0 %v143
    %256 = vmatprep.subr.mxu0 %v140
    %257 = vmatpush1.msra.mxu0 %v139
    %258 = vmatprep.subr.mxu0 %v136
    %259 = vmatpush1.msra.mxu0 %v135
    %260 = vmatprep.subr.mxu0 %v132
    %261 = vmatpush1.msra.mxu0 %v131
    %262 = vmatprep.subr.mxu0 %v128
    %263 = vmatpush1.msra.mxu0 %v127
    %264 = vmatprep.subr.mxu0 %v124
    %265 = vmatpush1.msra.mxu0 %v123
    %266 = vmatprep.subr.mxu0 %v120
    %267 = vmatpush1.msra.mxu0 %v119
    %268 = vmatprep.subr.mxu0 %v116
    %269 = vmatpush1.msra.mxu0 %v115
    %270 = vmatprep.subr.mxu0 %v112
    %271 = vmatpush1.msra.mxu0 %v111
    %272 = vmatprep.subr.mxu0 %v108
    %273 = vmatpush1.msra.mxu0 %v107
    %274 = vmatprep.subr.mxu0 %v104
    %275 = vmatpush1.msra.mxu0 %v103
    %276 = vmatprep.subr.mxu0 %v100
    %277 = vmatpush1.msra.mxu0 %v99
    %278 = vmatprep.subr.mxu0 %v96
    %279 = vmatpush1.msra.mxu0 %v95
    %280 = vmatprep.subr.mxu0 %v220
    %281 = vmatpush2.msra.mxu0 %v219
    %282 = vmatprep.subr.mxu0 %v216
    %283 = vmatpush2.msra.mxu0 %v215
    %284 = vmatprep.subr.mxu0 %v212
    %285 = vmatpush2.msra.mxu0 %v211
    %286 = vmatprep.subr.mxu0 %v208
    %287 = vmatpush2.msra.mxu0 %v207
    %288 = vmatprep.subr.mxu0 %v204
    %289 = vmatpush2.msra.mxu0 %v203
    %290 = vmatprep.subr.mxu0 %v200
    %291 = vmatpush2.msra.mxu0 %v199
    %292 = vmatprep.subr.mxu0 %v196
    %293 = vmatpush2.msra.mxu0 %v195
    %294 = vmatprep.subr.mxu0 %v192
    %295 = vmatpush2.msra.mxu0 %v191
    %296 = vmatprep.subr.mxu0 %v188
    %297 = vmatpush2.msra.mxu0 %v187
    %298 = vmatprep.subr.mxu0 %v184
    %299 = vmatpush2.msra.mxu0 %v183
    %300 = vmatprep.subr.mxu0 %v180
    %301 = vmatpush2.msra.mxu0 %v179
    %302 = vmatprep.subr.mxu0 %v176
    %303 = vmatpush2.msra.mxu0 %v175
    %304 = vmatprep.subr.mxu0 %v172
    %305 = vmatpush2.msra.mxu0 %v171
    %306 = vmatprep.subr.mxu0 %v168
    %307 = vmatpush2.msra.mxu0 %v167
    %308 = vmatprep.subr.mxu0 %v164
    %309 = vmatpush2.msra.mxu0 %v163
    %310 = vmatprep.subr.mxu0 %v160
    %311 = vmatpush2.msra.mxu0 %v159
    %312 = vmatprep.mubr.f32.mxu0 %v224
    %313 = vmatmul.mubr.f32.gmra.mxu0 %v226
    %v314 = vpop.f32.mrf.mxu0
    %v315 = vadd.f32 %v231, %v314
    %v316 = vpop.f32.mrf.mxu0
    %v317 = vadd.f32 %v235, %v316
    %318 = vdwg.mxu0
    %319 = vmatprep.subr.mxu0 %v158
    %320 = vmatpush1.msra.mxu0 %v157
    %321 = vmatprep.subr.mxu0 %v154
    %322 = vmatpush1.msra.mxu0 %v153
    %323 = vmatprep.subr.mxu0 %v150
    %324 = vmatpush1.msra.mxu0 %v149
    %325 = vmatprep.subr.mxu0 %v146
    %326 = vmatpush1.msra.mxu0 %v145
    %327 = vmatprep.subr.mxu0 %v142
    %328 = vmatpush1.msra.mxu0 %v141
    %329 = vmatprep.subr.mxu0 %v138
    %330 = vmatpush1.msra.mxu0 %v137
    %331 = vmatprep.subr.mxu0 %v134
    %332 = vmatpush1.msra.mxu0 %v133
    %333 = vmatprep.subr.mxu0 %v130
    %334 = vmatpush1.msra.mxu0 %v129
    %335 = vmatprep.subr.mxu0 %v126
    %336 = vmatpush1.msra.mxu0 %v125
    %337 = vmatprep.subr.mxu0 %v122
    %338 = vmatpush1.msra.mxu0 %v121
    %339 = vmatprep.subr.mxu0 %v118
    %340 = vmatpush1.msra.mxu0 %v117
    %341 = vmatprep.subr.mxu0 %v114
    %342 = vmatpush1.msra.mxu0 %v113
    %343 = vmatprep.subr.mxu0 %v110
    %344 = vmatpush1.msra.mxu0 %v109
    %345 = vmatprep.subr.mxu0 %v106
    %346 = vmatpush1.msra.mxu0 %v105
    %347 = vmatprep.subr.mxu0 %v102
    %348 = vmatpush1.msra.mxu0 %v101
    %349 = vmatprep.subr.mxu0 %v98
    %350 = vmatpush1.msra.mxu0 %v97
    %351 = vmatprep.subr.mxu0 %v222
    %352 = vmatpush2.msra.mxu0 %v221
    %353 = vmatprep.subr.mxu0 %v218
    %354 = vmatpush2.msra.mxu0 %v217
    %355 = vmatprep.subr.mxu0 %v214
    %356 = vmatpush2.msra.mxu0 %v213
    %357 = vmatprep.subr.mxu0 %v210
    %358 = vmatpush2.msra.mxu0 %v209
    %359 = vmatprep.subr.mxu0 %v206
    %360 = vmatpush2.msra.mxu0 %v205
    %361 = vmatprep.subr.mxu0 %v202
    %362 = vmatpush2.msra.mxu0 %v201
    %363 = vmatprep.subr.mxu0 %v198
    %364 = vmatpush2.msra.mxu0 %v197
    %365 = vmatprep.subr.mxu0 %v194
    %366 = vmatpush2.msra.mxu0 %v193
    %367 = vmatprep.subr.mxu0 %v190
    %368 = vmatpush2.msra.mxu0 %v189
    %369 = vmatprep.subr.mxu0 %v186
    %370 = vmatpush2.msra.mxu0 %v185
    %371 = vmatprep.subr.mxu0 %v182
    %372 = vmatpush2.msra.mxu0 %v181
    %373 = vmatprep.subr.mxu0 %v178
    %374 = vmatpush2.msra.mxu0 %v177
    %375 = vmatprep.subr.mxu0 %v174
    %376 = vmatpush2.msra.mxu0 %v173
    %377 = vmatprep.subr.mxu0 %v170
    %378 = vmatpush2.msra.mxu0 %v169
    %379 = vmatprep.subr.mxu0 %v166
    %380 = vmatpush2.msra.mxu0 %v165
    %381 = vmatprep.subr.mxu0 %v162
    %382 = vmatpush2.msra.mxu0 %v161
    %383 = vmatprep.mubr.f32.mxu0 %v224
    %384 = vmatmul.mubr.f32.gmra.mxu0 %v226
    %v385 = vpop.f32.mrf.mxu0
    %v386 = vadd.f32 %v239, %v385
    %v387 = vpop.f32.mrf.mxu0
    %v388 = vadd.f32 %v243, %v387
    %389 = vdwg.mxu0
    %v390 = vxor.u32 %v315, 2147483648
    %v391 = vmul.f32 %v390, 1.442695
    %v392 = vpow.pop %v391
    %v393 = vadd.f32 %v392, 1.0
    %v394 = vrcp.pop %v393
    %v395 = vmul.f32 1.0, %v394
    %v396 = vxor.u32 %v317, 2147483648
    %v397 = vmul.f32 %v396, 1.442695
    %v398 = vpow.pop %v397
    %v399 = vadd.f32 %v398, 1.0
    %v400 = vrcp.pop %v399
    %v401 = vmul.f32 1.0, %v400
    %v402 = vtanh.pop %v386
    %v403 = vxor.u32 %v388, 2147483648
    %v404 = vmul.f32 %v403, 1.442695
    %v405 = vpow.pop %v404
    %v406 = vadd.f32 %v405, 1.0
    %v407 = vrcp.pop %v406
    %v408 = vmul.f32 1.0, %v407
    %v409 = vmul.f32 %v401, %v225
    %v410 = vmul.f32 %v395, %v402
    %v411 = vadd.f32 %v409, %v410
    %v412 = vtanh.pop %v411
    %v413 = vmul.f32 %v408, %v412
    %s414 = smul.u32 0, 5
    %p415 = scmp.lt.s32.totalorder %s414, 5
    %s416 = scalar_select %p415, 1, 0
    %v417 = vstv %s416
    %vm418 = vcmp.eq.s32.totalorder %v417, 1
    %v419 = vsel %vm418, %v411, %v225
    %v420 = vsel %vm418, %v413, %v224
    %421 = vst [vmem:[#allocation13] sm:$0xff] %v420
    %s422 = scalar_lea.vmem [#allocation4], 8
    %v423 = vld [vmem:[%s422] sm:$0xff]
    %424 = vmatprep.subr.mxu0 %v156
    %425 = vmatpush1.msra.mxu0 %v155
    %426 = vmatprep.subr.mxu0 %v152
    %427 = vmatpush1.msra.mxu0 %v151
    %428 = vmatprep.subr.mxu0 %v148
    %429 = vmatpush1.msra.mxu0 %v147
    %430 = vmatprep.subr.mxu0 %v144
    %431 = vmatpush1.msra.mxu0 %v143
    %432 = vmatprep.subr.mxu0 %v140
    %433 = vmatpush1.msra.mxu0 %v139
    %434 = vmatprep.subr.mxu0 %v136
    %435 = vmatpush1.msra.mxu0 %v135
    %436 = vmatprep.subr.mxu0 %v132
    %437 = vmatpush1.msra.mxu0 %v131
    %438 = vmatprep.subr.mxu0 %v128
    %439 = vmatpush1.msra.mxu0 %v127
    %440 = vmatprep.subr.mxu0 %v124
    %441 = vmatpush1.msra.mxu0 %v123
    %442 = vmatprep.subr.mxu0 %v120
    %443 = vmatpush1.msra.mxu0 %v119
    %444 = vmatprep.subr.mxu0 %v116
    %445 = vmatpush1.msra.mxu0 %v115
    %446 = vmatprep.subr.mxu0 %v112
    %447 = vmatpush1.msra.mxu0 %v111
    %448 = vmatprep.subr.mxu0 %v108
    %449 = vmatpush1.msra.mxu0 %v107
    %450 = vmatprep.subr.mxu0 %v104
    %451 = vmatpush1.msra.mxu0 %v103
    %452 = vmatprep.subr.mxu0 %v100
    %453 = vmatpush1.msra.mxu0 %v99
    %454 = vmatprep.subr.mxu0 %v96
    %455 = vmatpush1.msra.mxu0 %v95
    %456 = vmatprep.subr.mxu0 %v220
    %457 = vmatpush2.msra.mxu0 %v219
    %458 = vmatprep.subr.mxu0 %v216
    %459 = vmatpush2.msra.mxu0 %v215
    %460 = vmatprep.subr.mxu0 %v212
    %461 = vmatpush2.msra.mxu0 %v211
    %462 = vmatprep.subr.mxu0 %v208
    %463 = vmatpush2.msra.mxu0 %v207
    %464 = vmatprep.subr.mxu0 %v204
    %465 = vmatpush2.msra.mxu0 %v203
    %466 = vmatprep.subr.mxu0 %v200
    %467 = vmatpush2.msra.mxu0 %v199
    %468 = vmatprep.subr.mxu0 %v196
    %469 = vmatpush2.msra.mxu0 %v195
    %470 = vmatprep.subr.mxu0 %v192
    %471 = vmatpush2.msra.mxu0 %v191
    %472 = vmatprep.subr.mxu0 %v188
    %473 = vmatpush2.msra.mxu0 %v187
    %474 = vmatprep.subr.mxu0 %v184
    %475 = vmatpush2.msra.mxu0 %v183
    %476 = vmatprep.subr.mxu0 %v180
    %477 = vmatpush2.msra.mxu0 %v179
    %478 = vmatprep.subr.mxu0 %v176
    %479 = vmatpush2.msra.mxu0 %v175
    %480 = vmatprep.subr.mxu0 %v172
    %481 = vmatpush2.msra.mxu0 %v171
    %482 = vmatprep.subr.mxu0 %v168
    %483 = vmatpush2.msra.mxu0 %v167
    %484 = vmatprep.subr.mxu0 %v164
    %485 = vmatpush2.msra.mxu0 %v163
    %486 = vmatprep.subr.mxu0 %v160
    %487 = vmatpush2.msra.mxu0 %v159
    %488 = vmatprep.mubr.f32.mxu0 %v420
    %489 = vmatmul.mubr.f32.gmra.mxu0 %v423
    %v490 = vpop.f32.mrf.mxu0
    %v491 = vadd.f32 %v231, %v490
    %v492 = vpop.f32.mrf.mxu0
    %v493 = vadd.f32 %v235, %v492
    %494 = vdwg.mxu0
    %495 = vmatprep.subr.mxu0 %v158
    %496 = vmatpush1.msra.mxu0 %v157
    %497 = vmatprep.subr.mxu0 %v154
    %498 = vmatpush1.msra.mxu0 %v153
    %499 = vmatprep.subr.mxu0 %v150
    %500 = vmatpush1.msra.mxu0 %v149
    %501 = vmatprep.subr.mxu0 %v146
    %502 = vmatpush1.msra.mxu0 %v145
    %503 = vmatprep.subr.mxu0 %v142
    %504 = vmatpush1.msra.mxu0 %v141
    %505 = vmatprep.subr.mxu0 %v138
    %506 = vmatpush1.msra.mxu0 %v137
    %507 = vmatprep.subr.mxu0 %v134
    %508 = vmatpush1.msra.mxu0 %v133
    %509 = vmatprep.subr.mxu0 %v130
    %510 = vmatpush1.msra.mxu0 %v129
    %511 = vmatprep.subr.mxu0 %v126
    %512 = vmatpush1.msra.mxu0 %v125
    %513 = vmatprep.subr.mxu0 %v122
    %514 = vmatpush1.msra.mxu0 %v121
    %515 = vmatprep.subr.mxu0 %v118
    %516 = vmatpush1.msra.mxu0 %v117
    %517 = vmatprep.subr.mxu0 %v114
    %518 = vmatpush1.msra.mxu0 %v113
    %519 = vmatprep.subr.mxu0 %v110
    %520 = vmatpush1.msra.mxu0 %v109
    %521 = vmatprep.subr.mxu0 %v106
    %522 = vmatpush1.msra.mxu0 %v105
    %523 = vmatprep.subr.mxu0 %v102
    %524 = vmatpush1.msra.mxu0 %v101
    %525 = vmatprep.subr.mxu0 %v98
    %526 = vmatpush1.msra.mxu0 %v97
    %527 = vmatprep.subr.mxu0 %v222
    %528 = vmatpush2.msra.mxu0 %v221
    %529 = vmatprep.subr.mxu0 %v218
    %530 = vmatpush2.msra.mxu0 %v217
    %531 = vmatprep.subr.mxu0 %v214
    %532 = vmatpush2.msra.mxu0 %v213
    %533 = vmatprep.subr.mxu0 %v210
    %534 = vmatpush2.msra.mxu0 %v209
    %535 = vmatprep.subr.mxu0 %v206
    %536 = vmatpush2.msra.mxu0 %v205
    %537 = vmatprep.subr.mxu0 %v202
    %538 = vmatpush2.msra.mxu0 %v201
    %539 = vmatprep.subr.mxu0 %v198
    %540 = vmatpush2.msra.mxu0 %v197
    %541 = vmatprep.subr.mxu0 %v194
    %542 = vmatpush2.msra.mxu0 %v193
    %543 = vmatprep.subr.mxu0 %v190
    %544 = vmatpush2.msra.mxu0 %v189
    %545 = vmatprep.subr.mxu0 %v186
    %546 = vmatpush2.msra.mxu0 %v185
    %547 = vmatprep.subr.mxu0 %v182
    %548 = vmatpush2.msra.mxu0 %v181
    %549 = vmatprep.subr.mxu0 %v178
    %550 = vmatpush2.msra.mxu0 %v177
    %551 = vmatprep.subr.mxu0 %v174
    %552 = vmatpush2.msra.mxu0 %v173
    %553 = vmatprep.subr.mxu0 %v170
    %554 = vmatpush2.msra.mxu0 %v169
    %555 = vmatprep.subr.mxu0 %v166
    %556 = vmatpush2.msra.mxu0 %v165
    %557 = vmatprep.subr.mxu0 %v162
    %558 = vmatpush2.msra.mxu0 %v161
    %559 = vmatprep.mubr.f32.mxu0 %v420
    %560 = vmatmul.mubr.f32.gmra.mxu0 %v423
    %v561 = vpop.f32.mrf.mxu0
    %v562 = vadd.f32 %v239, %v561
    %v563 = vpop.f32.mrf.mxu0
    %v564 = vadd.f32 %v243, %v563
    %565 = vdwg.mxu0
    %v566 = vxor.u32 %v491, 2147483648
    %v567 = vmul.f32 %v566, 1.442695
    %v568 = vpow.pop %v567
    %v569 = vadd.f32 %v568, 1.0
    %v570 = vrcp.pop %v569
    %v571 = vmul.f32 1.0, %v570
    %v572 = vxor.u32 %v493, 2147483648
    %v573 = vmul.f32 %v572, 1.442695
    %v574 = vpow.pop %v573
    %v575 = vadd.f32 %v574, 1.0
    %v576 = vrcp.pop %v575
    %v577 = vmul.f32 1.0, %v576
    %v578 = vtanh.pop %v562
    %v579 = vxor.u32 %v564, 2147483648
    %v580 = vmul.f32 %v579, 1.442695
    %v581 = vpow.pop %v580
    %v582 = vadd.f32 %v581, 1.0
    %v583 = vrcp.pop %v582
    %v584 = vmul.f32 1.0, %v583
    %v585 = vmul.f32 %v577, %v419
    %v586 = vmul.f32 %v571, %v578
    %v587 = vadd.f32 %v585, %v586
    %v588 = vtanh.pop %v587
    %v589 = vmul.f32 %v584, %v588
    %s590 = sadd.s32 %s414, 1
    %p591 = scmp.lt.s32.totalorder %s590, 5
    %s592 = scalar_select %p591, 1, 0
    %v593 = vstv %s592
    %vm594 = vcmp.eq.s32.totalorder %v593, 1
    %v595 = vsel %vm594, %v587, %v419
    %v596 = vsel %vm594, %v589, %v420
    %s597 = scalar_lea.vmem [#allocation13], 8
    %598 = vst [vmem:[%s597] sm:$0xff] %v596
    %s599 = scalar_lea.vmem [#allocation4], 16
    %v600 = vld [vmem:[%s599] sm:$0xff]
    %601 = vmatprep.subr.mxu0 %v156
    %602 = vmatpush1.msra.mxu0 %v155
    %603 = vmatprep.subr.mxu0 %v152
    %604 = vmatpush1.msra.mxu0 %v151
    %605 = vmatprep.subr.mxu0 %v148
    %606 = vmatpush1.msra.mxu0 %v147
    %607 = vmatprep.subr.mxu0 %v144
    %608 = vmatpush1.msra.mxu0 %v143
    %609 = vmatprep.subr.mxu0 %v140
    %610 = vmatpush1.msra.mxu0 %v139
    %611 = vmatprep.subr.mxu0 %v136
    %612 = vmatpush1.msra.mxu0 %v135
    %613 = vmatprep.subr.mxu0 %v132
    %614 = vmatpush1.msra.mxu0 %v131
    %615 = vmatprep.subr.mxu0 %v128
    %616 = vmatpush1.msra.mxu0 %v127
    %617 = vmatprep.subr.mxu0 %v124
    %618 = vmatpush1.msra.mxu0 %v123
    %619 = vmatprep.subr.mxu0 %v120
    %620 = vmatpush1.msra.mxu0 %v119
    %621 = vmatprep.subr.mxu0 %v116
    %622 = vmatpush1.msra.mxu0 %v115
    %623 = vmatprep.subr.mxu0 %v112
    %624 = vmatpush1.msra.mxu0 %v111
    %625 = vmatprep.subr.mxu0 %v108
    %626 = vmatpush1.msra.mxu0 %v107
    %627 = vmatprep.subr.mxu0 %v104
    %628 = vmatpush1.msra.mxu0 %v103
    %629 = vmatprep.subr.mxu0 %v100
    %630 = vmatpush1.msra.mxu0 %v99
    %631 = vmatprep.subr.mxu0 %v96
    %632 = vmatpush1.msra.mxu0 %v95
    %633 = vmatprep.subr.mxu0 %v220
    %634 = vmatpush2.msra.mxu0 %v219
    %635 = vmatprep.subr.mxu0 %v216
    %636 = vmatpush2.msra.mxu0 %v215
    %637 = vmatprep.subr.mxu0 %v212
    %638 = vmatpush2.msra.mxu0 %v211
    %639 = vmatprep.subr.mxu0 %v208
    %640 = vmatpush2.msra.mxu0 %v207
    %641 = vmatprep.subr.mxu0 %v204
    %642 = vmatpush2.msra.mxu0 %v203
    %643 = vmatprep.subr.mxu0 %v200
    %644 = vmatpush2.msra.mxu0 %v199
    %645 = vmatprep.subr.mxu0 %v196
    %646 = vmatpush2.msra.mxu0 %v195
    %647 = vmatprep.subr.mxu0 %v192
    %648 = vmatpush2.msra.mxu0 %v191
    %649 = vmatprep.subr.mxu0 %v188
    %650 = vmatpush2.msra.mxu0 %v187
    %651 = vmatprep.subr.mxu0 %v184
    %652 = vmatpush2.msra.mxu0 %v183
    %653 = vmatprep.subr.mxu0 %v180
    %654 = vmatpush2.msra.mxu0 %v179
    %655 = vmatprep.subr.mxu0 %v176
    %656 = vmatpush2.msra.mxu0 %v175
    %657 = vmatprep.subr.mxu0 %v172
    %658 = vmatpush2.msra.mxu0 %v171
    %659 = vmatprep.subr.mxu0 %v168
    %660 = vmatpush2.msra.mxu0 %v167
    %661 = vmatprep.subr.mxu0 %v164
    %662 = vmatpush2.msra.mxu0 %v163
    %663 = vmatprep.subr.mxu0 %v160
    %664 = vmatpush2.msra.mxu0 %v159
    %665 = vmatprep.mubr.f32.mxu0 %v596
    %666 = vmatmul.mubr.f32.gmra.mxu0 %v600
    %v667 = vpop.f32.mrf.mxu0
    %v668 = vadd.f32 %v231, %v667
    %v669 = vpop.f32.mrf.mxu0
    %v670 = vadd.f32 %v235, %v669
    %671 = vdwg.mxu0
    %672 = vmatprep.subr.mxu0 %v158
    %673 = vmatpush1.msra.mxu0 %v157
    %674 = vmatprep.subr.mxu0 %v154
    %675 = vmatpush1.msra.mxu0 %v153
    %676 = vmatprep.subr.mxu0 %v150
    %677 = vmatpush1.msra.mxu0 %v149
    %678 = vmatprep.subr.mxu0 %v146
    %679 = vmatpush1.msra.mxu0 %v145
    %680 = vmatprep.subr.mxu0 %v142
    %681 = vmatpush1.msra.mxu0 %v141
    %682 = vmatprep.subr.mxu0 %v138
    %683 = vmatpush1.msra.mxu0 %v137
    %684 = vmatprep.subr.mxu0 %v134
    %685 = vmatpush1.msra.mxu0 %v133
    %686 = vmatprep.subr.mxu0 %v130
    %687 = vmatpush1.msra.mxu0 %v129
    %688 = vmatprep.subr.mxu0 %v126
    %689 = vmatpush1.msra.mxu0 %v125
    %690 = vmatprep.subr.mxu0 %v122
    %691 = vmatpush1.msra.mxu0 %v121
    %692 = vmatprep.subr.mxu0 %v118
    %693 = vmatpush1.msra.mxu0 %v117
    %694 = vmatprep.subr.mxu0 %v114
    %695 = vmatpush1.msra.mxu0 %v113
    %696 = vmatprep.subr.mxu0 %v110
    %697 = vmatpush1.msra.mxu0 %v109
    %698 = vmatprep.subr.mxu0 %v106
    %699 = vmatpush1.msra.mxu0 %v105
    %700 = vmatprep.subr.mxu0 %v102
    %701 = vmatpush1.msra.mxu0 %v101
    %702 = vmatprep.subr.mxu0 %v98
    %703 = vmatpush1.msra.mxu0 %v97
    %704 = vmatprep.subr.mxu0 %v222
    %705 = vmatpush2.msra.mxu0 %v221
    %706 = vmatprep.subr.mxu0 %v218
    %707 = vmatpush2.msra.mxu0 %v217
    %708 = vmatprep.subr.mxu0 %v214
    %709 = vmatpush2.msra.mxu0 %v213
    %710 = vmatprep.subr.mxu0 %v210
    %711 = vmatpush2.msra.mxu0 %v209
    %712 = vmatprep.subr.mxu0 %v206
    %713 = vmatpush2.msra.mxu0 %v205
    %714 = vmatprep.subr.mxu0 %v202
    %715 = vmatpush2.msra.mxu0 %v201
    %716 = vmatprep.subr.mxu0 %v198
    %717 = vmatpush2.msra.mxu0 %v197
    %718 = vmatprep.subr.mxu0 %v194
    %719 = vmatpush2.msra.mxu0 %v193
    %720 = vmatprep.subr.mxu0 %v190
    %721 = vmatpush2.msra.mxu0 %v189
    %722 = vmatprep.subr.mxu0 %v186
    %723 = vmatpush2.msra.mxu0 %v185
    %724 = vmatprep.subr.mxu0 %v182
    %725 = vmatpush2.msra.mxu0 %v181
    %726 = vmatprep.subr.mxu0 %v178
    %727 = vmatpush2.msra.mxu0 %v177
    %728 = vmatprep.subr.mxu0 %v174
    %729 = vmatpush2.msra.mxu0 %v173
    %730 = vmatprep.subr.mxu0 %v170
    %731 = vmatpush2.msra.mxu0 %v169
    %732 = vmatprep.subr.mxu0 %v166
    %733 = vmatpush2.msra.mxu0 %v165
    %734 = vmatprep.subr.mxu0 %v162
    %735 = vmatpush2.msra.mxu0 %v161
    %736 = vmatprep.mubr.f32.mxu0 %v596
    %737 = vmatmul.mubr.f32.gmra.mxu0 %v600
    %v738 = vpop.f32.mrf.mxu0
    %v739 = vadd.f32 %v239, %v738
    %v740 = vpop.f32.mrf.mxu0
    %v741 = vadd.f32 %v243, %v740
    %742 = vdwg.mxu0
    %v743 = vxor.u32 %v668, 2147483648
    %v744 = vmul.f32 %v743, 1.442695
    %v745 = vpow.pop %v744
    %v746 = vadd.f32 %v745, 1.0
    %v747 = vrcp.pop %v746
    %v748 = vmul.f32 1.0, %v747
    %v749 = vxor.u32 %v670, 2147483648
    %v750 = vmul.f32 %v749, 1.442695
    %v751 = vpow.pop %v750
    %v752 = vadd.f32 %v751, 1.0
    %v753 = vrcp.pop %v752
    %v754 = vmul.f32 1.0, %v753
    %v755 = vtanh.pop %v739
    %v756 = vxor.u32 %v741, 2147483648
    %v757 = vmul.f32 %v756, 1.442695
    %v758 = vpow.pop %v757
    %v759 = vadd.f32 %v758, 1.0
    %v760 = vrcp.pop %v759
    %v761 = vmul.f32 1.0, %v760
    %v762 = vmul.f32 %v754, %v595
    %v763 = vmul.f32 %v748, %v755
    %v764 = vadd.f32 %v762, %v763
    %v765 = vtanh.pop %v764
    %v766 = vmul.f32 %v761, %v765
    %s767 = sadd.s32 %s414, 2
    %p768 = scmp.lt.s32.totalorder %s767, 5
    %s769 = scalar_select %p768, 1, 0
    %v770 = vstv %s769
    %vm771 = vcmp.eq.s32.totalorder %v770, 1
    %v772 = vsel %vm771, %v764, %v595
    %v773 = vsel %vm771, %v766, %v596
    %s774 = scalar_lea.vmem [#allocation13], 16
    %775 = vst [vmem:[%s774] sm:$0xff] %v773
    %s776 = scalar_lea.vmem [#allocation4], 24
    %v777 = vld [vmem:[%s776] sm:$0xff]
    %778 = vmatprep.subr.mxu0 %v156
    %779 = vmatpush1.msra.mxu0 %v155
    %780 = vmatprep.subr.mxu0 %v152
    %781 = vmatpush1.msra.mxu0 %v151
    %782 = vmatprep.subr.mxu0 %v148
    %783 = vmatpush1.msra.mxu0 %v147
    %784 = vmatprep.subr.mxu0 %v144
    %785 = vmatpush1.msra.mxu0 %v143
    %786 = vmatprep.subr.mxu0 %v140
    %787 = vmatpush1.msra.mxu0 %v139
    %788 = vmatprep.subr.mxu0 %v136
    %789 = vmatpush1.msra.mxu0 %v135
    %790 = vmatprep.subr.mxu0 %v132
    %791 = vmatpush1.msra.mxu0 %v131
    %792 = vmatprep.subr.mxu0 %v128
    %793 = vmatpush1.msra.mxu0 %v127
    %794 = vmatprep.subr.mxu0 %v124
    %795 = vmatpush1.msra.mxu0 %v123
    %796 = vmatprep.subr.mxu0 %v120
    %797 = vmatpush1.msra.mxu0 %v119
    %798 = vmatprep.subr.mxu0 %v116
    %799 = vmatpush1.msra.mxu0 %v115
    %800 = vmatprep.subr.mxu0 %v112
    %801 = vmatpush1.msra.mxu0 %v111
    %802 = vmatprep.subr.mxu0 %v108
    %803 = vmatpush1.msra.mxu0 %v107
    %804 = vmatprep.subr.mxu0 %v104
    %805 = vmatpush1.msra.mxu0 %v103
    %806 = vmatprep.subr.mxu0 %v100
    %807 = vmatpush1.msra.mxu0 %v99
    %808 = vmatprep.subr.mxu0 %v96
    %809 = vmatpush1.msra.mxu0 %v95
    %810 = vmatprep.subr.mxu0 %v220
    %811 = vmatpush2.msra.mxu0 %v219
    %812 = vmatprep.subr.mxu0 %v216
    %813 = vmatpush2.msra.mxu0 %v215
    %814 = vmatprep.subr.mxu0 %v212
    %815 = vmatpush2.msra.mxu0 %v211
    %816 = vmatprep.subr.mxu0 %v208
    %817 = vmatpush2.msra.mxu0 %v207
    %818 = vmatprep.subr.mxu0 %v204
    %819 = vmatpush2.msra.mxu0 %v203
    %820 = vmatprep.subr.mxu0 %v200
    %821 = vmatpush2.msra.mxu0 %v199
    %822 = vmatprep.subr.mxu0 %v196
    %823 = vmatpush2.msra.mxu0 %v195
    %824 = vmatprep.subr.mxu0 %v192
    %825 = vmatpush2.msra.mxu0 %v191
    %826 = vmatprep.subr.mxu0 %v188
    %827 = vmatpush2.msra.mxu0 %v187
    %828 = vmatprep.subr.mxu0 %v184
    %829 = vmatpush2.msra.mxu0 %v183
    %830 = vmatprep.subr.mxu0 %v180
    %831 = vmatpush2.msra.mxu0 %v179
    %832 = vmatprep.subr.mxu0 %v176
    %833 = vmatpush2.msra.mxu0 %v175
    %834 = vmatprep.subr.mxu0 %v172
    %835 = vmatpush2.msra.mxu0 %v171
    %836 = vmatprep.subr.mxu0 %v168
    %837 = vmatpush2.msra.mxu0 %v167
    %838 = vmatprep.subr.mxu0 %v164
    %839 = vmatpush2.msra.mxu0 %v163
    %840 = vmatprep.subr.mxu0 %v160
    %841 = vmatpush2.msra.mxu0 %v159
    %842 = vmatprep.mubr.f32.mxu0 %v773
    %843 = vmatmul.mubr.f32.gmra.mxu0 %v777
    %v844 = vpop.f32.mrf.mxu0
    %v845 = vadd.f32 %v231, %v844
    %v846 = vpop.f32.mrf.mxu0
    %v847 = vadd.f32 %v235, %v846
    %848 = vdwg.mxu0
    %849 = vmatprep.subr.mxu0 %v158
    %850 = vmatpush1.msra.mxu0 %v157
    %851 = vmatprep.subr.mxu0 %v154
    %852 = vmatpush1.msra.mxu0 %v153
    %853 = vmatprep.subr.mxu0 %v150
    %854 = vmatpush1.msra.mxu0 %v149
    %855 = vmatprep.subr.mxu0 %v146
    %856 = vmatpush1.msra.mxu0 %v145
    %857 = vmatprep.subr.mxu0 %v142
    %858 = vmatpush1.msra.mxu0 %v141
    %859 = vmatprep.subr.mxu0 %v138
    %860 = vmatpush1.msra.mxu0 %v137
    %861 = vmatprep.subr.mxu0 %v134
    %862 = vmatpush1.msra.mxu0 %v133
    %863 = vmatprep.subr.mxu0 %v130
    %864 = vmatpush1.msra.mxu0 %v129
    %865 = vmatprep.subr.mxu0 %v126
    %866 = vmatpush1.msra.mxu0 %v125
    %867 = vmatprep.subr.mxu0 %v122
    %868 = vmatpush1.msra.mxu0 %v121
    %869 = vmatprep.subr.mxu0 %v118
    %870 = vmatpush1.msra.mxu0 %v117
    %871 = vmatprep.subr.mxu0 %v114
    %872 = vmatpush1.msra.mxu0 %v113
    %873 = vmatprep.subr.mxu0 %v110
    %874 = vmatpush1.msra.mxu0 %v109
    %875 = vmatprep.subr.mxu0 %v106
    %876 = vmatpush1.msra.mxu0 %v105
    %877 = vmatprep.subr.mxu0 %v102
    %878 = vmatpush1.msra.mxu0 %v101
    %879 = vmatprep.subr.mxu0 %v98
    %880 = vmatpush1.msra.mxu0 %v97
    %881 = vmatprep.subr.mxu0 %v222
    %882 = vmatpush2.msra.mxu0 %v221
    %883 = vmatprep.subr.mxu0 %v218
    %884 = vmatpush2.msra.mxu0 %v217
    %885 = vmatprep.subr.mxu0 %v214
    %886 = vmatpush2.msra.mxu0 %v213
    %887 = vmatprep.subr.mxu0 %v210
    %888 = vmatpush2.msra.mxu0 %v209
    %889 = vmatprep.subr.mxu0 %v206
    %890 = vmatpush2.msra.mxu0 %v205
    %891 = vmatprep.subr.mxu0 %v202
    %892 = vmatpush2.msra.mxu0 %v201
    %893 = vmatprep.subr.mxu0 %v198
    %894 = vmatpush2.msra.mxu0 %v197
    %895 = vmatprep.subr.mxu0 %v194
    %896 = vmatpush2.msra.mxu0 %v193
    %897 = vmatprep.subr.mxu0 %v190
    %898 = vmatpush2.msra.mxu0 %v189
    %899 = vmatprep.subr.mxu0 %v186
    %900 = vmatpush2.msra.mxu0 %v185
    %901 = vmatprep.subr.mxu0 %v182
    %902 = vmatpush2.msra.mxu0 %v181
    %903 = vmatprep.subr.mxu0 %v178
    %904 = vmatpush2.msra.mxu0 %v177
    %905 = vmatprep.subr.mxu0 %v174
    %906 = vmatpush2.msra.mxu0 %v173
    %907 = vmatprep.subr.mxu0 %v170
    %908 = vmatpush2.msra.mxu0 %v169
    %909 = vmatprep.subr.mxu0 %v166
    %910 = vmatpush2.msra.mxu0 %v165
    %911 = vmatprep.subr.mxu0 %v162
    %912 = vmatpush2.msra.mxu0 %v161
    %913 = vmatprep.mubr.f32.mxu0 %v773
    %914 = vmatmul.mubr.f32.gmra.mxu0 %v777
    %v915 = vpop.f32.mrf.mxu0
    %v916 = vadd.f32 %v239, %v915
    %v917 = vpop.f32.mrf.mxu0
    %v918 = vadd.f32 %v243, %v917
    %919 = vdwg.mxu0
    %v920 = vxor.u32 %v845, 2147483648
    %v921 = vmul.f32 %v920, 1.442695
    %v922 = vpow.pop %v921
    %v923 = vadd.f32 %v922, 1.0
    %v924 = vrcp.pop %v923
    %v925 = vmul.f32 1.0, %v924
    %v926 = vxor.u32 %v847, 2147483648
    %v927 = vmul.f32 %v926, 1.442695
    %v928 = vpow.pop %v927
    %v929 = vadd.f32 %v928, 1.0
    %v930 = vrcp.pop %v929
    %v931 = vmul.f32 1.0, %v930
    %v932 = vtanh.pop %v916
    %v933 = vxor.u32 %v918, 2147483648
    %v934 = vmul.f32 %v933, 1.442695
    %v935 = vpow.pop %v934
    %v936 = vadd.f32 %v935, 1.0
    %v937 = vrcp.pop %v936
    %v938 = vmul.f32 1.0, %v937
    %v939 = vmul.f32 %v931, %v772
    %v940 = vmul.f32 %v925, %v932
    %v941 = vadd.f32 %v939, %v940
    %v942 = vtanh.pop %v941
    %v943 = vmul.f32 %v938, %v942
    %s944 = sadd.s32 %s414, 3
    %p945 = scmp.lt.s32.totalorder %s944, 5
    %s946 = scalar_select %p945, 1, 0
    %v947 = vstv %s946
    %vm948 = vcmp.eq.s32.totalorder %v947, 1
    %v949 = vsel %vm948, %v941, %v772
    %v950 = vsel %vm948, %v943, %v773
    %s951 = scalar_lea.vmem [#allocation13], 24
    %952 = vst [vmem:[%s951] sm:$0xff] %v950
    %s953 = scalar_lea.vmem [#allocation4], 32
    %v954 = vld [vmem:[%s953] sm:$0xff]
    %955 = vmatprep.subr.mxu0 %v156
    %956 = vmatpush1.msra.mxu0 %v155
    %957 = vmatprep.subr.mxu0 %v152
    %958 = vmatpush1.msra.mxu0 %v151
    %959 = vmatprep.subr.mxu0 %v148
    %960 = vmatpush1.msra.mxu0 %v147
    %961 = vmatprep.subr.mxu0 %v144
    %962 = vmatpush1.msra.mxu0 %v143
    %963 = vmatprep.subr.mxu0 %v140
    %964 = vmatpush1.msra.mxu0 %v139
    %965 = vmatprep.subr.mxu0 %v136
    %966 = vmatpush1.msra.mxu0 %v135
    %967 = vmatprep.subr.mxu0 %v132
    %968 = vmatpush1.msra.mxu0 %v131
    %969 = vmatprep.subr.mxu0 %v128
    %970 = vmatpush1.msra.mxu0 %v127
    %971 = vmatprep.subr.mxu0 %v124
    %972 = vmatpush1.msra.mxu0 %v123
    %973 = vmatprep.subr.mxu0 %v120
    %974 = vmatpush1.msra.mxu0 %v119
    %975 = vmatprep.subr.mxu0 %v116
    %976 = vmatpush1.msra.mxu0 %v115
    %977 = vmatprep.subr.mxu0 %v112
    %978 = vmatpush1.msra.mxu0 %v111
    %979 = vmatprep.subr.mxu0 %v108
    %980 = vmatpush1.msra.mxu0 %v107
    %981 = vmatprep.subr.mxu0 %v104
    %982 = vmatpush1.msra.mxu0 %v103
    %983 = vmatprep.subr.mxu0 %v100
    %984 = vmatpush1.msra.mxu0 %v99
    %985 = vmatprep.subr.mxu0 %v96
    %986 = vmatpush1.msra.mxu0 %v95
    %987 = vmatprep.subr.mxu0 %v220
    %988 = vmatpush2.msra.mxu0 %v219
    %989 = vmatprep.subr.mxu0 %v216
    %990 = vmatpush2.msra.mxu0 %v215
    %991 = vmatprep.subr.mxu0 %v212
    %992 = vmatpush2.msra.mxu0 %v211
    %993 = vmatprep.subr.mxu0 %v208
    %994 = vmatpush2.msra.mxu0 %v207
    %995 = vmatprep.subr.mxu0 %v204
    %996 = vmatpush2.msra.mxu0 %v203
    %997 = vmatprep.subr.mxu0 %v200
    %998 = vmatpush2.msra.mxu0 %v199
    %999 = vmatprep.subr.mxu0 %v196
    %1000 = vmatpush2.msra.mxu0 %v195
    %1001 = vmatprep.subr.mxu0 %v192
    %1002 = vmatpush2.msra.mxu0 %v191
    %1003 = vmatprep.subr.mxu0 %v188
    %1004 = vmatpush2.msra.mxu0 %v187
    %1005 = vmatprep.subr.mxu0 %v184
    %1006 = vmatpush2.msra.mxu0 %v183
    %1007 = vmatprep.subr.mxu0 %v180
    %1008 = vmatpush2.msra.mxu0 %v179
    %1009 = vmatprep.subr.mxu0 %v176
    %1010 = vmatpush2.msra.mxu0 %v175
    %1011 = vmatprep.subr.mxu0 %v172
    %1012 = vmatpush2.msra.mxu0 %v171
    %1013 = vmatprep.subr.mxu0 %v168
    %1014 = vmatpush2.msra.mxu0 %v167
    %1015 = vmatprep.subr.mxu0 %v164
    %1016 = vmatpush2.msra.mxu0 %v163
    %1017 = vmatprep.subr.mxu0 %v160
    %1018 = vmatpush2.msra.mxu0 %v159
    %1019 = vmatprep.mubr.f32.mxu0 %v950
    %1020 = vmatmul.mubr.f32.gmra.mxu0 %v954
    %v1021 = vpop.f32.mrf.mxu0
    %v1022 = vadd.f32 %v231, %v1021
    %v1023 = vpop.f32.mrf.mxu0
    %v1024 = vadd.f32 %v235, %v1023
    %1025 = vdwg.mxu0
    %1026 = vmatprep.subr.mxu0 %v158
    %1027 = vmatpush1.msra.mxu0 %v157
    %1028 = vmatprep.subr.mxu0 %v154
    %1029 = vmatpush1.msra.mxu0 %v153
    %1030 = vmatprep.subr.mxu0 %v150
    %1031 = vmatpush1.msra.mxu0 %v149
    %1032 = vmatprep.subr.mxu0 %v146
    %1033 = vmatpush1.msra.mxu0 %v145
    %1034 = vmatprep.subr.mxu0 %v142
    %1035 = vmatpush1.msra.mxu0 %v141
    %1036 = vmatprep.subr.mxu0 %v138
    %1037 = vmatpush1.msra.mxu0 %v137
    %1038 = vmatprep.subr.mxu0 %v134
    %1039 = vmatpush1.msra.mxu0 %v133
    %1040 = vmatprep.subr.mxu0 %v130
    %1041 = vmatpush1.msra.mxu0 %v129
    %1042 = vmatprep.subr.mxu0 %v126
    %1043 = vmatpush1.msra.mxu0 %v125
    %1044 = vmatprep.subr.mxu0 %v122
    %1045 = vmatpush1.msra.mxu0 %v121
    %1046 = vmatprep.subr.mxu0 %v118
    %1047 = vmatpush1.msra.mxu0 %v117
    %1048 = vmatprep.subr.mxu0 %v114
    %1049 = vmatpush1.msra.mxu0 %v113
    %1050 = vmatprep.subr.mxu0 %v110
    %1051 = vmatpush1.msra.mxu0 %v109
    %1052 = vmatprep.subr.mxu0 %v106
    %1053 = vmatpush1.msra.mxu0 %v105
    %1054 = vmatprep.subr.mxu0 %v102
    %1055 = vmatpush1.msra.mxu0 %v101
    %1056 = vmatprep.subr.mxu0 %v98
    %1057 = vmatpush1.msra.mxu0 %v97
    %1058 = vmatprep.subr.mxu0 %v222
    %1059 = vmatpush2.msra.mxu0 %v221
    %1060 = vmatprep.subr.mxu0 %v218
    %1061 = vmatpush2.msra.mxu0 %v217
    %1062 = vmatprep.subr.mxu0 %v214
    %1063 = vmatpush2.msra.mxu0 %v213
    %1064 = vmatprep.subr.mxu0 %v210
    %1065 = vmatpush2.msra.mxu0 %v209
    %1066 = vmatprep.subr.mxu0 %v206
    %1067 = vmatpush2.msra.mxu0 %v205
    %1068 = vmatprep.subr.mxu0 %v202
    %1069 = vmatpush2.msra.mxu0 %v201
    %1070 = vmatprep.subr.mxu0 %v198
    %1071 = vmatpush2.msra.mxu0 %v197
    %1072 = vmatprep.subr.mxu0 %v194
    %1073 = vmatpush2.msra.mxu0 %v193
    %1074 = vmatprep.subr.mxu0 %v190
    %1075 = vmatpush2.msra.mxu0 %v189
    %1076 = vmatprep.subr.mxu0 %v186
    %1077 = vmatpush2.msra.mxu0 %v185
    %1078 = vmatprep.subr.mxu0 %v182
    %1079 = vmatpush2.msra.mxu0 %v181
    %1080 = vmatprep.subr.mxu0 %v178
    %1081 = vmatpush2.msra.mxu0 %v177
    %1082 = vmatprep.subr.mxu0 %v174
    %1083 = vmatpush2.msra.mxu0 %v173
    %1084 = vmatprep.subr.mxu0 %v170
    %1085 = vmatpush2.msra.mxu0 %v169
    %1086 = vmatprep.subr.mxu0 %v166
    %1087 = vmatpush2.msra.mxu0 %v165
    %1088 = vmatprep.subr.mxu0 %v162
    %1089 = vmatpush2.msra.mxu0 %v161
    %1090 = vmatprep.mubr.f32.mxu0 %v950
    %1091 = vmatmul.mubr.f32.gmra.mxu0 %v954
    %v1092 = vpop.f32.mrf.mxu0
    %v1093 = vadd.f32 %v239, %v1092
    %v1094 = vpop.f32.mrf.mxu0
    %v1095 = vadd.f32 %v243, %v1094
    %1096 = vdwg.mxu0
    %v1097 = vxor.u32 %v1022, 2147483648
    %v1098 = vmul.f32 %v1097, 1.442695
    %v1099 = vpow.pop %v1098
    %v1100 = vadd.f32 %v1099, 1.0
    %v1101 = vrcp.pop %v1100
    %v1102 = vmul.f32 1.0, %v1101
    %v1103 = vxor.u32 %v1024, 2147483648
    %v1104 = vmul.f32 %v1103, 1.442695
    %v1105 = vpow.pop %v1104
    %v1106 = vadd.f32 %v1105, 1.0
    %v1107 = vrcp.pop %v1106
    %v1108 = vmul.f32 1.0, %v1107
    %v1109 = vtanh.pop %v1093
    %v1110 = vxor.u32 %v1095, 2147483648
    %v1111 = vmul.f32 %v1110, 1.442695
    %v1112 = vpow.pop %v1111
    %v1113 = vadd.f32 %v1112, 1.0
    %v1114 = vrcp.pop %v1113
    %v1115 = vmul.f32 1.0, %v1114
    %v1116 = vmul.f32 %v1108, %v949
    %v1117 = vmul.f32 %v1102, %v1109
    %v1118 = vadd.f32 %v1116, %v1117
    %v1119 = vtanh.pop %v1118
    %v1120 = vmul.f32 %v1115, %v1119
    %s1121 = sadd.s32 %s414, 4
    %p1122 = scmp.lt.s32.totalorder %s1121, 5
    %s1123 = scalar_select %p1122, 1, 0
    %v1124 = vstv %s1123
    %vm1125 = vcmp.eq.s32.totalorder %v1124, 1
    %v1126 = vsel %vm1125, %v1118, %v949
    %v1127 = vsel %vm1125, %v1120, %v950
    %s1128 = scalar_lea.vmem [#allocation13], 32
    %1129 = vst [vmem:[%s1128] sm:$0xff] %v1127
    %1130 = vst [vmem:[#allocation2] sm:$0xff] %v1127
    %1131 = vst [vmem:[#allocation3] sm:$0xff] %v1126
    // Predicated region
    $region46: #{tpu_custom_call.1} parent=1 // pred_check
      %p1132 = pneg %p87
    $region47: #{tpu_custom_call.1} parent=1 // pred_check_branch
      %1134 = sbr.rel (%p1132) target = $region49
    $region48: #{tpu_custom_call.1} parent=1 // pred_region
      %1135 = vst [vmem:[#allocation14] sm:$0xff] %v1127
      %1136 = vst [vmem:[#allocation16] sm:$0xff] %v1126
    $region49: #{tpu_custom_call.1} parent=1 // pred_fallthru
      _
    // Predicated region
    $region50: #{tpu_custom_call.1} parent=1 // pred_check
      _
    $region51: #{tpu_custom_call.1} parent=1 // pred_check_branch
      %1138 = sbr.rel (0) target = $region53
    $region52: #{tpu_custom_call.1} parent=1 // pred_region
      %s1140 = ssub.s32 640, 640
      %1141 = vsyncadd [#allocation6], %s1140
      %s1142 = sshll.u32 [#allocation13], 4
      %s1143 = int_to_ptr.vmem [resolvable:$true] %s1142
      %1148 = dma.vmem_to_hbm [thread:$0]  %s1143, 640, %s5, [#allocation6], 128, 128, 8
    $region53: #{tpu_custom_call.1} parent=1 // pred_fallthru
      _
    // Predicated region
    $region54: #{tpu_custom_call.1} parent=1 // pred_check
      _
    $region55: #{tpu_custom_call.1} parent=1 // pred_check_branch
      %1150 = sbr.rel (0) target = $region57
    $region56: #{tpu_custom_call.1} parent=1 // pred_region
      %s1152 = ssub.s32 128, 128
      %1153 = vsyncadd [#allocation15], %s1152
      %s1155 = sshll.u32 [#allocation14], 4
      %s1156 = int_to_ptr.vmem [resolvable:$true] %s1155
      %1158 = dma.vmem_to_hbm [thread:$0]  %s1156, 128, %s6, [#allocation15]
    $region57: #{tpu_custom_call.1} parent=1 // pred_fallthru
      _
    // Predicated region
    $region58: #{tpu_custom_call.1} parent=1 // pred_check
      _
    $region59: #{tpu_custom_call.1} parent=1 // pred_check_branch
      %1160 = sbr.rel (0) target = $region61
    $region60: #{tpu_custom_call.1} parent=1 // pred_region
      %s1162 = ssub.s32 128, 128
      %1163 = vsyncadd [#allocation15], %s1162
      %s1165 = sshll.u32 [#allocation16], 4
      %s1166 = int_to_ptr.vmem [resolvable:$true] %s1165
      %1168 = dma.vmem_to_hbm [thread:$0]  %s1166, 128, %s7, [#allocation15]
    $region61: #{tpu_custom_call.1} parent=1 // pred_fallthru
      _
    // Predicated region
    $region62: #{tpu_custom_call.1} parent=1 // pred_check
      _
    $region63: #{tpu_custom_call.1} parent=1 // pred_check_branch
      %1170 = sbr.rel (0) target = $region65
    $region64: #{tpu_custom_call.1} parent=1 // pred_region
      %1171 = dma.done [#allocation6], 640
    $region65: #{tpu_custom_call.1} parent=1 // pred_fallthru
      _
    // Predicated region
    $region66: #{tpu_custom_call.1} parent=1 // pred_check
      _
    $region67: #{tpu_custom_call.1} parent=1 // pred_check_branch
      %1173 = sbr.rel (0) target = $region69
    $region68: #{tpu_custom_call.1} parent=1 // pred_region
      %1174 = dma.done [#allocation15], 128
    $region69: #{tpu_custom_call.1} parent=1 // pred_fallthru
      _
    // Predicated region
    $region70: #{tpu_custom_call.1} parent=1 // pred_check
      _
    $region71: #{tpu_custom_call.1} parent=1 // pred_check_branch
      %1176 = sbr.rel (0) target = $region73
    $region72: #{tpu_custom_call.1} parent=1 // pred_region
      %1177 = dma.done [#allocation15], 128
    $region73: #{tpu_custom_call.1} parent=1 // pred_fallthru
      _
    %1178 = vsyncpa [#allocation5], 1
    %1179 = vsyncpa [#allocation8], 1
    %1180 = vsyncpa [#allocation11], 1
    %1181 = vsyncpa [#allocation6], 1
    %1182 = vsyncpa [#allocation15], 1

</llo_original>
